<compile_context>
chip_gen: v6e
topology: v6e:2x2x1
jax: 0.10.0
libtpu: 0.0.40
codegen_flags: <defaults>
</compile_context>

<pallas_src>
import functools

import jax
import jax.numpy as jnp
from jax import lax
from jax.experimental import pallas as pl
from jax.experimental.pallas import tpu as pltpu

EPS = 1e-5  # PyTorch BatchNorm2d default
_TAPS = tuple((dh, dw) for dh in (-1, 0, 1) for dw in (-1, 0, 1))


# ---------------------------------------------------------------------------
# Compiler params (generation-aware VMEM limit)
# ---------------------------------------------------------------------------
def _vmem_limit_bytes():
    cap = 128 * 1024 * 1024
    try:
        info = pltpu.get_tpu_info()
        cap = int(getattr(info, "vmem_capacity_bytes", cap) or cap)
    except Exception:
        pass
    # Leave headroom for compiler temporaries: v7x (64 MiB) -> 48 MiB,
    # v5e/v6e (128 MiB) -> 96 MiB.
    return int(min(cap - 16 * 1024 * 1024, 96 * 1024 * 1024))


def _compiler_params():
    return pltpu.CompilerParams(
        dimension_semantics=("parallel",),
        vmem_limit_bytes=_vmem_limit_bytes(),
    )


def _mod(x, m):
    if m & (m - 1) == 0:
        return jnp.bitwise_and(x, m - 1)
    return x % m


# ---------------------------------------------------------------------------
# In-kernel helpers
# ---------------------------------------------------------------------------
def _conv3x3(rows, w_ref, b_ref, *, W2, N0):
    """3x3 same-padded conv on raster-ordered rows (w fastest), images stacked.

    rows:  (R, Cin), R = BB*N0; image bb occupies rows [bb*N0, (bb+1)*N0)
    w_ref: (9*Cin, Cout) bf16 ref; contraction index = tap*Cin + c,
           tap = (dh+1)*3 + (dw+1)
    b_ref: (1, Cout) f32 ref
    returns (R, Cout) f32 = conv(rows) + bias
    """
    R, cin = rows.shape
    rows = rows.astype(jnp.bfloat16)  # single cast, bf16 everywhere below

    # Hoisted validity masks, (R, 1) booleans (computed once, reused per tap).
    rid = lax.broadcasted_iota(jnp.int32, (R, 1), 0)
    n_img = _mod(rid, N0)           # raster index inside the image
    wcol = _mod(rid, W2)            # output column (N0 is a multiple of W2)
    top = n_img < W2
    bot = n_img >= N0 - W2
    left = wcol == 0
    right = wcol == W2 - 1

    # Value-level zero-padded copy: only 2*(W2+1) halo rows of zeros, never a
    # full scratch zero-fill; the nine taps are static slices of it.
    padq = W2 + 1
    zpad = jnp.zeros((padq, cin), rows.dtype)
    padded = jnp.concatenate([zpad, rows, zpad], axis=0)

    zero = jnp.zeros((R, cin), rows.dtype)
    taps = []
    for dh, dw in _TAPS:
        d = dh * W2 + dw
        t = padded[padq + d:padq + d + R, :]
        m = None
        if dh == -1:
            m = top
        elif dh == 1:
            m = bot
        if dw == -1:
            m = left if m is None else jnp.logical_or(m, left)
        elif dw == 1:
            m = right if m is None else jnp.logical_or(m, right)
        if m is not None:
            t = jnp.where(m, zero, t)
        taps.append(t)

    # Single MXU contraction over all 9 taps (depth 9*Cin instead of Cin).
    patch = jnp.concatenate(taps, axis=-1)                    # (R, 9*Cin) bf16
    acc = jnp.dot(patch, w_ref[...], preferred_element_type=jnp.float32)
    return acc + b_ref[...]


def _emit_stats(y, s_ref):
    # per-block partial BN statistics: row 0 = sum, row 1 = sum of squares
    ssum = jnp.sum(y, axis=0, keepdims=True)
    ssq = jnp.sum(y * y, axis=0, keepdims=True)
    s_ref[0] = jnp.concatenate([ssum, ssq], axis=0)


# ---------------------------------------------------------------------------
# Pallas kernels
# ---------------------------------------------------------------------------
def _pool_conv_kernel(x_ref, w_ref, b_ref, y_ref, s_ref, *, W2, N0):
    # x_ref: (BB, 2, N0, 2*Cin). Fused 2x2 max-pool -> conv1 + bias.
    x = x_ref[...]
    m = jnp.maximum(x[:, 0], x[:, 1])                    # pool over the H pair
    cin = m.shape[-1] // 2
    pooled = jnp.maximum(m[..., :cin], m[..., cin:])     # pool over the W pair
    bb = pooled.shape[0]
    rows = pooled.reshape(bb * N0, cin)
    y = _conv3x3(rows, w_ref, b_ref, W2=W2, N0=N0)       # (bb*N0, Cout) f32
    _emit_stats(y, s_ref)
    # channel-major (lane-dense) store of the activation
    y_ref[...] = jnp.transpose(y.reshape(bb, N0, -1), (0, 2, 1)).astype(y_ref.dtype)


def _bn_relu_conv_kernel(x_ref, sc_ref, sh_ref, w_ref, b_ref, y_ref, s_ref,
                         *, W2, N0):
    # BN1 normalize + ReLU (applied channel-major) fused with conv2 + bias.
    x = x_ref[...].astype(jnp.float32)                   # (BB, C1, N0)
    xn = jnp.maximum(x * sc_ref[...] + sh_ref[...], 0.0)
    bb, c1, _ = xn.shape
    rows = jnp.transpose(xn, (0, 2, 1)).reshape(bb * N0, c1)
    y = _conv3x3(rows, w_ref, b_ref, W2=W2, N0=N0)
    _emit_stats(y, s_ref)
    y_ref[...] = jnp.transpose(y.reshape(bb, N0, -1), (0, 2, 1)).astype(y_ref.dtype)


def _bn_relu_kernel(x_ref, sc_ref, sh_ref, o_ref):
    # BN2 normalize + ReLU, channel-major in and out (== NCHW flat output).
    x = x_ref[...].astype(jnp.float32)                   # (BB, C, N0)
    o_ref[...] = jnp.maximum(x * sc_ref[...] + sh_ref[...], 0.0).astype(o_ref.dtype)


# ---------------------------------------------------------------------------
# pallas_call wrappers
# ---------------------------------------------------------------------------
def _pool_conv_call(x_arr, w_arr, bias, *, G, BB, N0, W2, cin, cout, act_dtype):
    kernel = functools.partial(_pool_conv_kernel, W2=W2, N0=N0)
    grid_spec = pltpu.PrefetchScalarGridSpec(
        num_scalar_prefetch=0,
        grid=(G,),
        in_specs=[
            pl.BlockSpec((BB, 2, N0, 2 * cin), lambda g: (g, 0, 0, 0)),
            pl.BlockSpec((9 * cin, cout), lambda g: (0, 0)),
            pl.BlockSpec((1, cout), lambda g: (0, 0)),
        ],
        out_specs=[
            pl.BlockSpec((BB, cout, N0), lambda g: (g, 0, 0)),
            pl.BlockSpec((1, 2, cout), lambda g: (g, 0, 0)),
        ],
    )
    return pl.pallas_call(
        kernel,
        out_shape=(jax.ShapeDtypeStruct((G * BB, cout, N0), act_dtype),
                   jax.ShapeDtypeStruct((G, 2, cout), jnp.float32)),
        grid_spec=grid_spec,
        compiler_params=_compiler_params(),
    )(x_arr, w_arr, bias)


def _bn_relu_conv_call(y_in, scale, shift, w_arr, bias, *,
                       G, BB, N0, W2, cin, cout, act_dtype):
    kernel = functools.partial(_bn_relu_conv_kernel, W2=W2, N0=N0)
    grid_spec = pltpu.PrefetchScalarGridSpec(
        num_scalar_prefetch=0,
        grid=(G,),
        in_specs=[
            pl.BlockSpec((BB, cin, N0), lambda g: (g, 0, 0)),
            pl.BlockSpec((cin, 1), lambda g: (0, 0)),
            pl.BlockSpec((cin, 1), lambda g: (0, 0)),
            pl.BlockSpec((9 * cin, cout), lambda g: (0, 0)),
            pl.BlockSpec((1, cout), lambda g: (0, 0)),
        ],
        out_specs=[
            pl.BlockSpec((BB, cout, N0), lambda g: (g, 0, 0)),
            pl.BlockSpec((1, 2, cout), lambda g: (g, 0, 0)),
        ],
    )
    return pl.pallas_call(
        kernel,
        out_shape=(jax.ShapeDtypeStruct((G * BB, cout, N0), act_dtype),
                   jax.ShapeDtypeStruct((G, 2, cout), jnp.float32)),
        grid_spec=grid_spec,
        compiler_params=_compiler_params(),
    )(y_in, scale, shift, w_arr, bias)


def _bn_relu_call(y_in, scale, shift, *, G, BB, N0, cout, out_dtype):
    grid_spec = pltpu.PrefetchScalarGridSpec(
        num_scalar_prefetch=0,
        grid=(G,),
        in_specs=[
            pl.BlockSpec((BB, cout, N0), lambda g: (g, 0, 0)),
            pl.BlockSpec((cout, 1), lambda g: (0, 0)),
            pl.BlockSpec((cout, 1), lambda g: (0, 0)),
        ],
        out_specs=pl.BlockSpec((BB, cout, N0), lambda g: (g, 0, 0)),
    )
    return pl.pallas_call(
        _bn_relu_kernel,
        out_shape=jax.ShapeDtypeStruct((G * BB, cout, N0), out_dtype),
        grid_spec=grid_spec,
        compiler_params=_compiler_params(),
    )(y_in, scale, shift)


# ---------------------------------------------------------------------------
# BN finalize (tiny XLA reduction of the per-block partial statistics)
# ---------------------------------------------------------------------------
def _bn_affine(stats, gamma, beta, count):
    s = jnp.sum(stats.astype(jnp.float32), axis=0)       # (2, C)
    mean = s[0] / count
    var = jnp.maximum(s[1] / count - mean * mean, 0.0)    # biased variance
    scale = gamma.astype(jnp.float32) * lax.rsqrt(var + EPS)
    shift = beta.astype(jnp.float32) - mean * scale
    # channel-major application: (C, 1)
    return scale.reshape(-1, 1), shift.reshape(-1, 1)


def _pick_bb(B, N0, max_rows=2048):
    """Images per grid step: amortize per-step overhead, bound VMEM rows."""
    bb = min(B, max(1, max_rows // max(N0, 1)))
    while bb > 1 and B % bb != 0:
        bb -= 1
    return bb


# ---------------------------------------------------------------------------
# EncoderBlock forward
# ---------------------------------------------------------------------------
def encoder_block(x_nchw, params):
    """EncoderBlock forward. x_nchw: (B, Cin, H, W) -> (B, Cout, H/2, W/2)."""
    B, Cin, H, W = x_nchw.shape
    assert H % 2 == 0 and W % 2 == 0
    H2, W2 = H // 2, W // 2
    N0 = H2 * W2
    Cout = params["w1"].shape[0]
    dt = x_nchw.dtype
    act_dt = jnp.bfloat16          # inter-kernel activation dtype (HBM traffic)

    BB = _pick_bb(B, N0)
    G = B // BB

    # Layout plumbing (one XLA transpose): NCHW -> (B, 2, H2*W2, 2*Cin) where
    # arr[b, p, h*W2+w, dj*Cin+c] = x[b, c, 2h+p, 2w+dj]; the 2x2 pool taps are
    # the axis-1 pair and the two static lane halves.
    x5 = x_nchw.reshape(B, Cin, H2, 2, W2, 2)
    x_arr = jnp.transpose(x5, (0, 3, 2, 4, 5, 1)).reshape(B, 2, N0, 2 * Cin)

    # Weights: OIHW -> (9*Cin, Cout) bf16, contraction = tap-major / channel-minor
    # (matches the in-kernel patch lane layout).
    w1 = jnp.transpose(params["w1"], (2, 3, 1, 0)).reshape(9 * Cin, Cout)
    w1 = w1.astype(jnp.bfloat16)
    w2 = jnp.transpose(params["w2"], (2, 3, 1, 0)).reshape(9 * Cout, Cout)
    w2 = w2.astype(jnp.bfloat16)
    b1 = params["b1"].reshape(1, Cout).astype(jnp.float32)
    b2 = params["b2"].reshape(1, Cout).astype(jnp.float32)

    # K1: fused maxpool + conv1 + bias; channel-major bf16 y1 + BN1 partials.
    y1, s1 = _pool_conv_call(x_arr, w1, b1, G=G, BB=BB, N0=N0, W2=W2,
                             cin=Cin, cout=Cout, act_dtype=act_dt)
    sc1, sh1 = _bn_affine(s1, params["gamma1"], params["beta1"], B * N0)

    # K2: BN1 normalize + ReLU fused with conv2 + bias; emits BN2 partials.
    y2, s2 = _bn_relu_conv_call(y1, sc1, sh1, w2, b2, G=G, BB=BB, N0=N0, W2=W2,
                                cin=Cout, cout=Cout, act_dtype=act_dt)
    sc2, sh2 = _bn_affine(s2, params["gamma2"], params["beta2"], B * N0)

    # K3: BN2 normalize + ReLU; channel-major store == NCHW flat output.
    out = _bn_relu_call(y2, sc2, sh2, G=G, BB=BB, N0=N0, cout=Cout, out_dtype=dt)
    return out.reshape(B, Cout, H2, W2)


# ---------------------------------------------------------------------------
# Pure-JAX reference (for correctness check)
# ---------------------------------------------------------------------------
def _ref_conv_bn_relu(x_nchw, w, b, gamma, beta):
    y = lax.conv_general_dilated(
        x_nchw, w, (1, 1), ((1, 1), (1, 1)),
        dimension_numbers=("NCHW", "OIHW", "NCHW"),
        precision=lax.Precision.HIGHEST,
    ) + b[None, :, None, None]
    mean = jnp.mean(y, axis=(0, 2, 3), keepdims=True)
    var = jnp.mean((y - mean) ** 2, axis=(0, 2, 3), keepdims=True)
    yn = (y - mean) * lax.rsqrt(var + EPS)
    yn = yn * gamma[None, :, None, None] + beta[None, :, None, None]
    return jnp.maximum(yn, 0.0)


def encoder_block_ref(x_nchw, params):
    B, C, H, W = x_nchw.shape
    xp = x_nchw.reshape(B, C, H // 2, 2, W // 2, 2).max(axis=(3, 5))
    y = _ref_conv_bn_relu(xp, params["w1"], params["b1"],
                          params["gamma1"], params["beta1"])
    y = _ref_conv_bn_relu(y, params["w2"], params["b2"],
                          params["gamma2"], params["beta2"])
    return y


# ---------------------------------------------------------------------------
if __name__ == "__main__":
    B, Cin, Cout, H, W = 2, 4, 8, 16, 16

    key = jax.random.PRNGKey(0)
    k_x, k_w1, k_b1, k_w2, k_b2 = jax.random.split(key, 5)

    x = jax.random.normal(k_x, (B, Cin, H, W), dtype=jnp.float32)

    params = {
        "w1": jax.random.normal(k_w1, (Cout, Cin, 3, 3), jnp.float32) * 0.1,
        "b1": jax.random.normal(k_b1, (Cout,), jnp.float32) * 0.1,
        "gamma1": jnp.ones((Cout,), jnp.float32),
        "beta1": jnp.zeros((Cout,), jnp.float32),
        "w2": jax.random.normal(k_w2, (Cout, Cout, 3, 3), jnp.float32) * 0.1,
        "b2": jax.random.normal(k_b2, (Cout,), jnp.float32) * 0.1,
        "gamma2": jnp.ones((Cout,), jnp.float32),
        "beta2": jnp.zeros((Cout,), jnp.float32),
    }

    fwd = jax.jit(encoder_block)
    out = jax.block_until_ready(fwd(x, params))
    ref = jax.block_until_ready(encoder_block_ref(x, params))

    assert out.shape == (B, Cout, H // 2, W // 2), out.shape
    max_err = float(jnp.max(jnp.abs(out - ref)))
    # bf16 MXU operands + bf16 inter-kernel activations (f32 accumulation /
    # f32 BN statistics) -> slightly looser tolerance than pure-f32 conv.
    assert jnp.allclose(out, ref, atol=5e-2, rtol=5e-2), max_err
    print("KERNEL_OK")
</pallas_src>

<mosaic_0001>
module attributes {stable_mosaic.version = 11 : i64} {
  func.func @_bn_relu_kernel(%arg0: i32, %arg1: memref<2x8x64xbf16, #tpu.memory_space<vmem>>, %arg2: memref<8x1xf32, #tpu.memory_space<vmem>>, %arg3: memref<8x1xf32, #tpu.memory_space<vmem>>, %arg4: memref<2x8x64xf32, #tpu.memory_space<vmem>>) attributes {dimension_semantics = [#tpu.dimension_semantics<parallel>], iteration_bounds = array<i64: 1>, scalar_prefetch = 0 : i64, scratch_operands = 0 : i64, tpu.core_type = #tpu.core_type<tc>, window_params = [{transform_indices = @transform_0, window_bounds = array<i64: 2, 8, 64>}, {pipeline_mode = #tpu.pipeline_mode<synchronous>, transform_indices = @transform_1, window_bounds = array<i64: 8, 1>}, {pipeline_mode = #tpu.pipeline_mode<synchronous>, transform_indices = @transform_2, window_bounds = array<i64: 8, 1>}, {transform_indices = @transform_3, window_bounds = array<i64: 2, 8, 64>}]} {
    %c0 = arith.constant 0 : index
    %c0_0 = arith.constant 0 : index
    %c0_1 = arith.constant 0 : index
    %0 = vector.load %arg1[%c0, %c0_0, %c0_1] : memref<2x8x64xbf16, #tpu.memory_space<vmem>>, vector<2x8x64xbf16>
    %1 = arith.extf %0 : vector<2x8x64xbf16> to vector<2x8x64xf32>
    %c0_2 = arith.constant 0 : index
    %c0_3 = arith.constant 0 : index
    %2 = vector.load %arg2[%c0_2, %c0_3] : memref<8x1xf32, #tpu.memory_space<vmem>>, vector<8x1xf32>
    %3 = vector.shape_cast %2 : vector<8x1xf32> to vector<1x8x1xf32>
    %4 = vector.broadcast %3 : vector<1x8x1xf32> to vector<2x8x64xf32>
    %5 = arith.mulf %1, %4 : vector<2x8x64xf32>
    %c0_4 = arith.constant 0 : index
    %c0_5 = arith.constant 0 : index
    %6 = vector.load %arg3[%c0_4, %c0_5] : memref<8x1xf32, #tpu.memory_space<vmem>>, vector<8x1xf32>
    %7 = vector.shape_cast %6 : vector<8x1xf32> to vector<1x8x1xf32>
    %8 = vector.broadcast %7 : vector<1x8x1xf32> to vector<2x8x64xf32>
    %9 = arith.addf %5, %8 : vector<2x8x64xf32>
    %cst = arith.constant 0.000000e+00 : f32
    %10 = vector.broadcast %cst : f32 to vector<2x8x64xf32>
    %11 = arith.maximumf %9, %10 : vector<2x8x64xf32>
    %c0_6 = arith.constant 0 : index
    %c0_7 = arith.constant 0 : index
    %c0_8 = arith.constant 0 : index
    %12 = vector.load %arg4[%c0_6, %c0_7, %c0_8] : memref<2x8x64xf32, #tpu.memory_space<vmem>>, vector<2x8x64xf32>
    tpu.vector_store %arg4[%c0_6, %c0_7, %c0_8], %11 {strides = array<i32>} : memref<2x8x64xf32, #tpu.memory_space<vmem>>, vector<2x8x64xf32>,
    return
  }
  func.func @transform_0(%arg0: i32) -> (i32, i32, i32) {
    %c0_i32 = arith.constant 0 : i32
    %c0_i32_0 = arith.constant 0 : i32
    %c0_i32_1 = arith.constant 0 : i32
    return %arg0, %c0_i32, %c0_i32_0 : i32, i32, i32
  }
  func.func @transform_1(%arg0: i32) -> (i32, i32) {
    %c0_i32 = arith.constant 0 : i32
    %c0_i32_0 = arith.constant 0 : i32
    %c0_i32_1 = arith.constant 0 : i32
    return %c0_i32, %c0_i32_0 : i32, i32
  }
  func.func @transform_2(%arg0: i32) -> (i32, i32) {
    %c0_i32 = arith.constant 0 : i32
    %c0_i32_0 = arith.constant 0 : i32
    %c0_i32_1 = arith.constant 0 : i32
    return %c0_i32, %c0_i32_0 : i32, i32
  }
  func.func @transform_3(%arg0: i32) -> (i32, i32, i32) {
    %c0_i32 = arith.constant 0 : i32
    %c0_i32_0 = arith.constant 0 : i32
    %c0_i32_1 = arith.constant 0 : i32
    return %arg0, %c0_i32, %c0_i32_0 : i32, i32, i32
  }
}

module attributes {stable_mosaic.version = 11 : i64} {
  func.func @_pool_conv_kernel(%arg0: i32, %arg1: memref<2x2x64x8xf32, #tpu.memory_space<vmem>>, %arg2: memref<36x8xbf16, #tpu.memory_space<vmem>>, %arg3: memref<1x8xf32, #tpu.memory_space<vmem>>, %arg4: memref<2x8x64xbf16, #tpu.memory_space<vmem>>, %arg5: memref<1x2x8xf32, #tpu.memory_space<vmem>>) attributes {dimension_semantics = [#tpu.dimension_semantics<parallel>], iteration_bounds = array<i64: 1>, scalar_prefetch = 0 : i64, scratch_operands = 0 : i64, tpu.core_type = #tpu.core_type<tc>, window_params = [{transform_indices = @transform_0, window_bounds = array<i64: 2, 2, 64, 8>}, {pipeline_mode = #tpu.pipeline_mode<synchronous>, transform_indices = @transform_1, window_bounds = array<i64: 36, 8>}, {pipeline_mode = #tpu.pipeline_mode<synchronous>, transform_indices = @transform_2, window_bounds = array<i64: 1, 8>}, {transform_indices = @transform_3, window_bounds = array<i64: 2, 8, 64>}, {transform_indices = @transform_4, window_bounds = array<i64: 1, 2, 8>}]} {
    %c0 = arith.constant 0 : index
    %c0_0 = arith.constant 0 : index
    %c0_1 = arith.constant 0 : index
    %c0_2 = arith.constant 0 : index
    %0 = vector.load %arg1[%c0, %c0_0, %c0_1, %c0_2] : memref<2x2x64x8xf32, #tpu.memory_space<vmem>>, vector<2x2x64x8xf32>
    %1 = vector.extract_strided_slice %0 {offsets = [0, 0, 0, 0], sizes = [2, 1, 64, 8], strides = [1, 1, 1, 1]} : vector<2x2x64x8xf32> to vector<2x1x64x8xf32>
    %2 = vector.shape_cast %1 : vector<2x1x64x8xf32> to vector<2x64x8xf32>
    %3 = vector.extract_strided_slice %0 {offsets = [0, 1, 0, 0], sizes = [2, 1, 64, 8], strides = [1, 1, 1, 1]} : vector<2x2x64x8xf32> to vector<2x1x64x8xf32>
    %4 = vector.shape_cast %3 : vector<2x1x64x8xf32> to vector<2x64x8xf32>
    %5 = arith.maximumf %2, %4 : vector<2x64x8xf32>
    %6 = vector.extract_strided_slice %5 {offsets = [0, 0, 0], sizes = [2, 64, 4], strides = [1, 1, 1]} : vector<2x64x8xf32> to vector<2x64x4xf32>
    %7 = vector.extract_strided_slice %5 {offsets = [0, 0, 4], sizes = [2, 64, 4], strides = [1, 1, 1]} : vector<2x64x8xf32> to vector<2x64x4xf32>
    %8 = arith.maximumf %6, %7 : vector<2x64x4xf32>
    %9 = vector.shape_cast %8 : vector<2x64x4xf32> to vector<128x4xf32>
    %10 = arith.truncf %9 : vector<128x4xf32> to vector<128x4xbf16>
    %11 = tpu.iota {dimensions = array<i32: 0>} : vector<128x1xi32>
    %c63_i32 = arith.constant 63 : i32
    %12 = vector.broadcast %c63_i32 : i32 to vector<128x1xi32>
    %13 = arith.andi %11, %12 : vector<128x1xi32>
    %c7_i32 = arith.constant 7 : i32
    %14 = vector.broadcast %c7_i32 : i32 to vector<128x1xi32>
    %15 = arith.andi %11, %14 : vector<128x1xi32>
    %c8_i32 = arith.constant 8 : i32
    %16 = vector.broadcast %c8_i32 : i32 to vector<128x1xi32>
    %17 = arith.cmpi slt, %13, %16 : vector<128x1xi32>
    %c56_i32 = arith.constant 56 : i32
    %18 = vector.broadcast %c56_i32 : i32 to vector<128x1xi32>
    %19 = arith.cmpi sge, %13, %18 : vector<128x1xi32>
    %c0_i32 = arith.constant 0 : i32
    %20 = vector.broadcast %c0_i32 : i32 to vector<128x1xi32>
    %21 = arith.cmpi eq, %15, %20 : vector<128x1xi32>
    %c7_i32_3 = arith.constant 7 : i32
    %22 = vector.broadcast %c7_i32_3 : i32 to vector<128x1xi32>
    %23 = arith.cmpi eq, %15, %22 : vector<128x1xi32>
    %cst = arith.constant 0.000000e+00 : bf16
    %24 = vector.broadcast %cst : bf16 to vector<9x4xbf16>
    %25 = tpu.concatenate %24, %10, %24 in 0 : vector<9x4xbf16>, vector<128x4xbf16>, vector<9x4xbf16> -> vector<146x4xbf16>
    %cst_4 = arith.constant 0.000000e+00 : bf16
    %26 = vector.broadcast %cst_4 : bf16 to vector<128x4xbf16>
    %27 = vector.extract_strided_slice %25 {offsets = [0, 0], sizes = [128, 4], strides = [1, 1]} : vector<146x4xbf16> to vector<128x4xbf16>
    %28 = arith.ori %17, %21 : vector<128x1xi1>
    %29 = vector.shape_cast %28 : vector<128x1xi1> to vector<128x1xi1>
    %30 = vector.broadcast %29 : vector<128x1xi1> to vector<128x4xi1>
    %31 = arith.select %30, %26, %27 : vector<128x4xi1>, vector<128x4xbf16>
    %32 = vector.extract_strided_slice %25 {offsets = [1, 0], sizes = [128, 4], strides = [1, 1]} : vector<146x4xbf16> to vector<128x4xbf16>
    %33 = vector.shape_cast %17 : vector<128x1xi1> to vector<128x1xi1>
    %34 = vector.broadcast %33 : vector<128x1xi1> to vector<128x4xi1>
    %35 = arith.select %34, %26, %32 : vector<128x4xi1>, vector<128x4xbf16>
    %36 = vector.extract_strided_slice %25 {offsets = [2, 0], sizes = [128, 4], strides = [1, 1]} : vector<146x4xbf16> to vector<128x4xbf16>
    %37 = arith.ori %17, %23 : vector<128x1xi1>
    %38 = vector.shape_cast %37 : vector<128x1xi1> to vector<128x1xi1>
    %39 = vector.broadcast %38 : vector<128x1xi1> to vector<128x4xi1>
    %40 = arith.select %39, %26, %36 : vector<128x4xi1>, vector<128x4xbf16>
    %41 = vector.extract_strided_slice %25 {offsets = [8, 0], sizes = [128, 4], strides = [1, 1]} : vector<146x4xbf16> to vector<128x4xbf16>
    %42 = vector.shape_cast %21 : vector<128x1xi1> to vector<128x1xi1>
    %43 = vector.broadcast %42 : vector<128x1xi1> to vector<128x4xi1>
    %44 = arith.select %43, %26, %41 : vector<128x4xi1>, vector<128x4xbf16>
    %45 = vector.extract_strided_slice %25 {offsets = [9, 0], sizes = [128, 4], strides = [1, 1]} : vector<146x4xbf16> to vector<128x4xbf16>
    %46 = vector.extract_strided_slice %25 {offsets = [10, 0], sizes = [128, 4], strides = [1, 1]} : vector<146x4xbf16> to vector<128x4xbf16>
    %47 = vector.shape_cast %23 : vector<128x1xi1> to vector<128x1xi1>
    %48 = vector.broadcast %47 : vector<128x1xi1> to vector<128x4xi1>
    %49 = arith.select %48, %26, %46 : vector<128x4xi1>, vector<128x4xbf16>
    %50 = vector.extract_strided_slice %25 {offsets = [16, 0], sizes = [128, 4], strides = [1, 1]} : vector<146x4xbf16> to vector<128x4xbf16>
    %51 = arith.ori %19, %21 : vector<128x1xi1>
    %52 = vector.shape_cast %51 : vector<128x1xi1> to vector<128x1xi1>
    %53 = vector.broadcast %52 : vector<128x1xi1> to vector<128x4xi1>
    %54 = arith.select %53, %26, %50 : vector<128x4xi1>, vector<128x4xbf16>
    %55 = vector.extract_strided_slice %25 {offsets = [17, 0], sizes = [128, 4], strides = [1, 1]} : vector<146x4xbf16> to vector<128x4xbf16>
    %56 = vector.shape_cast %19 : vector<128x1xi1> to vector<128x1xi1>
    %57 = vector.broadcast %56 : vector<128x1xi1> to vector<128x4xi1>
    %58 = arith.select %57, %26, %55 : vector<128x4xi1>, vector<128x4xbf16>
    %59 = vector.extract_strided_slice %25 {offsets = [18, 0], sizes = [128, 4], strides = [1, 1]} : vector<146x4xbf16> to vector<128x4xbf16>
    %60 = arith.ori %19, %23 : vector<128x1xi1>
    %61 = vector.shape_cast %60 : vector<128x1xi1> to vector<128x1xi1>
    %62 = vector.broadcast %61 : vector<128x1xi1> to vector<128x4xi1>
    %63 = arith.select %62, %26, %59 : vector<128x4xi1>, vector<128x4xbf16>
    %64 = tpu.concatenate %31, %35, %40, %44, %45, %49, %54, %58, %63 in 1 : vector<128x4xbf16>, vector<128x4xbf16>, vector<128x4xbf16>, vector<128x4xbf16>, vector<128x4xbf16>, vector<128x4xbf16>, vector<128x4xbf16>, vector<128x4xbf16>, vector<128x4xbf16> -> vector<128x36xbf16>
    %c0_5 = arith.constant 0 : index
    %c0_6 = arith.constant 0 : index
    %65 = vector.load %arg2[%c0_5, %c0_6] : memref<36x8xbf16, #tpu.memory_space<vmem>>, vector<36x8xbf16>
    %cst_7 = arith.constant dense<0.000000e+00> : vector<128x8xf32>
    %66 = tpu.matmul %64, %65, %cst_7 {dimension_numbers = #tpu.dot_dimension_numbers<[1], [0], [0], [1], [0, 0, 1, 1], [], []>} : vector<128x36xbf16>, vector<36x8xbf16>, vector<128x8xf32> -> vector<128x8xf32>
    %c0_8 = arith.constant 0 : index
    %c0_9 = arith.constant 0 : index
    %67 = vector.load %arg3[%c0_8, %c0_9] : memref<1x8xf32, #tpu.memory_space<vmem>>, vector<1x8xf32>
    %68 = vector.broadcast %67 : vector<1x8xf32> to vector<128x8xf32>
    %69 = arith.addf %66, %68 : vector<128x8xf32>
    %cst_10 = arith.constant dense<0.000000e+00> : vector<8xf32>
    %70 = vector.multi_reduction <add>, %69, %cst_10 [0] : vector<128x8xf32> to vector<8xf32>
    %71 = vector.shape_cast %70 : vector<8xf32> to vector<1x8xf32>
    %72 = arith.mulf %69, %69 : vector<128x8xf32>
    %cst_11 = arith.constant dense<0.000000e+00> : vector<8xf32>
    %73 = vector.multi_reduction <add>, %72, %cst_11 [0] : vector<128x8xf32> to vector<8xf32>
    %74 = vector.shape_cast %73 : vector<8xf32> to vector<1x8xf32>
    %75 = tpu.concatenate %71, %74 in 0 : vector<1x8xf32>, vector<1x8xf32> -> vector<2x8xf32>
    %c0_12 = arith.constant 0 : index
    %c0_13 = arith.constant 0 : index
    %c0_14 = arith.constant 0 : index
    %76 = vector.load %arg5[%c0_12, %c0_13, %c0_14] : memref<1x2x8xf32, #tpu.memory_space<vmem>>, vector<1x2x8xf32>
    %77 = vector.shape_cast %76 : vector<1x2x8xf32> to vector<2x8xf32>
    %78 = vector.shape_cast %75 : vector<2x8xf32> to vector<1x2x8xf32>
    tpu.vector_store %arg5[%c0_12, %c0_13, %c0_14], %78 {strides = array<i32>} : memref<1x2x8xf32, #tpu.memory_space<vmem>>, vector<1x2x8xf32>,
    %79 = vector.shape_cast %69 : vector<128x8xf32> to vector<2x64x8xf32>
    %80 = tpu.transpose %79, [0, 2, 1] : vector<2x64x8xf32> -> vector<2x8x64xf32>
    %81 = arith.truncf %80 : vector<2x8x64xf32> to vector<2x8x64xbf16>
    %c0_15 = arith.constant 0 : index
    %c0_16 = arith.constant 0 : index
    %c0_17 = arith.constant 0 : index
    %82 = vector.load %arg4[%c0_15, %c0_16, %c0_17] : memref<2x8x64xbf16, #tpu.memory_space<vmem>>, vector<2x8x64xbf16>
    tpu.vector_store %arg4[%c0_15, %c0_16, %c0_17], %81 {strides = array<i32>} : memref<2x8x64xbf16, #tpu.memory_space<vmem>>, vector<2x8x64xbf16>,
    return
  }
  func.func @transform_0(%arg0: i32) -> (i32, i32, i32, i32) {
    %c0_i32 = arith.constant 0 : i32
    %c0_i32_0 = arith.constant 0 : i32
    %c0_i32_1 = arith.constant 0 : i32
    %c0_i32_2 = arith.constant 0 : i32
    return %arg0, %c0_i32, %c0_i32_0, %c0_i32_1 : i32, i32, i32, i32
  }
  func.func @transform_1(%arg0: i32) -> (i32, i32) {
    %c0_i32 = arith.constant 0 : i32
    %c0_i32_0 = arith.constant 0 : i32
    %c0_i32_1 = arith.constant 0 : i32
    return %c0_i32, %c0_i32_0 : i32, i32
  }
  func.func @transform_2(%arg0: i32) -> (i32, i32) {
    %c0_i32 = arith.constant 0 : i32
    %c0_i32_0 = arith.constant 0 : i32
    %c0_i32_1 = arith.constant 0 : i32
    return %c0_i32, %c0_i32_0 : i32, i32
  }
  func.func @transform_3(%arg0: i32) -> (i32, i32, i32) {
    %c0_i32 = arith.constant 0 : i32
    %c0_i32_0 = arith.constant 0 : i32
    %c0_i32_1 = arith.constant 0 : i32
    return %arg0, %c0_i32, %c0_i32_0 : i32, i32, i32
  }
  func.func @transform_4(%arg0: i32) -> (i32, i32, i32) {
    %c0_i32 = arith.constant 0 : i32
    %c0_i32_0 = arith.constant 0 : i32
    %c0_i32_1 = arith.constant 0 : i32
    return %arg0, %c0_i32, %c0_i32_0 : i32, i32, i32
  }
}

module attributes {stable_mosaic.version = 11 : i64} {
  func.func @_bn_relu_conv_kernel(%arg0: i32, %arg1: memref<2x8x64xbf16, #tpu.memory_space<vmem>>, %arg2: memref<8x1xf32, #tpu.memory_space<vmem>>, %arg3: memref<8x1xf32, #tpu.memory_space<vmem>>, %arg4: memref<72x8xbf16, #tpu.memory_space<vmem>>, %arg5: memref<1x8xf32, #tpu.memory_space<vmem>>, %arg6: memref<2x8x64xbf16, #tpu.memory_space<vmem>>, %arg7: memref<1x2x8xf32, #tpu.memory_space<vmem>>) attributes {dimension_semantics = [#tpu.dimension_semantics<parallel>], iteration_bounds = array<i64: 1>, scalar_prefetch = 0 : i64, scratch_operands = 0 : i64, tpu.core_type = #tpu.core_type<tc>, window_params = [{transform_indices = @transform_0, window_bounds = array<i64: 2, 8, 64>}, {pipeline_mode = #tpu.pipeline_mode<synchronous>, transform_indices = @transform_1, window_bounds = array<i64: 8, 1>}, {pipeline_mode = #tpu.pipeline_mode<synchronous>, transform_indices = @transform_2, window_bounds = array<i64: 8, 1>}, {pipeline_mode = #tpu.pipeline_mode<synchronous>, transform_indices = @transform_3, window_bounds = array<i64: 72, 8>}, {pipeline_mode = #tpu.pipeline_mode<synchronous>, transform_indices = @transform_4, window_bounds = array<i64: 1, 8>}, {transform_indices = @transform_5, window_bounds = array<i64: 2, 8, 64>}, {transform_indices = @transform_6, window_bounds = array<i64: 1, 2, 8>}]} {
    %c0 = arith.constant 0 : index
    %c0_0 = arith.constant 0 : index
    %c0_1 = arith.constant 0 : index
    %0 = vector.load %arg1[%c0, %c0_0, %c0_1] : memref<2x8x64xbf16, #tpu.memory_space<vmem>>, vector<2x8x64xbf16>
    %1 = arith.extf %0 : vector<2x8x64xbf16> to vector<2x8x64xf32>
    %c0_2 = arith.constant 0 : index
    %c0_3 = arith.constant 0 : index
    %2 = vector.load %arg2[%c0_2, %c0_3] : memref<8x1xf32, #tpu.memory_space<vmem>>, vector<8x1xf32>
    %3 = vector.shape_cast %2 : vector<8x1xf32> to vector<1x8x1xf32>
    %4 = vector.broadcast %3 : vector<1x8x1xf32> to vector<2x8x64xf32>
    %5 = arith.mulf %1, %4 : vector<2x8x64xf32>
    %c0_4 = arith.constant 0 : index
    %c0_5 = arith.constant 0 : index
    %6 = vector.load %arg3[%c0_4, %c0_5] : memref<8x1xf32, #tpu.memory_space<vmem>>, vector<8x1xf32>
    %7 = vector.shape_cast %6 : vector<8x1xf32> to vector<1x8x1xf32>
    %8 = vector.broadcast %7 : vector<1x8x1xf32> to vector<2x8x64xf32>
    %9 = arith.addf %5, %8 : vector<2x8x64xf32>
    %cst = arith.constant 0.000000e+00 : f32
    %10 = vector.broadcast %cst : f32 to vector<2x8x64xf32>
    %11 = arith.maximumf %9, %10 : vector<2x8x64xf32>
    %12 = tpu.transpose %11, [0, 2, 1] : vector<2x8x64xf32> -> vector<2x64x8xf32>
    %13 = vector.shape_cast %12 : vector<2x64x8xf32> to vector<128x8xf32>
    %14 = arith.truncf %13 : vector<128x8xf32> to vector<128x8xbf16>
    %15 = tpu.iota {dimensions = array<i32: 0>} : vector<128x1xi32>
    %c63_i32 = arith.constant 63 : i32
    %16 = vector.broadcast %c63_i32 : i32 to vector<128x1xi32>
    %17 = arith.andi %15, %16 : vector<128x1xi32>
    %c7_i32 = arith.constant 7 : i32
    %18 = vector.broadcast %c7_i32 : i32 to vector<128x1xi32>
    %19 = arith.andi %15, %18 : vector<128x1xi32>
    %c8_i32 = arith.constant 8 : i32
    %20 = vector.broadcast %c8_i32 : i32 to vector<128x1xi32>
    %21 = arith.cmpi slt, %17, %20 : vector<128x1xi32>
    %c56_i32 = arith.constant 56 : i32
    %22 = vector.broadcast %c56_i32 : i32 to vector<128x1xi32>
    %23 = arith.cmpi sge, %17, %22 : vector<128x1xi32>
    %c0_i32 = arith.constant 0 : i32
    %24 = vector.broadcast %c0_i32 : i32 to vector<128x1xi32>
    %25 = arith.cmpi eq, %19, %24 : vector<128x1xi32>
    %c7_i32_6 = arith.constant 7 : i32
    %26 = vector.broadcast %c7_i32_6 : i32 to vector<128x1xi32>
    %27 = arith.cmpi eq, %19, %26 : vector<128x1xi32>
    %cst_7 = arith.constant 0.000000e+00 : bf16
    %28 = vector.broadcast %cst_7 : bf16 to vector<9x8xbf16>
    %29 = tpu.concatenate %28, %14, %28 in 0 : vector<9x8xbf16>, vector<128x8xbf16>, vector<9x8xbf16> -> vector<146x8xbf16>
    %cst_8 = arith.constant 0.000000e+00 : bf16
    %30 = vector.broadcast %cst_8 : bf16 to vector<128x8xbf16>
    %31 = vector.extract_strided_slice %29 {offsets = [0, 0], sizes = [128, 8], strides = [1, 1]} : vector<146x8xbf16> to vector<128x8xbf16>
    %32 = arith.ori %21, %25 : vector<128x1xi1>
    %33 = vector.shape_cast %32 : vector<128x1xi1> to vector<128x1xi1>
    %34 = vector.broadcast %33 : vector<128x1xi1> to vector<128x8xi1>
    %35 = arith.select %34, %30, %31 : vector<128x8xi1>, vector<128x8xbf16>
    %36 = vector.extract_strided_slice %29 {offsets = [1, 0], sizes = [128, 8], strides = [1, 1]} : vector<146x8xbf16> to vector<128x8xbf16>
    %37 = vector.shape_cast %21 : vector<128x1xi1> to vector<128x1xi1>
    %38 = vector.broadcast %37 : vector<128x1xi1> to vector<128x8xi1>
    %39 = arith.select %38, %30, %36 : vector<128x8xi1>, vector<128x8xbf16>
    %40 = vector.extract_strided_slice %29 {offsets = [2, 0], sizes = [128, 8], strides = [1, 1]} : vector<146x8xbf16> to vector<128x8xbf16>
    %41 = arith.ori %21, %27 : vector<128x1xi1>
    %42 = vector.shape_cast %41 : vector<128x1xi1> to vector<128x1xi1>
    %43 = vector.broadcast %42 : vector<128x1xi1> to vector<128x8xi1>
    %44 = arith.select %43, %30, %40 : vector<128x8xi1>, vector<128x8xbf16>
    %45 = vector.extract_strided_slice %29 {offsets = [8, 0], sizes = [128, 8], strides = [1, 1]} : vector<146x8xbf16> to vector<128x8xbf16>
    %46 = vector.shape_cast %25 : vector<128x1xi1> to vector<128x1xi1>
    %47 = vector.broadcast %46 : vector<128x1xi1> to vector<128x8xi1>
    %48 = arith.select %47, %30, %45 : vector<128x8xi1>, vector<128x8xbf16>
    %49 = vector.extract_strided_slice %29 {offsets = [9, 0], sizes = [128, 8], strides = [1, 1]} : vector<146x8xbf16> to vector<128x8xbf16>
    %50 = vector.extract_strided_slice %29 {offsets = [10, 0], sizes = [128, 8], strides = [1, 1]} : vector<146x8xbf16> to vector<128x8xbf16>
    %51 = vector.shape_cast %27 : vector<128x1xi1> to vector<128x1xi1>
    %52 = vector.broadcast %51 : vector<128x1xi1> to vector<128x8xi1>
    %53 = arith.select %52, %30, %50 : vector<128x8xi1>, vector<128x8xbf16>
    %54 = vector.extract_strided_slice %29 {offsets = [16, 0], sizes = [128, 8], strides = [1, 1]} : vector<146x8xbf16> to vector<128x8xbf16>
    %55 = arith.ori %23, %25 : vector<128x1xi1>
    %56 = vector.shape_cast %55 : vector<128x1xi1> to vector<128x1xi1>
    %57 = vector.broadcast %56 : vector<128x1xi1> to vector<128x8xi1>
    %58 = arith.select %57, %30, %54 : vector<128x8xi1>, vector<128x8xbf16>
    %59 = vector.extract_strided_slice %29 {offsets = [17, 0], sizes = [128, 8], strides = [1, 1]} : vector<146x8xbf16> to vector<128x8xbf16>
    %60 = vector.shape_cast %23 : vector<128x1xi1> to vector<128x1xi1>
    %61 = vector.broadcast %60 : vector<128x1xi1> to vector<128x8xi1>
    %62 = arith.select %61, %30, %59 : vector<128x8xi1>, vector<128x8xbf16>
    %63 = vector.extract_strided_slice %29 {offsets = [18, 0], sizes = [128, 8], strides = [1, 1]} : vector<146x8xbf16> to vector<128x8xbf16>
    %64 = arith.ori %23, %27 : vector<128x1xi1>
    %65 = vector.shape_cast %64 : vector<128x1xi1> to vector<128x1xi1>
    %66 = vector.broadcast %65 : vector<128x1xi1> to vector<128x8xi1>
    %67 = arith.select %66, %30, %63 : vector<128x8xi1>, vector<128x8xbf16>
    %68 = tpu.concatenate %35, %39, %44, %48, %49, %53, %58, %62, %67 in 1 : vector<128x8xbf16>, vector<128x8xbf16>, vector<128x8xbf16>, vector<128x8xbf16>, vector<128x8xbf16>, vector<128x8xbf16>, vector<128x8xbf16>, vector<128x8xbf16>, vector<128x8xbf16> -> vector<128x72xbf16>
    %c0_9 = arith.constant 0 : index
    %c0_10 = arith.constant 0 : index
    %69 = vector.load %arg4[%c0_9, %c0_10] : memref<72x8xbf16, #tpu.memory_space<vmem>>, vector<72x8xbf16>
    %cst_11 = arith.constant dense<0.000000e+00> : vector<128x8xf32>
    %70 = tpu.matmul %68, %69, %cst_11 {dimension_numbers = #tpu.dot_dimension_numbers<[1], [0], [0], [1], [0, 0, 1, 1], [], []>} : vector<128x72xbf16>, vector<72x8xbf16>, vector<128x8xf32> -> vector<128x8xf32>
    %c0_12 = arith.constant 0 : index
    %c0_13 = arith.constant 0 : index
    %71 = vector.load %arg5[%c0_12, %c0_13] : memref<1x8xf32, #tpu.memory_space<vmem>>, vector<1x8xf32>
    %72 = vector.broadcast %71 : vector<1x8xf32> to vector<128x8xf32>
    %73 = arith.addf %70, %72 : vector<128x8xf32>
    %cst_14 = arith.constant dense<0.000000e+00> : vector<8xf32>
    %74 = vector.multi_reduction <add>, %73, %cst_14 [0] : vector<128x8xf32> to vector<8xf32>
    %75 = vector.shape_cast %74 : vector<8xf32> to vector<1x8xf32>
    %76 = arith.mulf %73, %73 : vector<128x8xf32>
    %cst_15 = arith.constant dense<0.000000e+00> : vector<8xf32>
    %77 = vector.multi_reduction <add>, %76, %cst_15 [0] : vector<128x8xf32> to vector<8xf32>
    %78 = vector.shape_cast %77 : vector<8xf32> to vector<1x8xf32>
    %79 = tpu.concatenate %75, %78 in 0 : vector<1x8xf32>, vector<1x8xf32> -> vector<2x8xf32>
    %c0_16 = arith.constant 0 : index
    %c0_17 = arith.constant 0 : index
    %c0_18 = arith.constant 0 : index
    %80 = vector.load %arg7[%c0_16, %c0_17, %c0_18] : memref<1x2x8xf32, #tpu.memory_space<vmem>>, vector<1x2x8xf32>
    %81 = vector.shape_cast %80 : vector<1x2x8xf32> to vector<2x8xf32>
    %82 = vector.shape_cast %79 : vector<2x8xf32> to vector<1x2x8xf32>
    tpu.vector_store %arg7[%c0_16, %c0_17, %c0_18], %82 {strides = array<i32>} : memref<1x2x8xf32, #tpu.memory_space<vmem>>, vector<1x2x8xf32>,
    %83 = vector.shape_cast %73 : vector<128x8xf32> to vector<2x64x8xf32>
    %84 = tpu.transpose %83, [0, 2, 1] : vector<2x64x8xf32> -> vector<2x8x64xf32>
    %85 = arith.truncf %84 : vector<2x8x64xf32> to vector<2x8x64xbf16>
    %c0_19 = arith.constant 0 : index
    %c0_20 = arith.constant 0 : index
    %c0_21 = arith.constant 0 : index
    %86 = vector.load %arg6[%c0_19, %c0_20, %c0_21] : memref<2x8x64xbf16, #tpu.memory_space<vmem>>, vector<2x8x64xbf16>
    tpu.vector_store %arg6[%c0_19, %c0_20, %c0_21], %85 {strides = array<i32>} : memref<2x8x64xbf16, #tpu.memory_space<vmem>>, vector<2x8x64xbf16>,
    return
  }
  func.func @transform_0(%arg0: i32) -> (i32, i32, i32) {
    %c0_i32 = arith.constant 0 : i32
    %c0_i32_0 = arith.constant 0 : i32
    %c0_i32_1 = arith.constant 0 : i32
    return %arg0, %c0_i32, %c0_i32_0 : i32, i32, i32
  }
  func.func @transform_1(%arg0: i32) -> (i32, i32) {
    %c0_i32 = arith.constant 0 : i32
    %c0_i32_0 = arith.constant 0 : i32
    %c0_i32_1 = arith.constant 0 : i32
    return %c0_i32, %c0_i32_0 : i32, i32
  }
  func.func @transform_2(%arg0: i32) -> (i32, i32) {
    %c0_i32 = arith.constant 0 : i32
    %c0_i32_0 = arith.constant 0 : i32
    %c0_i32_1 = arith.constant 0 : i32
    return %c0_i32, %c0_i32_0 : i32, i32
  }
  func.func @transform_3(%arg0: i32) -> (i32, i32) {
    %c0_i32 = arith.constant 0 : i32
    %c0_i32_0 = arith.constant 0 : i32
    %c0_i32_1 = arith.constant 0 : i32
    return %c0_i32, %c0_i32_0 : i32, i32
  }
  func.func @transform_4(%arg0: i32) -> (i32, i32) {
    %c0_i32 = arith.constant 0 : i32
    %c0_i32_0 = arith.constant 0 : i32
    %c0_i32_1 = arith.constant 0 : i32
    return %c0_i32, %c0_i32_0 : i32, i32
  }
  func.func @transform_5(%arg0: i32) -> (i32, i32, i32) {
    %c0_i32 = arith.constant 0 : i32
    %c0_i32_0 = arith.constant 0 : i32
    %c0_i32_1 = arith.constant 0 : i32
    return %arg0, %c0_i32, %c0_i32_0 : i32, i32, i32
  }
  func.func @transform_6(%arg0: i32) -> (i32, i32, i32) {
    %c0_i32 = arith.constant 0 : i32
    %c0_i32_0 = arith.constant 0 : i32
    %c0_i32_1 = arith.constant 0 : i32
    return %arg0, %c0_i32, %c0_i32_0 : i32, i32, i32
  }
}

</mosaic_0001>

<llo_original>
// kernel: encoder_block.5
$region0: #{encoder_block.5}
  #allocation0 [shape = 'u32[]', space=smem, size = 0x4, offset = 0x4, fixed_abs, tag = 'smem constant byte address 0x4 - core index']
  #allocation1 [shape = 'u32[144,128]{1,0:T(1,128)}', space=vmem, size = 0x12000, scoped, tag = 'internal scratch']
  %s0 = inlined_call_operand.vmem [shape: bf16[2,8,64], index: 0, kind: input, shape index: {}]
  %s1 = inlined_call_operand.vmem [shape: f32[8,1], index: 1, kind: input, shape index: {}]
  %s2 = inlined_call_operand.vmem [shape: f32[8,1], index: 2, kind: input, shape index: {}]
  %s3 = inlined_call_operand.vmem [shape: f32[2,8,64], index: 3, kind: output, shape index: {}]
  %s4 = sld [smem:[#allocation0]]
  $region22: #{encoder_block.5} parent=0
    _
  %s6 = ssub.s32 1, %s4
  %s7 = scalar_select 0, %s6, %s4
  // Predicated region
  $region2: #{encoder_block.5} parent=0 // pred_check
    _
  $region3: #{encoder_block.5} parent=0 // pred_check_branch
    %9 = sbr.rel (0) target = $region5
  $region4: #{encoder_block.5} parent=0 // pred_region
    _
  $region5: #{encoder_block.5} parent=0 // pred_fallthru
    _
  // Predicated region
  $region6: #{encoder_block.5} parent=0 // pred_check
    _
  $region7: #{encoder_block.5} parent=0 // pred_check_branch
    %11 = sbr.rel (0) target = $region9
  $region8: #{encoder_block.5} parent=0 // pred_region
    _
  $region9: #{encoder_block.5} parent=0 // pred_fallthru
    _
  // Predicated region
  $region10: #{encoder_block.5} parent=0 // pred_check
    _
  $region11: #{encoder_block.5} parent=0 // pred_check_branch
    %13 = sbr.rel (0) target = $region13
  $region12: #{encoder_block.5} parent=0 // pred_region
    _
  $region13: #{encoder_block.5} parent=0 // pred_fallthru
    _
  %v14 = vld [vmem:[%s0] sm:$0xf]
  %v15 = vld [vmem:[%s0 + $0x4] sm:$0xf]
  %v16 = vunpack.c.l.bf16 %v14
  %v17 = vunpack.c.l.bf16 %v15
  %v18 = vld [vmem:[%s1] sm:$0xff]
  %20 = vset.pattern.permute.xlu0 0
  %21 = vperm.xlu0 %20, %v18
  %v22 = vpop.permute.xlu0 %21
  %v24 = vmul.f32 %v16, %v22
  %v25 = vmul.f32 %v17, %v22
  %v26 = vld [vmem:[%s2] sm:$0xff]
  %28 = vset.pattern.permute.xlu0 0
  %29 = vperm.xlu0 %28, %v26
  %v30 = vpop.permute.xlu0 %29
  %v32 = vadd.f32 %v24, %v30
  %v33 = vadd.f32 %v25, %v30
  %v34 = vmax.f32 %v32, 0.0
  %v35 = vmax.f32 %v33, 0.0
  %vm36 = vcmask 523264
  %37 = vst.msk [vmem:[%s3] sm:$0xff] %vm36, %v34
  %38 = vst.msk [vmem:[%s3 + $0x8] sm:$0xff] %vm36, %v35
  // Predicated region
  $region14: #{encoder_block.5} parent=0 // pred_check
    _
  $region15: #{encoder_block.5} parent=0 // pred_check_branch
    %40 = sbr.rel (0) target = $region17
  $region16: #{encoder_block.5} parent=0 // pred_region
    _
  $region17: #{encoder_block.5} parent=0 // pred_fallthru
    _
  // Predicated region
  $region18: #{encoder_block.5} parent=0 // pred_check
    _
  $region19: #{encoder_block.5} parent=0 // pred_check_branch
    %42 = sbr.rel (0) target = $region21
  $region20: #{encoder_block.5} parent=0 // pred_region
    _
  $region21: #{encoder_block.5} parent=0 // pred_fallthru
    _

// kernel: encoder_block.3
$region0: #{encoder_block.3}
  #allocation0 [shape = 'u32[]', space=smem, size = 0x4, offset = 0x4, fixed_abs, tag = 'smem constant byte address 0x4 - core index']
  #allocation1 [shape = 'u32[144,128]{1,0:T(1,128)}', space=vmem, size = 0x12000, scoped, tag = 'internal scratch']
  %s0 = inlined_call_operand.vmem [shape: f32[2,2,64,8], index: 0, kind: input, shape index: {}]
  %s1 = inlined_call_operand.vmem [shape: bf16[36,8], index: 1, kind: input, shape index: {}]
  %s2 = inlined_call_operand.vmem [shape: f32[1,8], index: 2, kind: input, shape index: {}]
  %s3 = inlined_call_operand.vmem [shape: bf16[2,8,64], index: 3, kind: output, shape index: {0}]
  %s4 = inlined_call_operand.vmem [shape: f32[1,2,8], index: 4, kind: output, shape index: {1}]
  %5 = xla_tuple %s3, %s4
  %s6 = sld [smem:[#allocation0]]
  $region30: #{encoder_block.3} parent=0
    _
  %s8 = ssub.s32 1, %s6
  %s9 = scalar_select 0, %s8, %s6
  // Predicated region
  $region2: #{encoder_block.3} parent=0 // pred_check
    _
  $region3: #{encoder_block.3} parent=0 // pred_check_branch
    %11 = sbr.rel (0) target = $region5
  $region4: #{encoder_block.3} parent=0 // pred_region
    _
  $region5: #{encoder_block.3} parent=0 // pred_fallthru
    _
  // Predicated region
  $region6: #{encoder_block.3} parent=0 // pred_check
    _
  $region7: #{encoder_block.3} parent=0 // pred_check_branch
    %13 = sbr.rel (0) target = $region9
  $region8: #{encoder_block.3} parent=0 // pred_region
    _
  $region9: #{encoder_block.3} parent=0 // pred_fallthru
    _
  // Predicated region
  $region10: #{encoder_block.3} parent=0 // pred_check
    _
  $region11: #{encoder_block.3} parent=0 // pred_check_branch
    %15 = sbr.rel (0) target = $region13
  $region12: #{encoder_block.3} parent=0 // pred_region
    _
  $region13: #{encoder_block.3} parent=0 // pred_fallthru
    _
  %v19 = vld [vmem:[%s0] sm:$0xff]
  %v20 = vld [vmem:[%s0 + $0x8] sm:$0xff]
  %v21 = vld [vmem:[%s0 + $0x10] sm:$0xff]
  %v22 = vld [vmem:[%s0 + $0x18] sm:$0xff]
  %v23 = vld [vmem:[%s0 + $0x20] sm:$0xff]
  %v24 = vld [vmem:[%s0 + $0x28] sm:$0xff]
  %v25 = vld [vmem:[%s0 + $0x30] sm:$0xff]
  %v26 = vld [vmem:[%s0 + $0x38] sm:$0xff]
  %v27 = vld [vmem:[%s0 + $0x40] sm:$0xff]
  %v28 = vld [vmem:[%s0 + $0x48] sm:$0xff]
  %v29 = vld [vmem:[%s0 + $0x50] sm:$0xff]
  %v30 = vld [vmem:[%s0 + $0x58] sm:$0xff]
  %v31 = vld [vmem:[%s0 + $0x60] sm:$0xff]
  %v32 = vld [vmem:[%s0 + $0x68] sm:$0xff]
  %v33 = vld [vmem:[%s0 + $0x70] sm:$0xff]
  %v34 = vld [vmem:[%s0 + $0x78] sm:$0xff]
  %v35 = vld [vmem:[%s0 + $0x80] sm:$0xff]
  %v36 = vld [vmem:[%s0 + $0x88] sm:$0xff]
  %v37 = vld [vmem:[%s0 + $0x90] sm:$0xff]
  %v38 = vld [vmem:[%s0 + $0x98] sm:$0xff]
  %v39 = vld [vmem:[%s0 + $0xa0] sm:$0xff]
  %v40 = vld [vmem:[%s0 + $0xa8] sm:$0xff]
  %v41 = vld [vmem:[%s0 + $0xb0] sm:$0xff]
  %v42 = vld [vmem:[%s0 + $0xb8] sm:$0xff]
  %v43 = vld [vmem:[%s0 + $0xc0] sm:$0xff]
  %v44 = vld [vmem:[%s0 + $0xc8] sm:$0xff]
  %v45 = vld [vmem:[%s0 + $0xd0] sm:$0xff]
  %v46 = vld [vmem:[%s0 + $0xd8] sm:$0xff]
  %v47 = vld [vmem:[%s0 + $0xe0] sm:$0xff]
  %v48 = vld [vmem:[%s0 + $0xe8] sm:$0xff]
  %v49 = vld [vmem:[%s0 + $0xf0] sm:$0xff]
  %v50 = vld [vmem:[%s0 + $0xf8] sm:$0xff]
  %v51 = vmax.f32 %v19, %v27
  %v52 = vmax.f32 %v20, %v28
  %v53 = vmax.f32 %v21, %v29
  %v54 = vmax.f32 %v22, %v30
  %v55 = vmax.f32 %v23, %v31
  %v56 = vmax.f32 %v24, %v32
  %v57 = vmax.f32 %v25, %v33
  %v58 = vmax.f32 %v26, %v34
  %v59 = vmax.f32 %v35, %v43
  %v60 = vmax.f32 %v36, %v44
  %v61 = vmax.f32 %v37, %v45
  %v62 = vmax.f32 %v38, %v46
  %v63 = vmax.f32 %v39, %v47
  %v64 = vmax.f32 %v40, %v48
  %v65 = vmax.f32 %v41, %v49
  %v66 = vmax.f32 %v42, %v50
  %83 = vrot.lane.b32.xlu0 %v51, 124
  %v84 = vpop.permute.xlu0 %83
  %85 = vrot.lane.b32.xlu0 %v52, 124
  %v86 = vpop.permute.xlu0 %85
  %87 = vrot.lane.b32.xlu0 %v53, 124
  %v88 = vpop.permute.xlu0 %87
  %89 = vrot.lane.b32.xlu0 %v54, 124
  %v90 = vpop.permute.xlu0 %89
  %91 = vrot.lane.b32.xlu0 %v55, 124
  %v92 = vpop.permute.xlu0 %91
  %93 = vrot.lane.b32.xlu0 %v56, 124
  %v94 = vpop.permute.xlu0 %93
  %95 = vrot.lane.b32.xlu0 %v57, 124
  %v96 = vpop.permute.xlu0 %95
  %97 = vrot.lane.b32.xlu0 %v58, 124
  %v98 = vpop.permute.xlu0 %97
  %99 = vrot.lane.b32.xlu0 %v59, 124
  %v100 = vpop.permute.xlu0 %99
  %101 = vrot.lane.b32.xlu0 %v60, 124
  %v102 = vpop.permute.xlu0 %101
  %103 = vrot.lane.b32.xlu0 %v61, 124
  %v104 = vpop.permute.xlu0 %103
  %105 = vrot.lane.b32.xlu0 %v62, 124
  %v106 = vpop.permute.xlu0 %105
  %107 = vrot.lane.b32.xlu0 %v63, 124
  %v108 = vpop.permute.xlu0 %107
  %109 = vrot.lane.b32.xlu0 %v64, 124
  %v110 = vpop.permute.xlu0 %109
  %111 = vrot.lane.b32.xlu0 %v65, 124
  %v112 = vpop.permute.xlu0 %111
  %113 = vrot.lane.b32.xlu0 %v66, 124
  %v114 = vpop.permute.xlu0 %113
  %v131 = vmax.f32 %v51, %v84
  %v132 = vmax.f32 %v52, %v86
  %v133 = vmax.f32 %v53, %v88
  %v134 = vmax.f32 %v54, %v90
  %v135 = vmax.f32 %v55, %v92
  %v136 = vmax.f32 %v56, %v94
  %v137 = vmax.f32 %v57, %v96
  %v138 = vmax.f32 %v58, %v98
  %v139 = vmax.f32 %v59, %v100
  %v140 = vmax.f32 %v60, %v102
  %v141 = vmax.f32 %v61, %v104
  %v142 = vmax.f32 %v62, %v106
  %v143 = vmax.f32 %v63, %v108
  %v144 = vmax.f32 %v64, %v110
  %v145 = vmax.f32 %v65, %v112
  %v146 = vmax.f32 %v66, %v114
  %v147 = vpack.c.bf16 %v132, %v131
  %v148 = vpack.c.bf16 %v134, %v133
  %v149 = vpack.c.bf16 %v136, %v135
  %v150 = vpack.c.bf16 %v138, %v137
  %v151 = vpack.c.bf16 %v140, %v139
  %v152 = vpack.c.bf16 %v142, %v141
  %v153 = vpack.c.bf16 %v144, %v143
  %v154 = vpack.c.bf16 %v146, %v145
  %v155 = vlaneseq
  %v156 = vshrl.u32 %v155, 7
  %v157 = vadd.s32 %v156, 8
  %v158 = vadd.s32 %v156, 16
  %v159 = vadd.s32 %v156, 24
  %v160 = vadd.s32 %v156, 32
  %v161 = vadd.s32 %v156, 40
  %v162 = vadd.s32 %v156, 48
  %v163 = vadd.s32 %v156, 56
  %v164 = vadd.s32 %v156, 64
  %v165 = vadd.s32 %v156, 72
  %v166 = vadd.s32 %v156, 80
  %v167 = vadd.s32 %v156, 88
  %v168 = vadd.s32 %v156, 96
  %v169 = vadd.s32 %v156, 104
  %v170 = vadd.s32 %v156, 112
  %v171 = vadd.s32 %v156, 120
  %v172 = vand.u32 %v156, 63
  %v173 = vand.u32 %v157, 63
  %v174 = vand.u32 %v158, 63
  %v175 = vand.u32 %v159, 63
  %v176 = vand.u32 %v160, 63
  %v177 = vand.u32 %v161, 63
  %v178 = vand.u32 %v162, 63
  %v179 = vand.u32 %v163, 63
  %v180 = vand.u32 %v164, 63
  %v181 = vand.u32 %v165, 63
  %v182 = vand.u32 %v166, 63
  %v183 = vand.u32 %v167, 63
  %v184 = vand.u32 %v168, 63
  %v185 = vand.u32 %v169, 63
  %v186 = vand.u32 %v170, 63
  %v187 = vand.u32 %v171, 63
  %v188 = vand.u32 %v156, 7
  %v189 = vand.u32 %v157, 7
  %v190 = vand.u32 %v158, 7
  %v191 = vand.u32 %v159, 7
  %v192 = vand.u32 %v160, 7
  %v193 = vand.u32 %v161, 7
  %v194 = vand.u32 %v162, 7
  %v195 = vand.u32 %v163, 7
  %v196 = vand.u32 %v164, 7
  %v197 = vand.u32 %v165, 7
  %v198 = vand.u32 %v166, 7
  %v199 = vand.u32 %v167, 7
  %v200 = vand.u32 %v168, 7
  %v201 = vand.u32 %v169, 7
  %v202 = vand.u32 %v170, 7
  %v203 = vand.u32 %v171, 7
  %vm204 = vcmp.lt.s32.totalorder %v172, 8
  %vm205 = vcmp.lt.s32.totalorder %v173, 8
  %vm206 = vcmp.lt.s32.totalorder %v174, 8
  %vm207 = vcmp.lt.s32.totalorder %v175, 8
  %vm208 = vcmp.lt.s32.totalorder %v176, 8
  %vm209 = vcmp.lt.s32.totalorder %v177, 8
  %vm210 = vcmp.lt.s32.totalorder %v178, 8
  %vm211 = vcmp.lt.s32.totalorder %v179, 8
  %vm212 = vcmp.lt.s32.totalorder %v180, 8
  %vm213 = vcmp.lt.s32.totalorder %v181, 8
  %vm214 = vcmp.lt.s32.totalorder %v182, 8
  %vm215 = vcmp.lt.s32.totalorder %v183, 8
  %vm216 = vcmp.lt.s32.totalorder %v184, 8
  %vm217 = vcmp.lt.s32.totalorder %v185, 8
  %vm218 = vcmp.lt.s32.totalorder %v186, 8
  %vm219 = vcmp.lt.s32.totalorder %v187, 8
  %vm220 = vcmp.ge.s32.totalorder %v172, 56
  %vm221 = vcmp.ge.s32.totalorder %v173, 56
  %vm222 = vcmp.ge.s32.totalorder %v174, 56
  %vm223 = vcmp.ge.s32.totalorder %v175, 56
  %vm224 = vcmp.ge.s32.totalorder %v176, 56
  %vm225 = vcmp.ge.s32.totalorder %v177, 56
  %vm226 = vcmp.ge.s32.totalorder %v178, 56
  %vm227 = vcmp.ge.s32.totalorder %v179, 56
  %vm228 = vcmp.ge.s32.totalorder %v180, 56
  %vm229 = vcmp.ge.s32.totalorder %v181, 56
  %vm230 = vcmp.ge.s32.totalorder %v182, 56
  %vm231 = vcmp.ge.s32.totalorder %v183, 56
  %vm232 = vcmp.ge.s32.totalorder %v184, 56
  %vm233 = vcmp.ge.s32.totalorder %v185, 56
  %vm234 = vcmp.ge.s32.totalorder %v186, 56
  %vm235 = vcmp.ge.s32.totalorder %v187, 56
  %vm236 = vcmp.eq.s32.totalorder %v188, 0
  %vm237 = vcmp.eq.s32.totalorder %v189, 0
  %vm238 = vcmp.eq.s32.totalorder %v190, 0
  %vm239 = vcmp.eq.s32.totalorder %v191, 0
  %vm240 = vcmp.eq.s32.totalorder %v192, 0
  %vm241 = vcmp.eq.s32.totalorder %v193, 0
  %vm242 = vcmp.eq.s32.totalorder %v194, 0
  %vm243 = vcmp.eq.s32.totalorder %v195, 0
  %vm244 = vcmp.eq.s32.totalorder %v196, 0
  %vm245 = vcmp.eq.s32.totalorder %v197, 0
  %vm246 = vcmp.eq.s32.totalorder %v198, 0
  %vm247 = vcmp.eq.s32.totalorder %v199, 0
  %vm248 = vcmp.eq.s32.totalorder %v200, 0
  %vm249 = vcmp.eq.s32.totalorder %v201, 0
  %vm250 = vcmp.eq.s32.totalorder %v202, 0
  %vm251 = vcmp.eq.s32.totalorder %v203, 0
  %vm252 = vcmp.eq.s32.totalorder %v188, 7
  %vm253 = vcmp.eq.s32.totalorder %v189, 7
  %vm254 = vcmp.eq.s32.totalorder %v190, 7
  %vm255 = vcmp.eq.s32.totalorder %v191, 7
  %vm256 = vcmp.eq.s32.totalorder %v192, 7
  %vm257 = vcmp.eq.s32.totalorder %v193, 7
  %vm258 = vcmp.eq.s32.totalorder %v194, 7
  %vm259 = vcmp.eq.s32.totalorder %v195, 7
  %vm260 = vcmp.eq.s32.totalorder %v196, 7
  %vm261 = vcmp.eq.s32.totalorder %v197, 7
  %vm262 = vcmp.eq.s32.totalorder %v198, 7
  %vm263 = vcmp.eq.s32.totalorder %v199, 7
  %vm264 = vcmp.eq.s32.totalorder %v200, 7
  %vm265 = vcmp.eq.s32.totalorder %v201, 7
  %vm266 = vcmp.eq.s32.totalorder %v202, 7
  %vm267 = vcmp.eq.s32.totalorder %v203, 7
  %vm268 = vsmask.f32 4352
  %v270 = vshrl.u32 %v147, 16
  %v272 = vrot.slane %v270, 3
  %v273 = vshll.u32 %v147, 16
  %v275 = vrot.slane %v273, 4
  %v276 = vor.u32 %v272, %v275
  %v278 = vshrl.u32 %v148, 16
  %v280 = vrot.slane %v278, 3
  %v281 = vshll.u32 %v148, 16
  %v283 = vrot.slane %v281, 4
  %v284 = vor.u32 %v280, %v283
  %v285 = vsel %vm268, %v276, %v284
  %v287 = vshrl.u32 %v149, 16
  %v289 = vrot.slane %v287, 3
  %v290 = vshll.u32 %v149, 16
  %v292 = vrot.slane %v290, 4
  %v293 = vor.u32 %v289, %v292
  %v294 = vsel %vm268, %v284, %v293
  %v296 = vshrl.u32 %v150, 16
  %v298 = vrot.slane %v296, 3
  %v299 = vshll.u32 %v150, 16
  %v301 = vrot.slane %v299, 4
  %v302 = vor.u32 %v298, %v301
  %v303 = vsel %vm268, %v293, %v302
  %v305 = vshrl.u32 %v151, 16
  %v307 = vrot.slane %v305, 3
  %v308 = vshll.u32 %v151, 16
  %v310 = vrot.slane %v308, 4
  %v311 = vor.u32 %v307, %v310
  %v312 = vsel %vm268, %v302, %v311
  %v314 = vshrl.u32 %v152, 16
  %v316 = vrot.slane %v314, 3
  %v317 = vshll.u32 %v152, 16
  %v319 = vrot.slane %v317, 4
  %v320 = vor.u32 %v316, %v319
  %v321 = vsel %vm268, %v311, %v320
  %v323 = vshrl.u32 %v153, 16
  %v325 = vrot.slane %v323, 3
  %v326 = vshll.u32 %v153, 16
  %v328 = vrot.slane %v326, 4
  %v329 = vor.u32 %v325, %v328
  %v330 = vsel %vm268, %v320, %v329
  %v332 = vshrl.u32 %v154, 16
  %v334 = vrot.slane %v332, 3
  %v335 = vshll.u32 %v154, 16
  %v337 = vrot.slane %v335, 4
  %v338 = vor.u32 %v334, %v337
  %v339 = vsel %vm268, %v329, %v338
  %vm349 = vcmask 1044480
  %vm350 = vmand %vm349, %vm268
  %v351 = vsel %vm350, 0, %v276
  %v352 = vsel %vm350, %v338, 0
  %vm353 = vmor %vm204, %vm236
  %vm354 = vmor %vm205, %vm237
  %vm355 = vmor %vm206, %vm238
  %vm356 = vmor %vm207, %vm239
  %vm357 = vmor %vm208, %vm240
  %vm358 = vmor %vm209, %vm241
  %vm359 = vmor %vm210, %vm242
  %vm360 = vmor %vm211, %vm243
  %vm361 = vmor %vm212, %vm244
  %vm362 = vmor %vm213, %vm245
  %vm363 = vmor %vm214, %vm246
  %vm364 = vmor %vm215, %vm247
  %vm365 = vmor %vm216, %vm248
  %vm366 = vmor %vm217, %vm249
  %vm367 = vmor %vm218, %vm250
  %vm368 = vmor %vm219, %vm251
  %v369 = vsel %vm353, 1, 0
  %v370 = vsel %vm354, 1, 0
  %v371 = vsel %vm355, 1, 0
  %v372 = vsel %vm356, 1, 0
  %v373 = vsel %vm357, 1, 0
  %v374 = vsel %vm358, 1, 0
  %v375 = vsel %vm359, 1, 0
  %v376 = vsel %vm360, 1, 0
  %v377 = vsel %vm361, 1, 0
  %v378 = vsel %vm362, 1, 0
  %v379 = vsel %vm363, 1, 0
  %v380 = vsel %vm364, 1, 0
  %v381 = vsel %vm365, 1, 0
  %v382 = vsel %vm366, 1, 0
  %v383 = vsel %vm367, 1, 0
  %v384 = vsel %vm368, 1, 0
  %vm385 = vcmp.eq.s32.totalorder %v369, 1
  %vm386 = vcmp.eq.s32.totalorder %v370, 1
  %vm387 = vcmp.eq.s32.totalorder %v371, 1
  %vm388 = vcmp.eq.s32.totalorder %v372, 1
  %vm389 = vcmp.eq.s32.totalorder %v373, 1
  %vm390 = vcmp.eq.s32.totalorder %v374, 1
  %vm391 = vcmp.eq.s32.totalorder %v375, 1
  %vm392 = vcmp.eq.s32.totalorder %v376, 1
  %vm393 = vcmp.eq.s32.totalorder %v377, 1
  %vm394 = vcmp.eq.s32.totalorder %v378, 1
  %vm395 = vcmp.eq.s32.totalorder %v379, 1
  %vm396 = vcmp.eq.s32.totalorder %v380, 1
  %vm397 = vcmp.eq.s32.totalorder %v381, 1
  %vm398 = vcmp.eq.s32.totalorder %v382, 1
  %vm399 = vcmp.eq.s32.totalorder %v383, 1
  %vm400 = vcmp.eq.s32.totalorder %v384, 1
  %vm401 = vmpackc.low %vm385, %vm385
  %vm402 = vmpackc.low %vm386, %vm386
  %vm403 = vmpackc.low %vm387, %vm387
  %vm404 = vmpackc.low %vm388, %vm388
  %vm405 = vmpackc.low %vm389, %vm389
  %vm406 = vmpackc.low %vm390, %vm390
  %vm407 = vmpackc.low %vm391, %vm391
  %vm408 = vmpackc.low %vm392, %vm392
  %vm409 = vmpackc.low %vm393, %vm393
  %vm410 = vmpackc.low %vm394, %vm394
  %vm411 = vmpackc.low %vm395, %vm395
  %vm412 = vmpackc.low %vm396, %vm396
  %vm413 = vmpackc.low %vm397, %vm397
  %vm414 = vmpackc.low %vm398, %vm398
  %vm415 = vmpackc.low %vm399, %vm399
  %vm416 = vmpackc.low %vm400, %vm400
  %v417 = vsel %vm401, 65537, 0
  %v418 = vsel %vm402, 65537, 0
  %v419 = vsel %vm403, 65537, 0
  %v420 = vsel %vm404, 65537, 0
  %v421 = vsel %vm405, 65537, 0
  %v422 = vsel %vm406, 65537, 0
  %v423 = vsel %vm407, 65537, 0
  %v424 = vsel %vm408, 65537, 0
  %v425 = vsel %vm409, 65537, 0
  %v426 = vsel %vm410, 65537, 0
  %v427 = vsel %vm411, 65537, 0
  %v428 = vsel %vm412, 65537, 0
  %v429 = vsel %vm413, 65537, 0
  %v430 = vsel %vm414, 65537, 0
  %v431 = vsel %vm415, 65537, 0
  %v432 = vsel %vm416, 65537, 0
  %v433 = vunpack.c.l.b16 %v417
  %v434 = vunpack.c.l.b16 %v418
  %v435 = vunpack.c.l.b16 %v419
  %v436 = vunpack.c.l.b16 %v420
  %v437 = vunpack.c.l.b16 %v421
  %v438 = vunpack.c.l.b16 %v422
  %v439 = vunpack.c.l.b16 %v423
  %v440 = vunpack.c.l.b16 %v424
  %v441 = vunpack.c.l.b16 %v425
  %v442 = vunpack.c.l.b16 %v426
  %v443 = vunpack.c.l.b16 %v427
  %v444 = vunpack.c.l.b16 %v428
  %v445 = vunpack.c.l.b16 %v429
  %v446 = vunpack.c.l.b16 %v430
  %v447 = vunpack.c.l.b16 %v431
  %v448 = vunpack.c.l.b16 %v432
  %v449 = vpack.c.b16 %v434, %v433
  %v450 = vpack.c.b16 %v436, %v435
  %v451 = vpack.c.b16 %v438, %v437
  %v452 = vpack.c.b16 %v440, %v439
  %v453 = vpack.c.b16 %v442, %v441
  %v454 = vpack.c.b16 %v444, %v443
  %v455 = vpack.c.b16 %v446, %v445
  %v456 = vpack.c.b16 %v448, %v447
  %vm457 = vcmp.ne.s16.totalorder %v449, 0
  %vm458 = vcmp.ne.s16.totalorder %v450, 0
  %vm459 = vcmp.ne.s16.totalorder %v451, 0
  %vm460 = vcmp.ne.s16.totalorder %v452, 0
  %vm461 = vcmp.ne.s16.totalorder %v453, 0
  %vm462 = vcmp.ne.s16.totalorder %v454, 0
  %vm463 = vcmp.ne.s16.totalorder %v455, 0
  %vm464 = vcmp.ne.s16.totalorder %v456, 0
  %v465 = vsel %vm457, 0, %v351
  %v466 = vsel %vm458, 0, %v285
  %v467 = vsel %vm459, 0, %v294
  %v468 = vsel %vm460, 0, %v303
  %v469 = vsel %vm461, 0, %v312
  %v470 = vsel %vm462, 0, %v321
  %v471 = vsel %vm463, 0, %v330
  %v472 = vsel %vm464, 0, %v339
  %v473 = vsel %vm204, 1, 0
  %v474 = vsel %vm205, 1, 0
  %v475 = vsel %vm206, 1, 0
  %v476 = vsel %vm207, 1, 0
  %v477 = vsel %vm208, 1, 0
  %v478 = vsel %vm209, 1, 0
  %v479 = vsel %vm210, 1, 0
  %v480 = vsel %vm211, 1, 0
  %v481 = vsel %vm212, 1, 0
  %v482 = vsel %vm213, 1, 0
  %v483 = vsel %vm214, 1, 0
  %v484 = vsel %vm215, 1, 0
  %v485 = vsel %vm216, 1, 0
  %v486 = vsel %vm217, 1, 0
  %v487 = vsel %vm218, 1, 0
  %v488 = vsel %vm219, 1, 0
  %vm489 = vcmp.eq.s32.totalorder %v473, 1
  %vm490 = vcmp.eq.s32.totalorder %v474, 1
  %vm491 = vcmp.eq.s32.totalorder %v475, 1
  %vm492 = vcmp.eq.s32.totalorder %v476, 1
  %vm493 = vcmp.eq.s32.totalorder %v477, 1
  %vm494 = vcmp.eq.s32.totalorder %v478, 1
  %vm495 = vcmp.eq.s32.totalorder %v479, 1
  %vm496 = vcmp.eq.s32.totalorder %v480, 1
  %vm497 = vcmp.eq.s32.totalorder %v481, 1
  %vm498 = vcmp.eq.s32.totalorder %v482, 1
  %vm499 = vcmp.eq.s32.totalorder %v483, 1
  %vm500 = vcmp.eq.s32.totalorder %v484, 1
  %vm501 = vcmp.eq.s32.totalorder %v485, 1
  %vm502 = vcmp.eq.s32.totalorder %v486, 1
  %vm503 = vcmp.eq.s32.totalorder %v487, 1
  %vm504 = vcmp.eq.s32.totalorder %v488, 1
  %vm505 = vmpackc.low %vm489, %vm489
  %vm506 = vmpackc.low %vm490, %vm490
  %vm507 = vmpackc.low %vm491, %vm491
  %vm508 = vmpackc.low %vm492, %vm492
  %vm509 = vmpackc.low %vm493, %vm493
  %vm510 = vmpackc.low %vm494, %vm494
  %vm511 = vmpackc.low %vm495, %vm495
  %vm512 = vmpackc.low %vm496, %vm496
  %vm513 = vmpackc.low %vm497, %vm497
  %vm514 = vmpackc.low %vm498, %vm498
  %vm515 = vmpackc.low %vm499, %vm499
  %vm516 = vmpackc.low %vm500, %vm500
  %vm517 = vmpackc.low %vm501, %vm501
  %vm518 = vmpackc.low %vm502, %vm502
  %vm519 = vmpackc.low %vm503, %vm503
  %vm520 = vmpackc.low %vm504, %vm504
  %v521 = vsel %vm505, 65537, 0
  %v522 = vsel %vm506, 65537, 0
  %v523 = vsel %vm507, 65537, 0
  %v524 = vsel %vm508, 65537, 0
  %v525 = vsel %vm509, 65537, 0
  %v526 = vsel %vm510, 65537, 0
  %v527 = vsel %vm511, 65537, 0
  %v528 = vsel %vm512, 65537, 0
  %v529 = vsel %vm513, 65537, 0
  %v530 = vsel %vm514, 65537, 0
  %v531 = vsel %vm515, 65537, 0
  %v532 = vsel %vm516, 65537, 0
  %v533 = vsel %vm517, 65537, 0
  %v534 = vsel %vm518, 65537, 0
  %v535 = vsel %vm519, 65537, 0
  %v536 = vsel %vm520, 65537, 0
  %v537 = vunpack.c.l.b16 %v521
  %v538 = vunpack.c.l.b16 %v522
  %v539 = vunpack.c.l.b16 %v523
  %v540 = vunpack.c.l.b16 %v524
  %v541 = vunpack.c.l.b16 %v525
  %v542 = vunpack.c.l.b16 %v526
  %v543 = vunpack.c.l.b16 %v527
  %v544 = vunpack.c.l.b16 %v528
  %v545 = vunpack.c.l.b16 %v529
  %v546 = vunpack.c.l.b16 %v530
  %v547 = vunpack.c.l.b16 %v531
  %v548 = vunpack.c.l.b16 %v532
  %v549 = vunpack.c.l.b16 %v533
  %v550 = vunpack.c.l.b16 %v534
  %v551 = vunpack.c.l.b16 %v535
  %v552 = vunpack.c.l.b16 %v536
  %v553 = vpack.c.b16 %v538, %v537
  %v554 = vpack.c.b16 %v540, %v539
  %v555 = vpack.c.b16 %v542, %v541
  %v556 = vpack.c.b16 %v544, %v543
  %v557 = vpack.c.b16 %v546, %v545
  %v558 = vpack.c.b16 %v548, %v547
  %v559 = vpack.c.b16 %v550, %v549
  %v560 = vpack.c.b16 %v552, %v551
  %vm561 = vsmask.f32 256
  %v563 = vshrl.u32 %v553, 16
  %v565 = vrot.slane %v563, 7
  %v566 = vshll.u32 %v553, 16
  %v568 = vor.u32 %v565, %v566
  %v570 = vshrl.u32 %v554, 16
  %v572 = vrot.slane %v570, 7
  %v573 = vshll.u32 %v554, 16
  %v575 = vor.u32 %v572, %v573
  %v576 = vsel %vm561, %v565, %v575
  %v578 = vshrl.u32 %v555, 16
  %v580 = vrot.slane %v578, 7
  %v581 = vshll.u32 %v555, 16
  %v583 = vor.u32 %v580, %v581
  %v584 = vsel %vm561, %v572, %v583
  %v586 = vshrl.u32 %v556, 16
  %v588 = vrot.slane %v586, 7
  %v589 = vshll.u32 %v556, 16
  %v591 = vor.u32 %v588, %v589
  %v592 = vsel %vm561, %v580, %v591
  %v594 = vshrl.u32 %v557, 16
  %v596 = vrot.slane %v594, 7
  %v597 = vshll.u32 %v557, 16
  %v599 = vor.u32 %v596, %v597
  %v600 = vsel %vm561, %v588, %v599
  %v602 = vshrl.u32 %v558, 16
  %v604 = vrot.slane %v602, 7
  %v605 = vshll.u32 %v558, 16
  %v607 = vor.u32 %v604, %v605
  %v608 = vsel %vm561, %v596, %v607
  %v610 = vshrl.u32 %v559, 16
  %v612 = vrot.slane %v610, 7
  %v613 = vshll.u32 %v559, 16
  %v615 = vor.u32 %v612, %v613
  %v616 = vsel %vm561, %v604, %v615
  %v618 = vshrl.u32 %v560, 16
  %v620 = vrot.slane %v618, 7
  %v621 = vshll.u32 %v560, 16
  %v623 = vor.u32 %v620, %v621
  %v624 = vsel %vm561, %v612, %v623
  %vm625 = vcmp.ne.s16.totalorder %v568, 0
  %vm626 = vcmp.ne.s16.totalorder %v576, 0
  %vm627 = vcmp.ne.s16.totalorder %v584, 0
  %vm628 = vcmp.ne.s16.totalorder %v592, 0
  %vm629 = vcmp.ne.s16.totalorder %v600, 0
  %vm630 = vcmp.ne.s16.totalorder %v608, 0
  %vm631 = vcmp.ne.s16.totalorder %v616, 0
  %vm632 = vcmp.ne.s16.totalorder %v624, 0
  %vm633 = vcmp.ne.s16.totalorder %v620, 0
  %v634 = vsel %vm625, 0, %v351
  %v635 = vsel %vm626, 0, %v285
  %v636 = vsel %vm627, 0, %v294
  %v637 = vsel %vm628, 0, %v303
  %v638 = vsel %vm629, 0, %v312
  %v639 = vsel %vm630, 0, %v321
  %v640 = vsel %vm631, 0, %v330
  %v641 = vsel %vm632, 0, %v339
  %v642 = vsel %vm633, 0, %v352
  %vm643 = vmor %vm204, %vm252
  %vm644 = vmor %vm205, %vm253
  %vm645 = vmor %vm206, %vm254
  %vm646 = vmor %vm207, %vm255
  %vm647 = vmor %vm208, %vm256
  %vm648 = vmor %vm209, %vm257
  %vm649 = vmor %vm210, %vm258
  %vm650 = vmor %vm211, %vm259
  %vm651 = vmor %vm212, %vm260
  %vm652 = vmor %vm213, %vm261
  %vm653 = vmor %vm214, %vm262
  %vm654 = vmor %vm215, %vm263
  %vm655 = vmor %vm216, %vm264
  %vm656 = vmor %vm217, %vm265
  %vm657 = vmor %vm218, %vm266
  %vm658 = vmor %vm219, %vm267
  %v659 = vsel %vm643, 1, 0
  %v660 = vsel %vm644, 1, 0
  %v661 = vsel %vm645, 1, 0
  %v662 = vsel %vm646, 1, 0
  %v663 = vsel %vm647, 1, 0
  %v664 = vsel %vm648, 1, 0
  %v665 = vsel %vm649, 1, 0
  %v666 = vsel %vm650, 1, 0
  %v667 = vsel %vm651, 1, 0
  %v668 = vsel %vm652, 1, 0
  %v669 = vsel %vm653, 1, 0
  %v670 = vsel %vm654, 1, 0
  %v671 = vsel %vm655, 1, 0
  %v672 = vsel %vm656, 1, 0
  %v673 = vsel %vm657, 1, 0
  %v674 = vsel %vm658, 1, 0
  %vm675 = vcmp.eq.s32.totalorder %v659, 1
  %vm676 = vcmp.eq.s32.totalorder %v660, 1
  %vm677 = vcmp.eq.s32.totalorder %v661, 1
  %vm678 = vcmp.eq.s32.totalorder %v662, 1
  %vm679 = vcmp.eq.s32.totalorder %v663, 1
  %vm680 = vcmp.eq.s32.totalorder %v664, 1
  %vm681 = vcmp.eq.s32.totalorder %v665, 1
  %vm682 = vcmp.eq.s32.totalorder %v666, 1
  %vm683 = vcmp.eq.s32.totalorder %v667, 1
  %vm684 = vcmp.eq.s32.totalorder %v668, 1
  %vm685 = vcmp.eq.s32.totalorder %v669, 1
  %vm686 = vcmp.eq.s32.totalorder %v670, 1
  %vm687 = vcmp.eq.s32.totalorder %v671, 1
  %vm688 = vcmp.eq.s32.totalorder %v672, 1
  %vm689 = vcmp.eq.s32.totalorder %v673, 1
  %vm690 = vcmp.eq.s32.totalorder %v674, 1
  %vm691 = vmpackc.low %vm675, %vm675
  %vm692 = vmpackc.low %vm676, %vm676
  %vm693 = vmpackc.low %vm677, %vm677
  %vm694 = vmpackc.low %vm678, %vm678
  %vm695 = vmpackc.low %vm679, %vm679
  %vm696 = vmpackc.low %vm680, %vm680
  %vm697 = vmpackc.low %vm681, %vm681
  %vm698 = vmpackc.low %vm682, %vm682
  %vm699 = vmpackc.low %vm683, %vm683
  %vm700 = vmpackc.low %vm684, %vm684
  %vm701 = vmpackc.low %vm685, %vm685
  %vm702 = vmpackc.low %vm686, %vm686
  %vm703 = vmpackc.low %vm687, %vm687
  %vm704 = vmpackc.low %vm688, %vm688
  %vm705 = vmpackc.low %vm689, %vm689
  %vm706 = vmpackc.low %vm690, %vm690
  %v707 = vsel %vm691, 65537, 0
  %v708 = vsel %vm692, 65537, 0
  %v709 = vsel %vm693, 65537, 0
  %v710 = vsel %vm694, 65537, 0
  %v711 = vsel %vm695, 65537, 0
  %v712 = vsel %vm696, 65537, 0
  %v713 = vsel %vm697, 65537, 0
  %v714 = vsel %vm698, 65537, 0
  %v715 = vsel %vm699, 65537, 0
  %v716 = vsel %vm700, 65537, 0
  %v717 = vsel %vm701, 65537, 0
  %v718 = vsel %vm702, 65537, 0
  %v719 = vsel %vm703, 65537, 0
  %v720 = vsel %vm704, 65537, 0
  %v721 = vsel %vm705, 65537, 0
  %v722 = vsel %vm706, 65537, 0
  %v723 = vunpack.c.l.b16 %v707
  %v724 = vunpack.c.l.b16 %v708
  %v725 = vunpack.c.l.b16 %v709
  %v726 = vunpack.c.l.b16 %v710
  %v727 = vunpack.c.l.b16 %v711
  %v728 = vunpack.c.l.b16 %v712
  %v729 = vunpack.c.l.b16 %v713
  %v730 = vunpack.c.l.b16 %v714
  %v731 = vunpack.c.l.b16 %v715
  %v732 = vunpack.c.l.b16 %v716
  %v733 = vunpack.c.l.b16 %v717
  %v734 = vunpack.c.l.b16 %v718
  %v735 = vunpack.c.l.b16 %v719
  %v736 = vunpack.c.l.b16 %v720
  %v737 = vunpack.c.l.b16 %v721
  %v738 = vunpack.c.l.b16 %v722
  %v739 = vpack.c.b16 %v724, %v723
  %v740 = vpack.c.b16 %v726, %v725
  %v741 = vpack.c.b16 %v728, %v727
  %v742 = vpack.c.b16 %v730, %v729
  %v743 = vpack.c.b16 %v732, %v731
  %v744 = vpack.c.b16 %v734, %v733
  %v745 = vpack.c.b16 %v736, %v735
  %v746 = vpack.c.b16 %v738, %v737
  %vm747 = vcmask 1040384
  %v748 = vrot.slane %v739, 7
  %v749 = vrot.slane %v740, 7
  %v750 = vsel %vm747, %v748, %v749
  %v751 = vrot.slane %v741, 7
  %v752 = vsel %vm747, %v749, %v751
  %v753 = vrot.slane %v742, 7
  %v754 = vsel %vm747, %v751, %v753
  %v755 = vrot.slane %v743, 7
  %v756 = vsel %vm747, %v753, %v755
  %v757 = vrot.slane %v744, 7
  %v758 = vsel %vm747, %v755, %v757
  %v759 = vrot.slane %v745, 7
  %v760 = vsel %vm747, %v757, %v759
  %v761 = vrot.slane %v746, 7
  %v762 = vsel %vm747, %v759, %v761
  %vm763 = vcmp.ne.s16.totalorder %v748, 0
  %vm764 = vcmp.ne.s16.totalorder %v750, 0
  %vm765 = vcmp.ne.s16.totalorder %v752, 0
  %vm766 = vcmp.ne.s16.totalorder %v754, 0
  %vm767 = vcmp.ne.s16.totalorder %v756, 0
  %vm768 = vcmp.ne.s16.totalorder %v758, 0
  %vm769 = vcmp.ne.s16.totalorder %v760, 0
  %vm770 = vcmp.ne.s16.totalorder %v762, 0
  %vm771 = vcmp.ne.s16.totalorder %v761, 0
  %v772 = vsel %vm763, 0, %v351
  %v773 = vsel %vm764, 0, %v285
  %v774 = vsel %vm765, 0, %v294
  %v775 = vsel %vm766, 0, %v303
  %v776 = vsel %vm767, 0, %v312
  %v777 = vsel %vm768, 0, %v321
  %v778 = vsel %vm769, 0, %v330
  %v779 = vsel %vm770, 0, %v339
  %v780 = vsel %vm771, 0, %v352
  %v781 = vsel %vm236, 1, 0
  %v782 = vsel %vm237, 1, 0
  %v783 = vsel %vm238, 1, 0
  %v784 = vsel %vm239, 1, 0
  %v785 = vsel %vm240, 1, 0
  %v786 = vsel %vm241, 1, 0
  %v787 = vsel %vm242, 1, 0
  %v788 = vsel %vm243, 1, 0
  %v789 = vsel %vm244, 1, 0
  %v790 = vsel %vm245, 1, 0
  %v791 = vsel %vm246, 1, 0
  %v792 = vsel %vm247, 1, 0
  %v793 = vsel %vm248, 1, 0
  %v794 = vsel %vm249, 1, 0
  %v795 = vsel %vm250, 1, 0
  %v796 = vsel %vm251, 1, 0
  %vm797 = vcmp.eq.s32.totalorder %v781, 1
  %vm798 = vcmp.eq.s32.totalorder %v782, 1
  %vm799 = vcmp.eq.s32.totalorder %v783, 1
  %vm800 = vcmp.eq.s32.totalorder %v784, 1
  %vm801 = vcmp.eq.s32.totalorder %v785, 1
  %vm802 = vcmp.eq.s32.totalorder %v786, 1
  %vm803 = vcmp.eq.s32.totalorder %v787, 1
  %vm804 = vcmp.eq.s32.totalorder %v788, 1
  %vm805 = vcmp.eq.s32.totalorder %v789, 1
  %vm806 = vcmp.eq.s32.totalorder %v790, 1
  %vm807 = vcmp.eq.s32.totalorder %v791, 1
  %vm808 = vcmp.eq.s32.totalorder %v792, 1
  %vm809 = vcmp.eq.s32.totalorder %v793, 1
  %vm810 = vcmp.eq.s32.totalorder %v794, 1
  %vm811 = vcmp.eq.s32.totalorder %v795, 1
  %vm812 = vcmp.eq.s32.totalorder %v796, 1
  %vm813 = vmpackc.low %vm797, %vm797
  %vm814 = vmpackc.low %vm798, %vm798
  %vm815 = vmpackc.low %vm799, %vm799
  %vm816 = vmpackc.low %vm800, %vm800
  %vm817 = vmpackc.low %vm801, %vm801
  %vm818 = vmpackc.low %vm802, %vm802
  %vm819 = vmpackc.low %vm803, %vm803
  %vm820 = vmpackc.low %vm804, %vm804
  %vm821 = vmpackc.low %vm805, %vm805
  %vm822 = vmpackc.low %vm806, %vm806
  %vm823 = vmpackc.low %vm807, %vm807
  %vm824 = vmpackc.low %vm808, %vm808
  %vm825 = vmpackc.low %vm809, %vm809
  %vm826 = vmpackc.low %vm810, %vm810
  %vm827 = vmpackc.low %vm811, %vm811
  %vm828 = vmpackc.low %vm812, %vm812
  %v829 = vsel %vm813, 65537, 0
  %v830 = vsel %vm814, 65537, 0
  %v831 = vsel %vm815, 65537, 0
  %v832 = vsel %vm816, 65537, 0
  %v833 = vsel %vm817, 65537, 0
  %v834 = vsel %vm818, 65537, 0
  %v835 = vsel %vm819, 65537, 0
  %v836 = vsel %vm820, 65537, 0
  %v837 = vsel %vm821, 65537, 0
  %v838 = vsel %vm822, 65537, 0
  %v839 = vsel %vm823, 65537, 0
  %v840 = vsel %vm824, 65537, 0
  %v841 = vsel %vm825, 65537, 0
  %v842 = vsel %vm826, 65537, 0
  %v843 = vsel %vm827, 65537, 0
  %v844 = vsel %vm828, 65537, 0
  %v845 = vunpack.c.l.b16 %v829
  %v846 = vunpack.c.l.b16 %v830
  %v847 = vunpack.c.l.b16 %v831
  %v848 = vunpack.c.l.b16 %v832
  %v849 = vunpack.c.l.b16 %v833
  %v850 = vunpack.c.l.b16 %v834
  %v851 = vunpack.c.l.b16 %v835
  %v852 = vunpack.c.l.b16 %v836
  %v853 = vunpack.c.l.b16 %v837
  %v854 = vunpack.c.l.b16 %v838
  %v855 = vunpack.c.l.b16 %v839
  %v856 = vunpack.c.l.b16 %v840
  %v857 = vunpack.c.l.b16 %v841
  %v858 = vunpack.c.l.b16 %v842
  %v859 = vunpack.c.l.b16 %v843
  %v860 = vunpack.c.l.b16 %v844
  %v861 = vpack.c.b16 %v845, %v845
  %v862 = vpack.c.b16 %v847, %v846
  %v863 = vpack.c.b16 %v849, %v848
  %v864 = vpack.c.b16 %v851, %v850
  %v865 = vpack.c.b16 %v853, %v852
  %v866 = vpack.c.b16 %v855, %v854
  %v867 = vpack.c.b16 %v857, %v856
  %v868 = vpack.c.b16 %v859, %v858
  %v869 = vpack.c.b16 %v860, %v860
  %vm870 = vcmp.ne.s16.totalorder %v861, 0
  %vm871 = vcmp.ne.s16.totalorder %v862, 0
  %vm872 = vcmp.ne.s16.totalorder %v863, 0
  %vm873 = vcmp.ne.s16.totalorder %v864, 0
  %vm874 = vcmp.ne.s16.totalorder %v865, 0
  %vm875 = vcmp.ne.s16.totalorder %v866, 0
  %vm876 = vcmp.ne.s16.totalorder %v867, 0
  %vm877 = vcmp.ne.s16.totalorder %v868, 0
  %vm878 = vcmp.ne.s16.totalorder %v869, 0
  %v879 = vsel %vm870, 0, %v351
  %v880 = vsel %vm871, 0, %v285
  %v881 = vsel %vm872, 0, %v294
  %v882 = vsel %vm873, 0, %v303
  %v883 = vsel %vm874, 0, %v312
  %v884 = vsel %vm875, 0, %v321
  %v885 = vsel %vm876, 0, %v330
  %v886 = vsel %vm877, 0, %v339
  %v887 = vsel %vm878, 0, %v352
  %v888 = vsel %vm252, 1, 0
  %v889 = vsel %vm253, 1, 0
  %v890 = vsel %vm254, 1, 0
  %v891 = vsel %vm255, 1, 0
  %v892 = vsel %vm256, 1, 0
  %v893 = vsel %vm257, 1, 0
  %v894 = vsel %vm258, 1, 0
  %v895 = vsel %vm259, 1, 0
  %v896 = vsel %vm260, 1, 0
  %v897 = vsel %vm261, 1, 0
  %v898 = vsel %vm262, 1, 0
  %v899 = vsel %vm263, 1, 0
  %v900 = vsel %vm264, 1, 0
  %v901 = vsel %vm265, 1, 0
  %v902 = vsel %vm266, 1, 0
  %v903 = vsel %vm267, 1, 0
  %vm904 = vcmp.eq.s32.totalorder %v888, 1
  %vm905 = vcmp.eq.s32.totalorder %v889, 1
  %vm906 = vcmp.eq.s32.totalorder %v890, 1
  %vm907 = vcmp.eq.s32.totalorder %v891, 1
  %vm908 = vcmp.eq.s32.totalorder %v892, 1
  %vm909 = vcmp.eq.s32.totalorder %v893, 1
  %vm910 = vcmp.eq.s32.totalorder %v894, 1
  %vm911 = vcmp.eq.s32.totalorder %v895, 1
  %vm912 = vcmp.eq.s32.totalorder %v896, 1
  %vm913 = vcmp.eq.s32.totalorder %v897, 1
  %vm914 = vcmp.eq.s32.totalorder %v898, 1
  %vm915 = vcmp.eq.s32.totalorder %v899, 1
  %vm916 = vcmp.eq.s32.totalorder %v900, 1
  %vm917 = vcmp.eq.s32.totalorder %v901, 1
  %vm918 = vcmp.eq.s32.totalorder %v902, 1
  %vm919 = vcmp.eq.s32.totalorder %v903, 1
  %vm920 = vmpackc.low %vm904, %vm904
  %vm921 = vmpackc.low %vm905, %vm905
  %vm922 = vmpackc.low %vm906, %vm906
  %vm923 = vmpackc.low %vm907, %vm907
  %vm924 = vmpackc.low %vm908, %vm908
  %vm925 = vmpackc.low %vm909, %vm909
  %vm926 = vmpackc.low %vm910, %vm910
  %vm927 = vmpackc.low %vm911, %vm911
  %vm928 = vmpackc.low %vm912, %vm912
  %vm929 = vmpackc.low %vm913, %vm913
  %vm930 = vmpackc.low %vm914, %vm914
  %vm931 = vmpackc.low %vm915, %vm915
  %vm932 = vmpackc.low %vm916, %vm916
  %vm933 = vmpackc.low %vm917, %vm917
  %vm934 = vmpackc.low %vm918, %vm918
  %vm935 = vmpackc.low %vm919, %vm919
  %v936 = vsel %vm920, 65537, 0
  %v937 = vsel %vm921, 65537, 0
  %v938 = vsel %vm922, 65537, 0
  %v939 = vsel %vm923, 65537, 0
  %v940 = vsel %vm924, 65537, 0
  %v941 = vsel %vm925, 65537, 0
  %v942 = vsel %vm926, 65537, 0
  %v943 = vsel %vm927, 65537, 0
  %v944 = vsel %vm928, 65537, 0
  %v945 = vsel %vm929, 65537, 0
  %v946 = vsel %vm930, 65537, 0
  %v947 = vsel %vm931, 65537, 0
  %v948 = vsel %vm932, 65537, 0
  %v949 = vsel %vm933, 65537, 0
  %v950 = vsel %vm934, 65537, 0
  %v951 = vsel %vm935, 65537, 0
  %v952 = vunpack.c.l.b16 %v936
  %v953 = vunpack.c.l.b16 %v937
  %v954 = vunpack.c.l.b16 %v938
  %v955 = vunpack.c.l.b16 %v939
  %v956 = vunpack.c.l.b16 %v940
  %v957 = vunpack.c.l.b16 %v941
  %v958 = vunpack.c.l.b16 %v942
  %v959 = vunpack.c.l.b16 %v943
  %v960 = vunpack.c.l.b16 %v944
  %v961 = vunpack.c.l.b16 %v945
  %v962 = vunpack.c.l.b16 %v946
  %v963 = vunpack.c.l.b16 %v947
  %v964 = vunpack.c.l.b16 %v948
  %v965 = vunpack.c.l.b16 %v949
  %v966 = vunpack.c.l.b16 %v950
  %v967 = vunpack.c.l.b16 %v951
  %v968 = vpack.c.b16 %v953, %v952
  %v969 = vpack.c.b16 %v955, %v954
  %v970 = vpack.c.b16 %v957, %v956
  %v971 = vpack.c.b16 %v959, %v958
  %v972 = vpack.c.b16 %v961, %v960
  %v973 = vpack.c.b16 %v963, %v962
  %v974 = vpack.c.b16 %v965, %v964
  %v975 = vpack.c.b16 %v967, %v966
  %v976 = vrot.slane %v968, 3
  %v977 = vrot.slane %v969, 3
  %v978 = vsel %vm349, %v976, %v977
  %v979 = vrot.slane %v970, 3
  %v980 = vsel %vm349, %v977, %v979
  %v981 = vrot.slane %v971, 3
  %v982 = vsel %vm349, %v979, %v981
  %v983 = vrot.slane %v972, 3
  %v984 = vsel %vm349, %v981, %v983
  %v985 = vrot.slane %v973, 3
  %v986 = vsel %vm349, %v983, %v985
  %v987 = vrot.slane %v974, 3
  %v988 = vsel %vm349, %v985, %v987
  %v989 = vrot.slane %v975, 3
  %v990 = vsel %vm349, %v987, %v989
  %vm991 = vcmp.ne.s16.totalorder %v976, 0
  %vm992 = vcmp.ne.s16.totalorder %v978, 0
  %vm993 = vcmp.ne.s16.totalorder %v980, 0
  %vm994 = vcmp.ne.s16.totalorder %v982, 0
  %vm995 = vcmp.ne.s16.totalorder %v984, 0
  %vm996 = vcmp.ne.s16.totalorder %v986, 0
  %vm997 = vcmp.ne.s16.totalorder %v988, 0
  %vm998 = vcmp.ne.s16.totalorder %v990, 0
  %vm999 = vcmp.ne.s16.totalorder %v989, 0
  %v1000 = vsel %vm991, 0, %v351
  %v1001 = vsel %vm992, 0, %v285
  %v1002 = vsel %vm993, 0, %v294
  %v1003 = vsel %vm994, 0, %v303
  %v1004 = vsel %vm995, 0, %v312
  %v1005 = vsel %vm996, 0, %v321
  %v1006 = vsel %vm997, 0, %v330
  %v1007 = vsel %vm998, 0, %v339
  %v1008 = vsel %vm999, 0, %v352
  %vm1009 = vmor %vm220, %vm236
  %vm1010 = vmor %vm221, %vm237
  %vm1011 = vmor %vm222, %vm238
  %vm1012 = vmor %vm223, %vm239
  %vm1013 = vmor %vm224, %vm240
  %vm1014 = vmor %vm225, %vm241
  %vm1015 = vmor %vm226, %vm242
  %vm1016 = vmor %vm227, %vm243
  %vm1017 = vmor %vm228, %vm244
  %vm1018 = vmor %vm229, %vm245
  %vm1019 = vmor %vm230, %vm246
  %vm1020 = vmor %vm231, %vm247
  %vm1021 = vmor %vm232, %vm248
  %vm1022 = vmor %vm233, %vm249
  %vm1023 = vmor %vm234, %vm250
  %vm1024 = vmor %vm235, %vm251
  %v1025 = vsel %vm1009, 1, 0
  %v1026 = vsel %vm1010, 1, 0
  %v1027 = vsel %vm1011, 1, 0
  %v1028 = vsel %vm1012, 1, 0
  %v1029 = vsel %vm1013, 1, 0
  %v1030 = vsel %vm1014, 1, 0
  %v1031 = vsel %vm1015, 1, 0
  %v1032 = vsel %vm1016, 1, 0
  %v1033 = vsel %vm1017, 1, 0
  %v1034 = vsel %vm1018, 1, 0
  %v1035 = vsel %vm1019, 1, 0
  %v1036 = vsel %vm1020, 1, 0
  %v1037 = vsel %vm1021, 1, 0
  %v1038 = vsel %vm1022, 1, 0
  %v1039 = vsel %vm1023, 1, 0
  %v1040 = vsel %vm1024, 1, 0
  %vm1041 = vcmp.eq.s32.totalorder %v1025, 1
  %vm1042 = vcmp.eq.s32.totalorder %v1026, 1
  %vm1043 = vcmp.eq.s32.totalorder %v1027, 1
  %vm1044 = vcmp.eq.s32.totalorder %v1028, 1
  %vm1045 = vcmp.eq.s32.totalorder %v1029, 1
  %vm1046 = vcmp.eq.s32.totalorder %v1030, 1
  %vm1047 = vcmp.eq.s32.totalorder %v1031, 1
  %vm1048 = vcmp.eq.s32.totalorder %v1032, 1
  %vm1049 = vcmp.eq.s32.totalorder %v1033, 1
  %vm1050 = vcmp.eq.s32.totalorder %v1034, 1
  %vm1051 = vcmp.eq.s32.totalorder %v1035, 1
  %vm1052 = vcmp.eq.s32.totalorder %v1036, 1
  %vm1053 = vcmp.eq.s32.totalorder %v1037, 1
  %vm1054 = vcmp.eq.s32.totalorder %v1038, 1
  %vm1055 = vcmp.eq.s32.totalorder %v1039, 1
  %vm1056 = vcmp.eq.s32.totalorder %v1040, 1
  %vm1057 = vmpackc.low %vm1041, %vm1041
  %vm1058 = vmpackc.low %vm1042, %vm1042
  %vm1059 = vmpackc.low %vm1043, %vm1043
  %vm1060 = vmpackc.low %vm1044, %vm1044
  %vm1061 = vmpackc.low %vm1045, %vm1045
  %vm1062 = vmpackc.low %vm1046, %vm1046
  %vm1063 = vmpackc.low %vm1047, %vm1047
  %vm1064 = vmpackc.low %vm1048, %vm1048
  %vm1065 = vmpackc.low %vm1049, %vm1049
  %vm1066 = vmpackc.low %vm1050, %vm1050
  %vm1067 = vmpackc.low %vm1051, %vm1051
  %vm1068 = vmpackc.low %vm1052, %vm1052
  %vm1069 = vmpackc.low %vm1053, %vm1053
  %vm1070 = vmpackc.low %vm1054, %vm1054
  %vm1071 = vmpackc.low %vm1055, %vm1055
  %vm1072 = vmpackc.low %vm1056, %vm1056
  %v1073 = vsel %vm1057, 65537, 0
  %v1074 = vsel %vm1058, 65537, 0
  %v1075 = vsel %vm1059, 65537, 0
  %v1076 = vsel %vm1060, 65537, 0
  %v1077 = vsel %vm1061, 65537, 0
  %v1078 = vsel %vm1062, 65537, 0
  %v1079 = vsel %vm1063, 65537, 0
  %v1080 = vsel %vm1064, 65537, 0
  %v1081 = vsel %vm1065, 65537, 0
  %v1082 = vsel %vm1066, 65537, 0
  %v1083 = vsel %vm1067, 65537, 0
  %v1084 = vsel %vm1068, 65537, 0
  %v1085 = vsel %vm1069, 65537, 0
  %v1086 = vsel %vm1070, 65537, 0
  %v1087 = vsel %vm1071, 65537, 0
  %v1088 = vsel %vm1072, 65537, 0
  %v1089 = vunpack.c.l.b16 %v1073
  %v1090 = vunpack.c.l.b16 %v1074
  %v1091 = vunpack.c.l.b16 %v1075
  %v1092 = vunpack.c.l.b16 %v1076
  %v1093 = vunpack.c.l.b16 %v1077
  %v1094 = vunpack.c.l.b16 %v1078
  %v1095 = vunpack.c.l.b16 %v1079
  %v1096 = vunpack.c.l.b16 %v1080
  %v1097 = vunpack.c.l.b16 %v1081
  %v1098 = vunpack.c.l.b16 %v1082
  %v1099 = vunpack.c.l.b16 %v1083
  %v1100 = vunpack.c.l.b16 %v1084
  %v1101 = vunpack.c.l.b16 %v1085
  %v1102 = vunpack.c.l.b16 %v1086
  %v1103 = vunpack.c.l.b16 %v1087
  %v1104 = vunpack.c.l.b16 %v1088
  %v1105 = vpack.c.b16 %v1090, %v1089
  %v1106 = vpack.c.b16 %v1092, %v1091
  %v1107 = vpack.c.b16 %v1094, %v1093
  %v1108 = vpack.c.b16 %v1096, %v1095
  %v1109 = vpack.c.b16 %v1098, %v1097
  %v1110 = vpack.c.b16 %v1100, %v1099
  %v1111 = vpack.c.b16 %v1102, %v1101
  %v1112 = vpack.c.b16 %v1104, %v1103
  %vm1113 = vcmp.ne.s16.totalorder %v1105, 0
  %vm1114 = vcmp.ne.s16.totalorder %v1106, 0
  %vm1115 = vcmp.ne.s16.totalorder %v1107, 0
  %vm1116 = vcmp.ne.s16.totalorder %v1108, 0
  %vm1117 = vcmp.ne.s16.totalorder %v1109, 0
  %vm1118 = vcmp.ne.s16.totalorder %v1110, 0
  %vm1119 = vcmp.ne.s16.totalorder %v1111, 0
  %vm1120 = vcmp.ne.s16.totalorder %v1112, 0
  %v1121 = vsel %vm1113, 0, %v285
  %v1122 = vsel %vm1114, 0, %v294
  %v1123 = vsel %vm1115, 0, %v303
  %v1124 = vsel %vm1116, 0, %v312
  %v1125 = vsel %vm1117, 0, %v321
  %v1126 = vsel %vm1118, 0, %v330
  %v1127 = vsel %vm1119, 0, %v339
  %v1128 = vsel %vm1120, 0, %v352
  %v1129 = vsel %vm220, 1, 0
  %v1130 = vsel %vm221, 1, 0
  %v1131 = vsel %vm222, 1, 0
  %v1132 = vsel %vm223, 1, 0
  %v1133 = vsel %vm224, 1, 0
  %v1134 = vsel %vm225, 1, 0
  %v1135 = vsel %vm226, 1, 0
  %v1136 = vsel %vm227, 1, 0
  %v1137 = vsel %vm228, 1, 0
  %v1138 = vsel %vm229, 1, 0
  %v1139 = vsel %vm230, 1, 0
  %v1140 = vsel %vm231, 1, 0
  %v1141 = vsel %vm232, 1, 0
  %v1142 = vsel %vm233, 1, 0
  %v1143 = vsel %vm234, 1, 0
  %v1144 = vsel %vm235, 1, 0
  %vm1145 = vcmp.eq.s32.totalorder %v1129, 1
  %vm1146 = vcmp.eq.s32.totalorder %v1130, 1
  %vm1147 = vcmp.eq.s32.totalorder %v1131, 1
  %vm1148 = vcmp.eq.s32.totalorder %v1132, 1
  %vm1149 = vcmp.eq.s32.totalorder %v1133, 1
  %vm1150 = vcmp.eq.s32.totalorder %v1134, 1
  %vm1151 = vcmp.eq.s32.totalorder %v1135, 1
  %vm1152 = vcmp.eq.s32.totalorder %v1136, 1
  %vm1153 = vcmp.eq.s32.totalorder %v1137, 1
  %vm1154 = vcmp.eq.s32.totalorder %v1138, 1
  %vm1155 = vcmp.eq.s32.totalorder %v1139, 1
  %vm1156 = vcmp.eq.s32.totalorder %v1140, 1
  %vm1157 = vcmp.eq.s32.totalorder %v1141, 1
  %vm1158 = vcmp.eq.s32.totalorder %v1142, 1
  %vm1159 = vcmp.eq.s32.totalorder %v1143, 1
  %vm1160 = vcmp.eq.s32.totalorder %v1144, 1
  %vm1161 = vmpackc.low %vm1145, %vm1145
  %vm1162 = vmpackc.low %vm1146, %vm1146
  %vm1163 = vmpackc.low %vm1147, %vm1147
  %vm1164 = vmpackc.low %vm1148, %vm1148
  %vm1165 = vmpackc.low %vm1149, %vm1149
  %vm1166 = vmpackc.low %vm1150, %vm1150
  %vm1167 = vmpackc.low %vm1151, %vm1151
  %vm1168 = vmpackc.low %vm1152, %vm1152
  %vm1169 = vmpackc.low %vm1153, %vm1153
  %vm1170 = vmpackc.low %vm1154, %vm1154
  %vm1171 = vmpackc.low %vm1155, %vm1155
  %vm1172 = vmpackc.low %vm1156, %vm1156
  %vm1173 = vmpackc.low %vm1157, %vm1157
  %vm1174 = vmpackc.low %vm1158, %vm1158
  %vm1175 = vmpackc.low %vm1159, %vm1159
  %vm1176 = vmpackc.low %vm1160, %vm1160
  %v1177 = vsel %vm1161, 65537, 0
  %v1178 = vsel %vm1162, 65537, 0
  %v1179 = vsel %vm1163, 65537, 0
  %v1180 = vsel %vm1164, 65537, 0
  %v1181 = vsel %vm1165, 65537, 0
  %v1182 = vsel %vm1166, 65537, 0
  %v1183 = vsel %vm1167, 65537, 0
  %v1184 = vsel %vm1168, 65537, 0
  %v1185 = vsel %vm1169, 65537, 0
  %v1186 = vsel %vm1170, 65537, 0
  %v1187 = vsel %vm1171, 65537, 0
  %v1188 = vsel %vm1172, 65537, 0
  %v1189 = vsel %vm1173, 65537, 0
  %v1190 = vsel %vm1174, 65537, 0
  %v1191 = vsel %vm1175, 65537, 0
  %v1192 = vsel %vm1176, 65537, 0
  %v1193 = vunpack.c.l.b16 %v1177
  %v1194 = vunpack.c.l.b16 %v1178
  %v1195 = vunpack.c.l.b16 %v1179
  %v1196 = vunpack.c.l.b16 %v1180
  %v1197 = vunpack.c.l.b16 %v1181
  %v1198 = vunpack.c.l.b16 %v1182
  %v1199 = vunpack.c.l.b16 %v1183
  %v1200 = vunpack.c.l.b16 %v1184
  %v1201 = vunpack.c.l.b16 %v1185
  %v1202 = vunpack.c.l.b16 %v1186
  %v1203 = vunpack.c.l.b16 %v1187
  %v1204 = vunpack.c.l.b16 %v1188
  %v1205 = vunpack.c.l.b16 %v1189
  %v1206 = vunpack.c.l.b16 %v1190
  %v1207 = vunpack.c.l.b16 %v1191
  %v1208 = vunpack.c.l.b16 %v1192
  %v1209 = vpack.c.b16 %v1194, %v1193
  %v1210 = vpack.c.b16 %v1196, %v1195
  %v1211 = vpack.c.b16 %v1198, %v1197
  %v1212 = vpack.c.b16 %v1200, %v1199
  %v1213 = vpack.c.b16 %v1202, %v1201
  %v1214 = vpack.c.b16 %v1204, %v1203
  %v1215 = vpack.c.b16 %v1206, %v1205
  %v1216 = vpack.c.b16 %v1208, %v1207
  %v1218 = vshrl.u32 %v1209, 16
  %v1220 = vrot.slane %v1218, 7
  %v1221 = vshll.u32 %v1209, 16
  %v1223 = vor.u32 %v1220, %v1221
  %v1225 = vshrl.u32 %v1210, 16
  %v1227 = vrot.slane %v1225, 7
  %v1228 = vshll.u32 %v1210, 16
  %v1230 = vor.u32 %v1227, %v1228
  %v1231 = vsel %vm561, %v1220, %v1230
  %v1233 = vshrl.u32 %v1211, 16
  %v1235 = vrot.slane %v1233, 7
  %v1236 = vshll.u32 %v1211, 16
  %v1238 = vor.u32 %v1235, %v1236
  %v1239 = vsel %vm561, %v1227, %v1238
  %v1241 = vshrl.u32 %v1212, 16
  %v1243 = vrot.slane %v1241, 7
  %v1244 = vshll.u32 %v1212, 16
  %v1246 = vor.u32 %v1243, %v1244
  %v1247 = vsel %vm561, %v1235, %v1246
  %v1249 = vshrl.u32 %v1213, 16
  %v1251 = vrot.slane %v1249, 7
  %v1252 = vshll.u32 %v1213, 16
  %v1254 = vor.u32 %v1251, %v1252
  %v1255 = vsel %vm561, %v1243, %v1254
  %v1257 = vshrl.u32 %v1214, 16
  %v1259 = vrot.slane %v1257, 7
  %v1260 = vshll.u32 %v1214, 16
  %v1262 = vor.u32 %v1259, %v1260
  %v1263 = vsel %vm561, %v1251, %v1262
  %v1265 = vshrl.u32 %v1215, 16
  %v1267 = vrot.slane %v1265, 7
  %v1268 = vshll.u32 %v1215, 16
  %v1270 = vor.u32 %v1267, %v1268
  %v1271 = vsel %vm561, %v1259, %v1270
  %v1273 = vshrl.u32 %v1216, 16
  %v1275 = vrot.slane %v1273, 7
  %v1276 = vshll.u32 %v1216, 16
  %v1278 = vor.u32 %v1275, %v1276
  %v1279 = vsel %vm561, %v1267, %v1278
  %vm1280 = vcmp.ne.s16.totalorder %v1223, 0
  %vm1281 = vcmp.ne.s16.totalorder %v1231, 0
  %vm1282 = vcmp.ne.s16.totalorder %v1239, 0
  %vm1283 = vcmp.ne.s16.totalorder %v1247, 0
  %vm1284 = vcmp.ne.s16.totalorder %v1255, 0
  %vm1285 = vcmp.ne.s16.totalorder %v1263, 0
  %vm1286 = vcmp.ne.s16.totalorder %v1271, 0
  %vm1287 = vcmp.ne.s16.totalorder %v1279, 0
  %v1288 = vsel %vm1280, 0, %v285
  %v1289 = vsel %vm1281, 0, %v294
  %v1290 = vsel %vm1282, 0, %v303
  %v1291 = vsel %vm1283, 0, %v312
  %v1292 = vsel %vm1284, 0, %v321
  %v1293 = vsel %vm1285, 0, %v330
  %v1294 = vsel %vm1286, 0, %v339
  %v1295 = vsel %vm1287, 0, %v352
  %vm1296 = vmor %vm220, %vm252
  %vm1297 = vmor %vm221, %vm253
  %vm1298 = vmor %vm222, %vm254
  %vm1299 = vmor %vm223, %vm255
  %vm1300 = vmor %vm224, %vm256
  %vm1301 = vmor %vm225, %vm257
  %vm1302 = vmor %vm226, %vm258
  %vm1303 = vmor %vm227, %vm259
  %vm1304 = vmor %vm228, %vm260
  %vm1305 = vmor %vm229, %vm261
  %vm1306 = vmor %vm230, %vm262
  %vm1307 = vmor %vm231, %vm263
  %vm1308 = vmor %vm232, %vm264
  %vm1309 = vmor %vm233, %vm265
  %vm1310 = vmor %vm234, %vm266
  %vm1311 = vmor %vm235, %vm267
  %v1312 = vsel %vm1296, 1, 0
  %v1313 = vsel %vm1297, 1, 0
  %v1314 = vsel %vm1298, 1, 0
  %v1315 = vsel %vm1299, 1, 0
  %v1316 = vsel %vm1300, 1, 0
  %v1317 = vsel %vm1301, 1, 0
  %v1318 = vsel %vm1302, 1, 0
  %v1319 = vsel %vm1303, 1, 0
  %v1320 = vsel %vm1304, 1, 0
  %v1321 = vsel %vm1305, 1, 0
  %v1322 = vsel %vm1306, 1, 0
  %v1323 = vsel %vm1307, 1, 0
  %v1324 = vsel %vm1308, 1, 0
  %v1325 = vsel %vm1309, 1, 0
  %v1326 = vsel %vm1310, 1, 0
  %v1327 = vsel %vm1311, 1, 0
  %vm1328 = vcmp.eq.s32.totalorder %v1312, 1
  %vm1329 = vcmp.eq.s32.totalorder %v1313, 1
  %vm1330 = vcmp.eq.s32.totalorder %v1314, 1
  %vm1331 = vcmp.eq.s32.totalorder %v1315, 1
  %vm1332 = vcmp.eq.s32.totalorder %v1316, 1
  %vm1333 = vcmp.eq.s32.totalorder %v1317, 1
  %vm1334 = vcmp.eq.s32.totalorder %v1318, 1
  %vm1335 = vcmp.eq.s32.totalorder %v1319, 1
  %vm1336 = vcmp.eq.s32.totalorder %v1320, 1
  %vm1337 = vcmp.eq.s32.totalorder %v1321, 1
  %vm1338 = vcmp.eq.s32.totalorder %v1322, 1
  %vm1339 = vcmp.eq.s32.totalorder %v1323, 1
  %vm1340 = vcmp.eq.s32.totalorder %v1324, 1
  %vm1341 = vcmp.eq.s32.totalorder %v1325, 1
  %vm1342 = vcmp.eq.s32.totalorder %v1326, 1
  %vm1343 = vcmp.eq.s32.totalorder %v1327, 1
  %vm1344 = vmpackc.low %vm1328, %vm1328
  %vm1345 = vmpackc.low %vm1329, %vm1329
  %vm1346 = vmpackc.low %vm1330, %vm1330
  %vm1347 = vmpackc.low %vm1331, %vm1331
  %vm1348 = vmpackc.low %vm1332, %vm1332
  %vm1349 = vmpackc.low %vm1333, %vm1333
  %vm1350 = vmpackc.low %vm1334, %vm1334
  %vm1351 = vmpackc.low %vm1335, %vm1335
  %vm1352 = vmpackc.low %vm1336, %vm1336
  %vm1353 = vmpackc.low %vm1337, %vm1337
  %vm1354 = vmpackc.low %vm1338, %vm1338
  %vm1355 = vmpackc.low %vm1339, %vm1339
  %vm1356 = vmpackc.low %vm1340, %vm1340
  %vm1357 = vmpackc.low %vm1341, %vm1341
  %vm1358 = vmpackc.low %vm1342, %vm1342
  %vm1359 = vmpackc.low %vm1343, %vm1343
  %v1360 = vsel %vm1344, 65537, 0
  %v1361 = vsel %vm1345, 65537, 0
  %v1362 = vsel %vm1346, 65537, 0
  %v1363 = vsel %vm1347, 65537, 0
  %v1364 = vsel %vm1348, 65537, 0
  %v1365 = vsel %vm1349, 65537, 0
  %v1366 = vsel %vm1350, 65537, 0
  %v1367 = vsel %vm1351, 65537, 0
  %v1368 = vsel %vm1352, 65537, 0
  %v1369 = vsel %vm1353, 65537, 0
  %v1370 = vsel %vm1354, 65537, 0
  %v1371 = vsel %vm1355, 65537, 0
  %v1372 = vsel %vm1356, 65537, 0
  %v1373 = vsel %vm1357, 65537, 0
  %v1374 = vsel %vm1358, 65537, 0
  %v1375 = vsel %vm1359, 65537, 0
  %v1376 = vunpack.c.l.b16 %v1360
  %v1377 = vunpack.c.l.b16 %v1361
  %v1378 = vunpack.c.l.b16 %v1362
  %v1379 = vunpack.c.l.b16 %v1363
  %v1380 = vunpack.c.l.b16 %v1364
  %v1381 = vunpack.c.l.b16 %v1365
  %v1382 = vunpack.c.l.b16 %v1366
  %v1383 = vunpack.c.l.b16 %v1367
  %v1384 = vunpack.c.l.b16 %v1368
  %v1385 = vunpack.c.l.b16 %v1369
  %v1386 = vunpack.c.l.b16 %v1370
  %v1387 = vunpack.c.l.b16 %v1371
  %v1388 = vunpack.c.l.b16 %v1372
  %v1389 = vunpack.c.l.b16 %v1373
  %v1390 = vunpack.c.l.b16 %v1374
  %v1391 = vunpack.c.l.b16 %v1375
  %v1392 = vpack.c.b16 %v1377, %v1376
  %v1393 = vpack.c.b16 %v1379, %v1378
  %v1394 = vpack.c.b16 %v1381, %v1380
  %v1395 = vpack.c.b16 %v1383, %v1382
  %v1396 = vpack.c.b16 %v1385, %v1384
  %v1397 = vpack.c.b16 %v1387, %v1386
  %v1398 = vpack.c.b16 %v1389, %v1388
  %v1399 = vpack.c.b16 %v1391, %v1390
  %v1400 = vrot.slane %v1392, 7
  %v1401 = vrot.slane %v1393, 7
  %v1402 = vsel %vm747, %v1400, %v1401
  %v1403 = vrot.slane %v1394, 7
  %v1404 = vsel %vm747, %v1401, %v1403
  %v1405 = vrot.slane %v1395, 7
  %v1406 = vsel %vm747, %v1403, %v1405
  %v1407 = vrot.slane %v1396, 7
  %v1408 = vsel %vm747, %v1405, %v1407
  %v1409 = vrot.slane %v1397, 7
  %v1410 = vsel %vm747, %v1407, %v1409
  %v1411 = vrot.slane %v1398, 7
  %v1412 = vsel %vm747, %v1409, %v1411
  %v1413 = vrot.slane %v1399, 7
  %v1414 = vsel %vm747, %v1411, %v1413
  %vm1415 = vcmp.ne.s16.totalorder %v1400, 0
  %vm1416 = vcmp.ne.s16.totalorder %v1402, 0
  %vm1417 = vcmp.ne.s16.totalorder %v1404, 0
  %vm1418 = vcmp.ne.s16.totalorder %v1406, 0
  %vm1419 = vcmp.ne.s16.totalorder %v1408, 0
  %vm1420 = vcmp.ne.s16.totalorder %v1410, 0
  %vm1421 = vcmp.ne.s16.totalorder %v1412, 0
  %vm1422 = vcmp.ne.s16.totalorder %v1414, 0
  %v1423 = vsel %vm1415, 0, %v285
  %v1424 = vsel %vm1416, 0, %v294
  %v1425 = vsel %vm1417, 0, %v303
  %v1426 = vsel %vm1418, 0, %v312
  %v1427 = vsel %vm1419, 0, %v321
  %v1428 = vsel %vm1420, 0, %v330
  %v1429 = vsel %vm1421, 0, %v339
  %v1430 = vsel %vm1422, 0, %v352
  %vm1431 = vsmask.f32 7424
  %v1433 = vshrl.u32 %v634, 16
  %v1435 = vshll.u32 %v634, 16
  %v1437 = vrot.slane %v1435, 1
  %v1438 = vor.u32 %v1433, %v1437
  %v1440 = vshll.u32 %v635, 16
  %v1442 = vrot.slane %v1440, 1
  %v1443 = vsel %vm1431, %v1438, %v1442
  %v1444 = vshrl.u32 %v635, 16
  %v1446 = vor.u32 %v1444, %v1442
  %v1448 = vshll.u32 %v636, 16
  %v1450 = vrot.slane %v1448, 1
  %v1451 = vsel %vm1431, %v1446, %v1450
  %v1452 = vshrl.u32 %v636, 16
  %v1454 = vor.u32 %v1452, %v1450
  %v1456 = vshll.u32 %v637, 16
  %v1458 = vrot.slane %v1456, 1
  %v1459 = vsel %vm1431, %v1454, %v1458
  %v1460 = vshrl.u32 %v637, 16
  %v1462 = vor.u32 %v1460, %v1458
  %v1464 = vshll.u32 %v638, 16
  %v1466 = vrot.slane %v1464, 1
  %v1467 = vsel %vm1431, %v1462, %v1466
  %v1468 = vshrl.u32 %v638, 16
  %v1470 = vor.u32 %v1468, %v1466
  %v1472 = vshll.u32 %v639, 16
  %v1474 = vrot.slane %v1472, 1
  %v1475 = vsel %vm1431, %v1470, %v1474
  %v1476 = vshrl.u32 %v639, 16
  %v1478 = vor.u32 %v1476, %v1474
  %v1480 = vshll.u32 %v640, 16
  %v1482 = vrot.slane %v1480, 1
  %v1483 = vsel %vm1431, %v1478, %v1482
  %v1484 = vshrl.u32 %v640, 16
  %v1486 = vor.u32 %v1484, %v1482
  %v1488 = vshll.u32 %v641, 16
  %v1490 = vrot.slane %v1488, 1
  %v1491 = vsel %vm1431, %v1486, %v1490
  %v1492 = vshrl.u32 %v641, 16
  %v1494 = vor.u32 %v1492, %v1490
  %v1496 = vshll.u32 %v642, 16
  %v1498 = vrot.slane %v1496, 1
  %v1499 = vsel %vm1431, %v1494, %v1498
  %1500 = vrot.lane.b32.xlu0 %v1443, 4
  %v1501 = vpop.permute.xlu0 %1500
  %1502 = vrot.lane.b32.xlu0 %v1451, 4
  %v1503 = vpop.permute.xlu0 %1502
  %1504 = vrot.lane.b32.xlu0 %v1459, 4
  %v1505 = vpop.permute.xlu0 %1504
  %1506 = vrot.lane.b32.xlu0 %v1467, 4
  %v1507 = vpop.permute.xlu0 %1506
  %1508 = vrot.lane.b32.xlu0 %v1475, 4
  %v1509 = vpop.permute.xlu0 %1508
  %1510 = vrot.lane.b32.xlu0 %v1483, 4
  %v1511 = vpop.permute.xlu0 %1510
  %1512 = vrot.lane.b32.xlu0 %v1491, 4
  %v1513 = vpop.permute.xlu0 %1512
  %1514 = vrot.lane.b32.xlu0 %v1499, 4
  %v1515 = vpop.permute.xlu0 %1514
  %vm1525 = vcmask 1046528
  %v1526 = vrot.slane %v772, 1
  %v1527 = vrot.slane %v773, 1
  %v1528 = vsel %vm1525, %v1526, %v1527
  %v1529 = vrot.slane %v774, 1
  %v1530 = vsel %vm1525, %v1527, %v1529
  %v1531 = vrot.slane %v775, 1
  %v1532 = vsel %vm1525, %v1529, %v1531
  %v1533 = vrot.slane %v776, 1
  %v1534 = vsel %vm1525, %v1531, %v1533
  %v1535 = vrot.slane %v777, 1
  %v1536 = vsel %vm1525, %v1533, %v1535
  %v1537 = vrot.slane %v778, 1
  %v1538 = vsel %vm1525, %v1535, %v1537
  %v1539 = vrot.slane %v779, 1
  %v1540 = vsel %vm1525, %v1537, %v1539
  %v1541 = vrot.slane %v780, 1
  %v1542 = vsel %vm1525, %v1539, %v1541
  %1543 = vrot.lane.b32.xlu0 %v1528, 8
  %v1544 = vpop.permute.xlu0 %1543
  %1545 = vrot.lane.b32.xlu0 %v1530, 8
  %v1546 = vpop.permute.xlu0 %1545
  %1547 = vrot.lane.b32.xlu0 %v1532, 8
  %v1548 = vpop.permute.xlu0 %1547
  %1549 = vrot.lane.b32.xlu0 %v1534, 8
  %v1550 = vpop.permute.xlu0 %1549
  %1551 = vrot.lane.b32.xlu0 %v1536, 8
  %v1552 = vpop.permute.xlu0 %1551
  %1553 = vrot.lane.b32.xlu0 %v1538, 8
  %v1554 = vpop.permute.xlu0 %1553
  %1555 = vrot.lane.b32.xlu0 %v1540, 8
  %v1556 = vpop.permute.xlu0 %1555
  %1557 = vrot.lane.b32.xlu0 %v1542, 8
  %v1558 = vpop.permute.xlu0 %1557
  %vm1568 = vcmask 1043456
  %v1569 = vrot.slane %v879, 4
  %v1570 = vrot.slane %v880, 4
  %v1571 = vsel %vm1568, %v1569, %v1570
  %v1572 = vrot.slane %v881, 4
  %v1573 = vsel %vm1568, %v1570, %v1572
  %v1574 = vrot.slane %v882, 4
  %v1575 = vsel %vm1568, %v1572, %v1574
  %v1576 = vrot.slane %v883, 4
  %v1577 = vsel %vm1568, %v1574, %v1576
  %v1578 = vrot.slane %v884, 4
  %v1579 = vsel %vm1568, %v1576, %v1578
  %v1580 = vrot.slane %v885, 4
  %v1581 = vsel %vm1568, %v1578, %v1580
  %v1582 = vrot.slane %v886, 4
  %v1583 = vsel %vm1568, %v1580, %v1582
  %v1584 = vrot.slane %v887, 4
  %v1585 = vsel %vm1568, %v1582, %v1584
  %1586 = vrot.lane.b32.xlu0 %v1571, 12
  %v1587 = vpop.permute.xlu0 %1586
  %1588 = vrot.lane.b32.xlu0 %v1573, 12
  %v1589 = vpop.permute.xlu0 %1588
  %1590 = vrot.lane.b32.xlu0 %v1575, 12
  %v1591 = vpop.permute.xlu0 %1590
  %1592 = vrot.lane.b32.xlu0 %v1577, 12
  %v1593 = vpop.permute.xlu0 %1592
  %1594 = vrot.lane.b32.xlu0 %v1579, 12
  %v1595 = vpop.permute.xlu0 %1594
  %1596 = vrot.lane.b32.xlu0 %v1581, 12
  %v1597 = vpop.permute.xlu0 %1596
  %1598 = vrot.lane.b32.xlu0 %v1583, 12
  %v1599 = vpop.permute.xlu0 %1598
  %1600 = vrot.lane.b32.xlu0 %v1585, 12
  %v1601 = vpop.permute.xlu0 %1600
  %vm1602 = vsmask.f32 3328
  %v1604 = vshrl.u32 %v351, 16
  %v1606 = vrot.slane %v1604, 4
  %v1607 = vshll.u32 %v351, 16
  %v1609 = vrot.slane %v1607, 5
  %v1610 = vor.u32 %v1606, %v1609
  %v1612 = vshrl.u32 %v285, 16
  %v1614 = vrot.slane %v1612, 4
  %v1615 = vshll.u32 %v285, 16
  %v1617 = vrot.slane %v1615, 5
  %v1618 = vor.u32 %v1614, %v1617
  %v1619 = vsel %vm1602, %v1610, %v1618
  %v1621 = vshrl.u32 %v294, 16
  %v1623 = vrot.slane %v1621, 4
  %v1624 = vshll.u32 %v294, 16
  %v1626 = vrot.slane %v1624, 5
  %v1627 = vor.u32 %v1623, %v1626
  %v1628 = vsel %vm1602, %v1618, %v1627
  %v1630 = vshrl.u32 %v303, 16
  %v1632 = vrot.slane %v1630, 4
  %v1633 = vshll.u32 %v303, 16
  %v1635 = vrot.slane %v1633, 5
  %v1636 = vor.u32 %v1632, %v1635
  %v1637 = vsel %vm1602, %v1627, %v1636
  %v1639 = vshrl.u32 %v312, 16
  %v1641 = vrot.slane %v1639, 4
  %v1642 = vshll.u32 %v312, 16
  %v1644 = vrot.slane %v1642, 5
  %v1645 = vor.u32 %v1641, %v1644
  %v1646 = vsel %vm1602, %v1636, %v1645
  %v1648 = vshrl.u32 %v321, 16
  %v1650 = vrot.slane %v1648, 4
  %v1651 = vshll.u32 %v321, 16
  %v1653 = vrot.slane %v1651, 5
  %v1654 = vor.u32 %v1650, %v1653
  %v1655 = vsel %vm1602, %v1645, %v1654
  %v1657 = vshrl.u32 %v330, 16
  %v1659 = vrot.slane %v1657, 4
  %v1660 = vshll.u32 %v330, 16
  %v1662 = vrot.slane %v1660, 5
  %v1663 = vor.u32 %v1659, %v1662
  %v1664 = vsel %vm1602, %v1654, %v1663
  %v1666 = vshrl.u32 %v339, 16
  %v1668 = vrot.slane %v1666, 4
  %v1669 = vshll.u32 %v339, 16
  %v1671 = vrot.slane %v1669, 5
  %v1672 = vor.u32 %v1668, %v1671
  %v1673 = vsel %vm1602, %v1663, %v1672
  %v1675 = vshrl.u32 %v352, 16
  %v1677 = vrot.slane %v1675, 4
  %v1678 = vshll.u32 %v352, 16
  %v1680 = vrot.slane %v1678, 5
  %v1681 = vor.u32 %v1677, %v1680
  %v1682 = vsel %vm1602, %v1672, %v1681
  %1683 = vrot.lane.b32.xlu0 %v1619, 16
  %v1684 = vpop.permute.xlu0 %1683
  %1685 = vrot.lane.b32.xlu0 %v1628, 16
  %v1686 = vpop.permute.xlu0 %1685
  %1687 = vrot.lane.b32.xlu0 %v1637, 16
  %v1688 = vpop.permute.xlu0 %1687
  %1689 = vrot.lane.b32.xlu0 %v1646, 16
  %v1690 = vpop.permute.xlu0 %1689
  %1691 = vrot.lane.b32.xlu0 %v1655, 16
  %v1692 = vpop.permute.xlu0 %1691
  %1693 = vrot.lane.b32.xlu0 %v1664, 16
  %v1694 = vpop.permute.xlu0 %1693
  %1695 = vrot.lane.b32.xlu0 %v1673, 16
  %v1696 = vpop.permute.xlu0 %1695
  %1697 = vrot.lane.b32.xlu0 %v1682, 16
  %v1698 = vpop.permute.xlu0 %1697
  %vm1708 = vcmask 1042432
  %v1709 = vrot.slane %v1000, 5
  %v1710 = vrot.slane %v1001, 5
  %v1711 = vsel %vm1708, %v1709, %v1710
  %v1712 = vrot.slane %v1002, 5
  %v1713 = vsel %vm1708, %v1710, %v1712
  %v1714 = vrot.slane %v1003, 5
  %v1715 = vsel %vm1708, %v1712, %v1714
  %v1716 = vrot.slane %v1004, 5
  %v1717 = vsel %vm1708, %v1714, %v1716
  %v1718 = vrot.slane %v1005, 5
  %v1719 = vsel %vm1708, %v1716, %v1718
  %v1720 = vrot.slane %v1006, 5
  %v1721 = vsel %vm1708, %v1718, %v1720
  %v1722 = vrot.slane %v1007, 5
  %v1723 = vsel %vm1708, %v1720, %v1722
  %v1724 = vrot.slane %v1008, 5
  %v1725 = vsel %vm1708, %v1722, %v1724
  %1726 = vrot.lane.b32.xlu0 %v1711, 20
  %v1727 = vpop.permute.xlu0 %1726
  %1728 = vrot.lane.b32.xlu0 %v1713, 20
  %v1729 = vpop.permute.xlu0 %1728
  %1730 = vrot.lane.b32.xlu0 %v1715, 20
  %v1731 = vpop.permute.xlu0 %1730
  %1732 = vrot.lane.b32.xlu0 %v1717, 20
  %v1733 = vpop.permute.xlu0 %1732
  %1734 = vrot.lane.b32.xlu0 %v1719, 20
  %v1735 = vpop.permute.xlu0 %1734
  %1736 = vrot.lane.b32.xlu0 %v1721, 20
  %v1737 = vpop.permute.xlu0 %1736
  %1738 = vrot.lane.b32.xlu0 %v1723, 20
  %v1739 = vpop.permute.xlu0 %1738
  %1740 = vrot.lane.b32.xlu0 %v1725, 20
  %v1741 = vpop.permute.xlu0 %1740
  %1750 = vrot.lane.b32.xlu0 %v1121, 24
  %v1751 = vpop.permute.xlu0 %1750
  %1752 = vrot.lane.b32.xlu0 %v1122, 24
  %v1753 = vpop.permute.xlu0 %1752
  %1754 = vrot.lane.b32.xlu0 %v1123, 24
  %v1755 = vpop.permute.xlu0 %1754
  %1756 = vrot.lane.b32.xlu0 %v1124, 24
  %v1757 = vpop.permute.xlu0 %1756
  %1758 = vrot.lane.b32.xlu0 %v1125, 24
  %v1759 = vpop.permute.xlu0 %1758
  %1760 = vrot.lane.b32.xlu0 %v1126, 24
  %v1761 = vpop.permute.xlu0 %1760
  %1762 = vrot.lane.b32.xlu0 %v1127, 24
  %v1763 = vpop.permute.xlu0 %1762
  %1764 = vrot.lane.b32.xlu0 %v1128, 24
  %v1765 = vpop.permute.xlu0 %1764
  %v1767 = vshrl.u32 %v1288, 16
  %v1769 = vshll.u32 %v1288, 16
  %v1771 = vrot.slane %v1769, 1
  %v1772 = vor.u32 %v1767, %v1771
  %v1774 = vshll.u32 %v1289, 16
  %v1776 = vrot.slane %v1774, 1
  %v1777 = vsel %vm1431, %v1772, %v1776
  %v1778 = vshrl.u32 %v1289, 16
  %v1780 = vor.u32 %v1778, %v1776
  %v1782 = vshll.u32 %v1290, 16
  %v1784 = vrot.slane %v1782, 1
  %v1785 = vsel %vm1431, %v1780, %v1784
  %v1786 = vshrl.u32 %v1290, 16
  %v1788 = vor.u32 %v1786, %v1784
  %v1790 = vshll.u32 %v1291, 16
  %v1792 = vrot.slane %v1790, 1
  %v1793 = vsel %vm1431, %v1788, %v1792
  %v1794 = vshrl.u32 %v1291, 16
  %v1796 = vor.u32 %v1794, %v1792
  %v1798 = vshll.u32 %v1292, 16
  %v1800 = vrot.slane %v1798, 1
  %v1801 = vsel %vm1431, %v1796, %v1800
  %v1802 = vshrl.u32 %v1292, 16
  %v1804 = vor.u32 %v1802, %v1800
  %v1806 = vshll.u32 %v1293, 16
  %v1808 = vrot.slane %v1806, 1
  %v1809 = vsel %vm1431, %v1804, %v1808
  %v1810 = vshrl.u32 %v1293, 16
  %v1812 = vor.u32 %v1810, %v1808
  %v1814 = vshll.u32 %v1294, 16
  %v1816 = vrot.slane %v1814, 1
  %v1817 = vsel %vm1431, %v1812, %v1816
  %v1818 = vshrl.u32 %v1294, 16
  %v1820 = vor.u32 %v1818, %v1816
  %v1822 = vshll.u32 %v1295, 16
  %v1824 = vrot.slane %v1822, 1
  %v1825 = vsel %vm1431, %v1820, %v1824
  %v1826 = vshrl.u32 %v1295, 16
  %v1828 = vor.u32 %v1826, %v1824
  %v1830 = vshll.u32 0, 16
  %v1832 = vrot.slane %v1830, 1
  %v1833 = vsel %vm1431, %v1828, %v1832
  %1834 = vrot.lane.b32.xlu0 %v1777, 28
  %v1835 = vpop.permute.xlu0 %1834
  %1836 = vrot.lane.b32.xlu0 %v1785, 28
  %v1837 = vpop.permute.xlu0 %1836
  %1838 = vrot.lane.b32.xlu0 %v1793, 28
  %v1839 = vpop.permute.xlu0 %1838
  %1840 = vrot.lane.b32.xlu0 %v1801, 28
  %v1841 = vpop.permute.xlu0 %1840
  %1842 = vrot.lane.b32.xlu0 %v1809, 28
  %v1843 = vpop.permute.xlu0 %1842
  %1844 = vrot.lane.b32.xlu0 %v1817, 28
  %v1845 = vpop.permute.xlu0 %1844
  %1846 = vrot.lane.b32.xlu0 %v1825, 28
  %v1847 = vpop.permute.xlu0 %1846
  %1848 = vrot.lane.b32.xlu0 %v1833, 28
  %v1849 = vpop.permute.xlu0 %1848
  %v1859 = vrot.slane %v1423, 1
  %v1860 = vrot.slane %v1424, 1
  %v1861 = vsel %vm1525, %v1859, %v1860
  %v1862 = vrot.slane %v1425, 1
  %v1863 = vsel %vm1525, %v1860, %v1862
  %v1864 = vrot.slane %v1426, 1
  %v1865 = vsel %vm1525, %v1862, %v1864
  %v1866 = vrot.slane %v1427, 1
  %v1867 = vsel %vm1525, %v1864, %v1866
  %v1868 = vrot.slane %v1428, 1
  %v1869 = vsel %vm1525, %v1866, %v1868
  %v1870 = vrot.slane %v1429, 1
  %v1871 = vsel %vm1525, %v1868, %v1870
  %v1872 = vrot.slane %v1430, 1
  %v1873 = vsel %vm1525, %v1870, %v1872
  %v1874 = vrot.slane 0, 1
  %v1875 = vsel %vm1525, %v1872, %v1874
  %1876 = vrot.lane.b32.xlu0 %v1861, 32
  %v1877 = vpop.permute.xlu0 %1876
  %1878 = vrot.lane.b32.xlu0 %v1863, 32
  %v1879 = vpop.permute.xlu0 %1878
  %1880 = vrot.lane.b32.xlu0 %v1865, 32
  %v1881 = vpop.permute.xlu0 %1880
  %1882 = vrot.lane.b32.xlu0 %v1867, 32
  %v1883 = vpop.permute.xlu0 %1882
  %1884 = vrot.lane.b32.xlu0 %v1869, 32
  %v1885 = vpop.permute.xlu0 %1884
  %1886 = vrot.lane.b32.xlu0 %v1871, 32
  %v1887 = vpop.permute.xlu0 %1886
  %1888 = vrot.lane.b32.xlu0 %v1873, 32
  %v1889 = vpop.permute.xlu0 %1888
  %1890 = vrot.lane.b32.xlu0 %v1875, 32
  %v1891 = vpop.permute.xlu0 %1890
  %vm1892 = vcmask 31744
  %v1895 = vsel %vm1892, %v465, %v1501
  %v1898 = vsel %vm1892, %v466, %v1503
  %v1901 = vsel %vm1892, %v467, %v1505
  %v1904 = vsel %vm1892, %v468, %v1507
  %v1907 = vsel %vm1892, %v469, %v1509
  %v1910 = vsel %vm1892, %v470, %v1511
  %v1913 = vsel %vm1892, %v471, %v1513
  %v1916 = vsel %vm1892, %v472, %v1515
  %vm1917 = vcmask 64512
  %v1919 = vsel %vm1917, %v1895, %v1544
  %v1921 = vsel %vm1917, %v1898, %v1546
  %v1923 = vsel %vm1917, %v1901, %v1548
  %v1925 = vsel %vm1917, %v1904, %v1550
  %v1927 = vsel %vm1917, %v1907, %v1552
  %v1929 = vsel %vm1917, %v1910, %v1554
  %v1931 = vsel %vm1917, %v1913, %v1556
  %v1933 = vsel %vm1917, %v1916, %v1558
  %vm1934 = vcmask 97280
  %v1936 = vsel %vm1934, %v1919, %v1587
  %v1938 = vsel %vm1934, %v1921, %v1589
  %v1940 = vsel %vm1934, %v1923, %v1591
  %v1942 = vsel %vm1934, %v1925, %v1593
  %v1944 = vsel %vm1934, %v1927, %v1595
  %v1946 = vsel %vm1934, %v1929, %v1597
  %v1948 = vsel %vm1934, %v1931, %v1599
  %v1950 = vsel %vm1934, %v1933, %v1601
  %vm1951 = vcmask 130048
  %v1953 = vsel %vm1951, %v1936, %v1684
  %v1955 = vsel %vm1951, %v1938, %v1686
  %v1957 = vsel %vm1951, %v1940, %v1688
  %v1959 = vsel %vm1951, %v1942, %v1690
  %v1961 = vsel %vm1951, %v1944, %v1692
  %v1963 = vsel %vm1951, %v1946, %v1694
  %v1965 = vsel %vm1951, %v1948, %v1696
  %v1967 = vsel %vm1951, %v1950, %v1698
  %vm1968 = vcmask 162816
  %v1970 = vsel %vm1968, %v1953, %v1727
  %v1972 = vsel %vm1968, %v1955, %v1729
  %v1974 = vsel %vm1968, %v1957, %v1731
  %v1976 = vsel %vm1968, %v1959, %v1733
  %v1978 = vsel %vm1968, %v1961, %v1735
  %v1980 = vsel %vm1968, %v1963, %v1737
  %v1982 = vsel %vm1968, %v1965, %v1739
  %v1984 = vsel %vm1968, %v1967, %v1741
  %vm1985 = vcmask 195584
  %v1987 = vsel %vm1985, %v1970, %v1751
  %v1989 = vsel %vm1985, %v1972, %v1753
  %v1991 = vsel %vm1985, %v1974, %v1755
  %v1993 = vsel %vm1985, %v1976, %v1757
  %v1995 = vsel %vm1985, %v1978, %v1759
  %v1997 = vsel %vm1985, %v1980, %v1761
  %v1999 = vsel %vm1985, %v1982, %v1763
  %v2001 = vsel %vm1985, %v1984, %v1765
  %vm2002 = vcmask 228352
  %v2004 = vsel %vm2002, %v1987, %v1835
  %v2006 = vsel %vm2002, %v1989, %v1837
  %v2008 = vsel %vm2002, %v1991, %v1839
  %v2010 = vsel %vm2002, %v1993, %v1841
  %v2012 = vsel %vm2002, %v1995, %v1843
  %v2014 = vsel %vm2002, %v1997, %v1845
  %v2016 = vsel %vm2002, %v1999, %v1847
  %v2018 = vsel %vm2002, %v2001, %v1849
  %vm2019 = vcmask 261120
  %v2021 = vsel %vm2019, %v2004, %v1877
  %v2023 = vsel %vm2019, %v2006, %v1879
  %v2025 = vsel %vm2019, %v2008, %v1881
  %v2027 = vsel %vm2019, %v2010, %v1883
  %v2029 = vsel %vm2019, %v2012, %v1885
  %v2031 = vsel %vm2019, %v2014, %v1887
  %v2033 = vsel %vm2019, %v2016, %v1889
  %v2035 = vsel %vm2019, %v2018, %v1891
  %v2036 = vld [vmem:[%s1] sm:$0xf]
  %v2037 = vld [vmem:[%s1 + $0x4] sm:$0xf]
  %v2038 = vld [vmem:[%s1 + $0x8] sm:$0xf]
  %v2039 = vld [vmem:[%s1 + $0xc] sm:$0xf]
  %v2040 = vld [vmem:[%s1 + $0x10] sm:$0x3]
  %v2041 = vld [vmem:[%s2] sm:$0x1]
  %v2043 = vlaneseq
  %v2044 = vshrl.u32 %v2043, 7
  %v2045 = vsub.s32 0, %v2044
  %v2046 = vrot.slane %v2041, %v2045
  %v2053 = vunpack.c.l.b16 %v2036
  %v2054 = vunpack.c.l.b16 %v2037
  %v2055 = vunpack.c.l.b16 %v2038
  %v2056 = vunpack.c.l.b16 %v2039
  %v2057 = vunpack.c.l.b16 %v2040
  %v2058 = vpack.c.b16 %v2054, %v2053
  %v2059 = vpack.c.b16 %v2056, %v2055
  %v2060 = vpack.c.b16 %v2057, %v2057
  %vm2063 = vcmask 293888
  %v2064 = vsel %vm2063, %v2021, 0
  %v2066 = vsel %vm2063, %v2023, 0
  %v2068 = vsel %vm2063, %v2025, 0
  %v2070 = vsel %vm2063, %v2027, 0
  %v2072 = vsel %vm2063, %v2029, 0
  %v2074 = vsel %vm2063, %v2031, 0
  %v2076 = vsel %vm2063, %v2033, 0
  %v2078 = vsel %vm2063, %v2035, 0
  %vm2080 = vcmask 1041408
  %v2082 = vsel %vm2080, %v2060, 0
  %2084 = vmatprep.subr.bf16.mxu0 0
  %2085 = vmatpush1.bf16.msra.mxu0 0
  %2086 = vmatprep.subr.bf16.mxu0 0
  %2087 = vmatpush1.bf16.msra.mxu0 0
  %2088 = vmatprep.subr.bf16.mxu0 0
  %2089 = vmatpush1.bf16.msra.mxu0 0
  %2090 = vmatprep.subr.bf16.mxu0 0
  %2091 = vmatpush1.bf16.msra.mxu0 0
  %2092 = vmatprep.subr.bf16.mxu0 0
  %2093 = vmatpush1.bf16.msra.mxu0 0
  %2094 = vmatprep.subr.bf16.mxu0 0
  %2095 = vmatpush1.bf16.msra.mxu0 %v2082
  %2096 = vmatprep.subr.bf16.mxu0 0
  %2097 = vmatpush1.bf16.msra.mxu0 %v2059
  %2098 = vmatprep.subr.bf16.mxu0 0
  %2099 = vmatpush1.bf16.msra.mxu0 %v2058
  %2100 = vmatprep.subr.bf16.mxu0 0
  %2101 = vmatpush2.bf16.msra.mxu0 0
  %2102 = vmatprep.subr.bf16.mxu0 0
  %2103 = vmatpush2.bf16.msra.mxu0 0
  %2104 = vmatprep.subr.bf16.mxu0 0
  %2105 = vmatpush2.bf16.msra.mxu0 0
  %2106 = vmatprep.subr.bf16.mxu0 0
  %2107 = vmatpush2.bf16.msra.mxu0 0
  %2108 = vmatprep.subr.bf16.mxu0 0
  %2109 = vmatpush2.bf16.msra.mxu0 0
  %2110 = vmatprep.subr.bf16.mxu0 0
  %2111 = vmatpush2.bf16.msra.mxu0 0
  %2112 = vmatprep.subr.bf16.mxu0 0
  %2113 = vmatpush2.bf16.msra.mxu0 0
  %2114 = vmatprep.subr.bf16.mxu0 0
  %2115 = vmatpush2.bf16.msra.mxu0 0
  %2116 = vmatprep.mubr.bf16.mxu0 0
  %2117 = vmatmul.mubr.bf16.gmra.mxu0 %v2064
  %v2118 = vpop.f32.mrf.mxu0
  %v2119 = vadd.f32 %v2046, %v2118
  %v2120 = vpop.f32.mrf.mxu0
  %v2121 = vpop.f32.mrf.mxu0
  %v2122 = vadd.f32 %v2046, %v2121
  %v2123 = vpop.f32.mrf.mxu0
  %2124 = vmatprep.mubr.bf16.mxu0 0
  %2125 = vmatmul.mubr.bf16.gmra.mxu0 %v2066
  %v2126 = vpop.f32.mrf.mxu0
  %v2127 = vadd.f32 %v2046, %v2126
  %v2128 = vpop.f32.mrf.mxu0
  %v2129 = vpop.f32.mrf.mxu0
  %v2130 = vadd.f32 %v2046, %v2129
  %v2131 = vpop.f32.mrf.mxu0
  %2132 = vmatprep.mubr.bf16.mxu0 0
  %2133 = vmatmul.mubr.bf16.gmra.mxu0 %v2068
  %v2134 = vpop.f32.mrf.mxu0
  %v2135 = vadd.f32 %v2046, %v2134
  %v2136 = vpop.f32.mrf.mxu0
  %v2137 = vpop.f32.mrf.mxu0
  %v2138 = vadd.f32 %v2046, %v2137
  %v2139 = vpop.f32.mrf.mxu0
  %2140 = vmatprep.mubr.bf16.mxu0 0
  %2141 = vmatmul.mubr.bf16.gmra.mxu0 %v2070
  %v2142 = vpop.f32.mrf.mxu0
  %v2143 = vadd.f32 %v2046, %v2142
  %v2144 = vpop.f32.mrf.mxu0
  %v2145 = vpop.f32.mrf.mxu0
  %v2146 = vadd.f32 %v2046, %v2145
  %v2147 = vpop.f32.mrf.mxu0
  %2148 = vmatprep.mubr.bf16.mxu0 0
  %2149 = vmatmul.mubr.bf16.gmra.mxu0 %v2072
  %v2150 = vpop.f32.mrf.mxu0
  %v2151 = vadd.f32 %v2046, %v2150
  %v2152 = vpop.f32.mrf.mxu0
  %v2153 = vpop.f32.mrf.mxu0
  %v2154 = vadd.f32 %v2046, %v2153
  %v2155 = vpop.f32.mrf.mxu0
  %2156 = vmatprep.mubr.bf16.mxu0 0
  %2157 = vmatmul.mubr.bf16.gmra.mxu0 %v2074
  %v2158 = vpop.f32.mrf.mxu0
  %v2159 = vadd.f32 %v2046, %v2158
  %v2160 = vpop.f32.mrf.mxu0
  %v2161 = vpop.f32.mrf.mxu0
  %v2162 = vadd.f32 %v2046, %v2161
  %v2163 = vpop.f32.mrf.mxu0
  %2164 = vmatprep.mubr.bf16.mxu0 0
  %2165 = vmatmul.mubr.bf16.gmra.mxu0 %v2076
  %v2166 = vpop.f32.mrf.mxu0
  %v2167 = vadd.f32 %v2046, %v2166
  %v2168 = vpop.f32.mrf.mxu0
  %v2169 = vpop.f32.mrf.mxu0
  %v2170 = vadd.f32 %v2046, %v2169
  %v2171 = vpop.f32.mrf.mxu0
  %2172 = vmatprep.mubr.bf16.mxu0 0
  %2173 = vmatmul.mubr.bf16.gmra.mxu0 %v2078
  %v2174 = vpop.f32.mrf.mxu0
  %v2175 = vadd.f32 %v2046, %v2174
  %v2176 = vpop.f32.mrf.mxu0
  %v2177 = vpop.f32.mrf.mxu0
  %v2178 = vadd.f32 %v2046, %v2177
  %v2179 = vpop.f32.mrf.mxu0
  %2180 = vdwg.mxu0
  %v2181 = vsel %vm1917, %v2119, 0.0
  %v2182 = vsel %vm1917, %v2122, 0.0
  %v2183 = vadd.f32 %v2181, %v2182
  %v2184 = vsel %vm1917, %v2127, 0.0
  %v2185 = vadd.f32 %v2183, %v2184
  %v2186 = vsel %vm1917, %v2130, 0.0
  %v2187 = vadd.f32 %v2185, %v2186
  %v2188 = vsel %vm1917, %v2135, 0.0
  %v2189 = vadd.f32 %v2187, %v2188
  %v2190 = vsel %vm1917, %v2138, 0.0
  %v2191 = vadd.f32 %v2189, %v2190
  %v2192 = vsel %vm1917, %v2143, 0.0
  %v2193 = vadd.f32 %v2191, %v2192
  %v2194 = vsel %vm1917, %v2146, 0.0
  %v2195 = vadd.f32 %v2193, %v2194
  %v2196 = vsel %vm1917, %v2151, 0.0
  %v2197 = vadd.f32 %v2195, %v2196
  %v2198 = vsel %vm1917, %v2154, 0.0
  %v2199 = vadd.f32 %v2197, %v2198
  %v2200 = vsel %vm1917, %v2159, 0.0
  %v2201 = vadd.f32 %v2199, %v2200
  %v2202 = vsel %vm1917, %v2162, 0.0
  %v2203 = vadd.f32 %v2201, %v2202
  %v2204 = vsel %vm1917, %v2167, 0.0
  %v2205 = vadd.f32 %v2203, %v2204
  %v2206 = vsel %vm1917, %v2170, 0.0
  %v2207 = vadd.f32 %v2205, %v2206
  %v2208 = vsel %vm1917, %v2175, 0.0
  %v2209 = vadd.f32 %v2207, %v2208
  %v2210 = vsel %vm1917, %v2178, 0.0
  %v2211 = vadd.f32 %v2209, %v2210
  %v2212 = vrot.slane %v2211, 4
  %v2213 = vadd.f32 %v2211, %v2212
  %v2214 = vrot.slane %v2213, 2
  %v2215 = vadd.f32 %v2213, %v2214
  %v2216 = vrot.slane %v2215, 1
  %v2217 = vadd.f32 %v2215, %v2216
  %v2218 = vmul.f32 %v2119, %v2119
  %v2219 = vmul.f32 %v2122, %v2122
  %v2220 = vmul.f32 %v2127, %v2127
  %v2221 = vmul.f32 %v2130, %v2130
  %v2222 = vmul.f32 %v2135, %v2135
  %v2223 = vmul.f32 %v2138, %v2138
  %v2224 = vmul.f32 %v2143, %v2143
  %v2225 = vmul.f32 %v2146, %v2146
  %v2226 = vmul.f32 %v2151, %v2151
  %v2227 = vmul.f32 %v2154, %v2154
  %v2228 = vmul.f32 %v2159, %v2159
  %v2229 = vmul.f32 %v2162, %v2162
  %v2230 = vmul.f32 %v2167, %v2167
  %v2231 = vmul.f32 %v2170, %v2170
  %v2232 = vmul.f32 %v2175, %v2175
  %v2233 = vmul.f32 %v2178, %v2178
  %v2234 = vsel %vm1917, %v2218, 0.0
  %v2235 = vsel %vm1917, %v2219, 0.0
  %v2236 = vadd.f32 %v2234, %v2235
  %v2237 = vsel %vm1917, %v2220, 0.0
  %v2238 = vadd.f32 %v2236, %v2237
  %v2239 = vsel %vm1917, %v2221, 0.0
  %v2240 = vadd.f32 %v2238, %v2239
  %v2241 = vsel %vm1917, %v2222, 0.0
  %v2242 = vadd.f32 %v2240, %v2241
  %v2243 = vsel %vm1917, %v2223, 0.0
  %v2244 = vadd.f32 %v2242, %v2243
  %v2245 = vsel %vm1917, %v2224, 0.0
  %v2246 = vadd.f32 %v2244, %v2245
  %v2247 = vsel %vm1917, %v2225, 0.0
  %v2248 = vadd.f32 %v2246, %v2247
  %v2249 = vsel %vm1917, %v2226, 0.0
  %v2250 = vadd.f32 %v2248, %v2249
  %v2251 = vsel %vm1917, %v2227, 0.0
  %v2252 = vadd.f32 %v2250, %v2251
  %v2253 = vsel %vm1917, %v2228, 0.0
  %v2254 = vadd.f32 %v2252, %v2253
  %v2255 = vsel %vm1917, %v2229, 0.0
  %v2256 = vadd.f32 %v2254, %v2255
  %v2257 = vsel %vm1917, %v2230, 0.0
  %v2258 = vadd.f32 %v2256, %v2257
  %v2259 = vsel %vm1917, %v2231, 0.0
  %v2260 = vadd.f32 %v2258, %v2259
  %v2261 = vsel %vm1917, %v2232, 0.0
  %v2262 = vadd.f32 %v2260, %v2261
  %v2263 = vsel %vm1917, %v2233, 0.0
  %v2264 = vadd.f32 %v2262, %v2263
  %v2265 = vrot.slane %v2264, 4
  %v2266 = vadd.f32 %v2264, %v2265
  %v2267 = vrot.slane %v2266, 2
  %v2268 = vadd.f32 %v2266, %v2267
  %v2269 = vrot.slane %v2268, 1
  %v2270 = vadd.f32 %v2268, %v2269
  %vm2271 = vcmask 1040384
  %v2272 = vsel %vm2271, %v2217, %v2270
  %vm2273 = vcmask 58368
  %2274 = vst.msk [vmem:[%s4] sm:$0x3] %vm2273, %v2272
  %2275 = vxpose.xlu0.b32.start [1/16] %v2119, 128
  %2276 = vxpose.xlu0.b32.cont [2/16] %v2122, 128
  %2277 = vxpose.xlu0.b32.cont [3/16] %v2127, 128
  %2278 = vxpose.xlu0.b32.cont [4/16] %v2130, 128
  %2279 = vxpose.xlu0.b32.cont [5/16] %v2135, 128
  %2280 = vxpose.xlu0.b32.cont [6/16] %v2138, 128
  %2281 = vxpose.xlu0.b32.cont [7/16] %v2143, 128
  %2282 = vxpose.xlu0.b32.cont [8/16] %v2146, 128
  %2283 = vxpose.xlu0.b32.cont [9/16] 0.0, 128
  %2284 = vxpose.xlu0.b32.cont [10/16] 0.0, 128
  %2285 = vxpose.xlu0.b32.cont [11/16] 0.0, 128
  %2286 = vxpose.xlu0.b32.cont [12/16] 0.0, 128
  %2287 = vxpose.xlu0.b32.cont [13/16] 0.0, 128
  %2288 = vxpose.xlu0.b32.cont [14/16] 0.0, 128
  %2289 = vxpose.xlu0.b32.cont [15/16] 0.0, 128
  %2290 = vxpose.xlu0.b32.end [16/16] 0.0, 128
  %v2291 = vpop.trf.xlu0
  %v2292 = vpop.trf.xlu0
  %v2293 = vpop.trf.xlu0
  %v2294 = vpop.trf.xlu0
  %v2295 = vpop.trf.xlu0
  %v2296 = vpop.trf.xlu0
  %v2297 = vpop.trf.xlu0
  %v2298 = vpop.trf.xlu0
  %v2299 = vpop.trf.xlu0
  %v2300 = vpop.trf.xlu0
  %v2301 = vpop.trf.xlu0
  %v2302 = vpop.trf.xlu0
  %v2303 = vpop.trf.xlu0
  %v2304 = vpop.trf.xlu0
  %v2305 = vpop.trf.xlu0
  %v2306 = vpop.trf.xlu0
  %2307 = vxpose.xlu0.b32.start [1/16] %v2151, 128
  %2308 = vxpose.xlu0.b32.cont [2/16] %v2154, 128
  %2309 = vxpose.xlu0.b32.cont [3/16] %v2159, 128
  %2310 = vxpose.xlu0.b32.cont [4/16] %v2162, 128
  %2311 = vxpose.xlu0.b32.cont [5/16] %v2167, 128
  %2312 = vxpose.xlu0.b32.cont [6/16] %v2170, 128
  %2313 = vxpose.xlu0.b32.cont [7/16] %v2175, 128
  %2314 = vxpose.xlu0.b32.cont [8/16] %v2178, 128
  %2315 = vxpose.xlu0.b32.cont [9/16] 0.0, 128
  %2316 = vxpose.xlu0.b32.cont [10/16] 0.0, 128
  %2317 = vxpose.xlu0.b32.cont [11/16] 0.0, 128
  %2318 = vxpose.xlu0.b32.cont [12/16] 0.0, 128
  %2319 = vxpose.xlu0.b32.cont [13/16] 0.0, 128
  %2320 = vxpose.xlu0.b32.cont [14/16] 0.0, 128
  %2321 = vxpose.xlu0.b32.cont [15/16] 0.0, 128
  %2322 = vxpose.xlu0.b32.end [16/16] 0.0, 128
  %v2323 = vpop.trf.xlu0
  %v2324 = vpop.trf.xlu0
  %v2325 = vpop.trf.xlu0
  %v2326 = vpop.trf.xlu0
  %v2327 = vpop.trf.xlu0
  %v2328 = vpop.trf.xlu0
  %v2329 = vpop.trf.xlu0
  %v2330 = vpop.trf.xlu0
  %v2331 = vpop.trf.xlu0
  %v2332 = vpop.trf.xlu0
  %v2333 = vpop.trf.xlu0
  %v2334 = vpop.trf.xlu0
  %v2335 = vpop.trf.xlu0
  %v2336 = vpop.trf.xlu0
  %v2337 = vpop.trf.xlu0
  %v2338 = vpop.trf.xlu0
  %v2339 = vpack.c.bf16 %v2291, %v2291
  %v2340 = vpack.c.bf16 %v2323, %v2323
  %vm2341 = vcmask 519168
  %2342 = vst.msk [vmem:[%s3] sm:$0xf] %vm2341, %v2339
  %2343 = vst.msk [vmem:[%s3 + $0x4] sm:$0xf] %vm2341, %v2340
  // Predicated region
  $region14: #{encoder_block.3} parent=0 // pred_check
    _
  $region15: #{encoder_block.3} parent=0 // pred_check_branch
    %2345 = sbr.rel (0) target = $region17
  $region16: #{encoder_block.3} parent=0 // pred_region
    _
  $region17: #{encoder_block.3} parent=0 // pred_fallthru
    _
  // Predicated region
  $region18: #{encoder_block.3} parent=0 // pred_check
    _
  $region19: #{encoder_block.3} parent=0 // pred_check_branch
    %2347 = sbr.rel (0) target = $region21
  $region20: #{encoder_block.3} parent=0 // pred_region
    _
  $region21: #{encoder_block.3} parent=0 // pred_fallthru
    _
  // Predicated region
  $region22: #{encoder_block.3} parent=0 // pred_check
    _
  $region23: #{encoder_block.3} parent=0 // pred_check_branch
    %2349 = sbr.rel (0) target = $region25
  $region24: #{encoder_block.3} parent=0 // pred_region
    _
  $region25: #{encoder_block.3} parent=0 // pred_fallthru
    _
  // Predicated region
  $region26: #{encoder_block.3} parent=0 // pred_check
    _
  $region27: #{encoder_block.3} parent=0 // pred_check_branch
    %2351 = sbr.rel (0) target = $region29
  $region28: #{encoder_block.3} parent=0 // pred_region
    _
  $region29: #{encoder_block.3} parent=0 // pred_fallthru
    _

// kernel: encoder_block.4
$region0: #{encoder_block.4}
  #allocation0 [shape = 'u32[]', space=smem, size = 0x4, offset = 0x4, fixed_abs, tag = 'smem constant byte address 0x4 - core index']
  #allocation1 [shape = 'u32[144,128]{1,0:T(1,128)}', space=vmem, size = 0x12000, scoped, tag = 'internal scratch']
  %s0 = inlined_call_operand.vmem [shape: bf16[2,8,64], index: 0, kind: input, shape index: {}]
  %s1 = inlined_call_operand.vmem [shape: f32[8,1], index: 1, kind: input, shape index: {}]
  %s2 = inlined_call_operand.vmem [shape: f32[8,1], index: 2, kind: input, shape index: {}]
  %s3 = inlined_call_operand.vmem [shape: bf16[72,8], index: 3, kind: input, shape index: {}]
  %s4 = inlined_call_operand.vmem [shape: f32[1,8], index: 4, kind: input, shape index: {}]
  %s5 = inlined_call_operand.vmem [shape: bf16[2,8,64], index: 5, kind: output, shape index: {0}]
  %s6 = inlined_call_operand.vmem [shape: f32[1,2,8], index: 6, kind: output, shape index: {1}]
  %7 = xla_tuple %s5, %s6
  %s8 = sld [smem:[#allocation0]]
  $region38: #{encoder_block.4} parent=0
    _
  %s10 = ssub.s32 1, %s8
  %s11 = scalar_select 0, %s10, %s8
  // Predicated region
  $region2: #{encoder_block.4} parent=0 // pred_check
    _
  $region3: #{encoder_block.4} parent=0 // pred_check_branch
    %13 = sbr.rel (0) target = $region5
  $region4: #{encoder_block.4} parent=0 // pred_region
    _
  $region5: #{encoder_block.4} parent=0 // pred_fallthru
    _
  // Predicated region
  $region6: #{encoder_block.4} parent=0 // pred_check
    _
  $region7: #{encoder_block.4} parent=0 // pred_check_branch
    %15 = sbr.rel (0) target = $region9
  $region8: #{encoder_block.4} parent=0 // pred_region
    _
  $region9: #{encoder_block.4} parent=0 // pred_fallthru
    _
  // Predicated region
  $region10: #{encoder_block.4} parent=0 // pred_check
    _
  $region11: #{encoder_block.4} parent=0 // pred_check_branch
    %17 = sbr.rel (0) target = $region13
  $region12: #{encoder_block.4} parent=0 // pred_region
    _
  $region13: #{encoder_block.4} parent=0 // pred_fallthru
    _
  // Predicated region
  $region14: #{encoder_block.4} parent=0 // pred_check
    _
  $region15: #{encoder_block.4} parent=0 // pred_check_branch
    %19 = sbr.rel (0) target = $region17
  $region16: #{encoder_block.4} parent=0 // pred_region
    _
  $region17: #{encoder_block.4} parent=0 // pred_fallthru
    _
  // Predicated region
  $region18: #{encoder_block.4} parent=0 // pred_check
    _
  $region19: #{encoder_block.4} parent=0 // pred_check_branch
    %21 = sbr.rel (0) target = $region21
  $region20: #{encoder_block.4} parent=0 // pred_region
    _
  $region21: #{encoder_block.4} parent=0 // pred_fallthru
    _
  %v25 = vld [vmem:[%s0] sm:$0xf]
  %v26 = vld [vmem:[%s0 + $0x4] sm:$0xf]
  %v27 = vunpack.c.l.bf16 %v25
  %v28 = vunpack.c.l.bf16 %v26
  %v29 = vld [vmem:[%s1] sm:$0xff]
  %31 = vset.pattern.permute.xlu0 0
  %32 = vperm.xlu0 %31, %v29
  %v33 = vpop.permute.xlu0 %32
  %v35 = vmul.f32 %v27, %v33
  %v36 = vmul.f32 %v28, %v33
  %v37 = vld [vmem:[%s2] sm:$0xff]
  %39 = vset.pattern.permute.xlu0 0
  %40 = vperm.xlu0 %39, %v37
  %v41 = vpop.permute.xlu0 %40
  %v43 = vadd.f32 %v35, %v41
  %v44 = vadd.f32 %v36, %v41
  %v45 = vmax.f32 %v43, 0.0
  %v46 = vmax.f32 %v44, 0.0
  %47 = vxpose.xlu0.b32.start [1/16] %v45, 128
  %48 = vxpose.xlu0.b32.cont [2/16] 0.0, 128
  %49 = vxpose.xlu0.b32.cont [3/16] 0.0, 128
  %50 = vxpose.xlu0.b32.cont [4/16] 0.0, 128
  %51 = vxpose.xlu0.b32.cont [5/16] 0.0, 128
  %52 = vxpose.xlu0.b32.cont [6/16] 0.0, 128
  %53 = vxpose.xlu0.b32.cont [7/16] 0.0, 128
  %54 = vxpose.xlu0.b32.cont [8/16] 0.0, 128
  %55 = vxpose.xlu0.b32.cont [9/16] 0.0, 128
  %56 = vxpose.xlu0.b32.cont [10/16] 0.0, 128
  %57 = vxpose.xlu0.b32.cont [11/16] 0.0, 128
  %58 = vxpose.xlu0.b32.cont [12/16] 0.0, 128
  %59 = vxpose.xlu0.b32.cont [13/16] 0.0, 128
  %60 = vxpose.xlu0.b32.cont [14/16] 0.0, 128
  %61 = vxpose.xlu0.b32.cont [15/16] 0.0, 128
  %62 = vxpose.xlu0.b32.end [16/16] 0.0, 128
  %v63 = vpop.trf.xlu0
  %v64 = vpop.trf.xlu0
  %v65 = vpop.trf.xlu0
  %v66 = vpop.trf.xlu0
  %v67 = vpop.trf.xlu0
  %v68 = vpop.trf.xlu0
  %v69 = vpop.trf.xlu0
  %v70 = vpop.trf.xlu0
  %v71 = vpop.trf.xlu0
  %v72 = vpop.trf.xlu0
  %v73 = vpop.trf.xlu0
  %v74 = vpop.trf.xlu0
  %v75 = vpop.trf.xlu0
  %v76 = vpop.trf.xlu0
  %v77 = vpop.trf.xlu0
  %v78 = vpop.trf.xlu0
  %79 = vxpose.xlu0.b32.start [1/16] %v46, 128
  %80 = vxpose.xlu0.b32.cont [2/16] 0.0, 128
  %81 = vxpose.xlu0.b32.cont [3/16] 0.0, 128
  %82 = vxpose.xlu0.b32.cont [4/16] 0.0, 128
  %83 = vxpose.xlu0.b32.cont [5/16] 0.0, 128
  %84 = vxpose.xlu0.b32.cont [6/16] 0.0, 128
  %85 = vxpose.xlu0.b32.cont [7/16] 0.0, 128
  %86 = vxpose.xlu0.b32.cont [8/16] 0.0, 128
  %87 = vxpose.xlu0.b32.cont [9/16] 0.0, 128
  %88 = vxpose.xlu0.b32.cont [10/16] 0.0, 128
  %89 = vxpose.xlu0.b32.cont [11/16] 0.0, 128
  %90 = vxpose.xlu0.b32.cont [12/16] 0.0, 128
  %91 = vxpose.xlu0.b32.cont [13/16] 0.0, 128
  %92 = vxpose.xlu0.b32.cont [14/16] 0.0, 128
  %93 = vxpose.xlu0.b32.cont [15/16] 0.0, 128
  %94 = vxpose.xlu0.b32.end [16/16] 0.0, 128
  %v95 = vpop.trf.xlu0
  %v96 = vpop.trf.xlu0
  %v97 = vpop.trf.xlu0
  %v98 = vpop.trf.xlu0
  %v99 = vpop.trf.xlu0
  %v100 = vpop.trf.xlu0
  %v101 = vpop.trf.xlu0
  %v102 = vpop.trf.xlu0
  %v103 = vpop.trf.xlu0
  %v104 = vpop.trf.xlu0
  %v105 = vpop.trf.xlu0
  %v106 = vpop.trf.xlu0
  %v107 = vpop.trf.xlu0
  %v108 = vpop.trf.xlu0
  %v109 = vpop.trf.xlu0
  %v110 = vpop.trf.xlu0
  %v111 = vpack.c.bf16 %v64, %v63
  %v112 = vpack.c.bf16 %v66, %v65
  %v113 = vpack.c.bf16 %v68, %v67
  %v114 = vpack.c.bf16 %v70, %v69
  %v115 = vpack.c.bf16 %v96, %v95
  %v116 = vpack.c.bf16 %v98, %v97
  %v117 = vpack.c.bf16 %v100, %v99
  %v118 = vpack.c.bf16 %v102, %v101
  %v119 = vlaneseq
  %v120 = vshrl.u32 %v119, 7
  %v121 = vadd.s32 %v120, 8
  %v122 = vadd.s32 %v120, 16
  %v123 = vadd.s32 %v120, 24
  %v124 = vadd.s32 %v120, 32
  %v125 = vadd.s32 %v120, 40
  %v126 = vadd.s32 %v120, 48
  %v127 = vadd.s32 %v120, 56
  %v128 = vadd.s32 %v120, 64
  %v129 = vadd.s32 %v120, 72
  %v130 = vadd.s32 %v120, 80
  %v131 = vadd.s32 %v120, 88
  %v132 = vadd.s32 %v120, 96
  %v133 = vadd.s32 %v120, 104
  %v134 = vadd.s32 %v120, 112
  %v135 = vadd.s32 %v120, 120
  %v136 = vand.u32 %v120, 63
  %v137 = vand.u32 %v121, 63
  %v138 = vand.u32 %v122, 63
  %v139 = vand.u32 %v123, 63
  %v140 = vand.u32 %v124, 63
  %v141 = vand.u32 %v125, 63
  %v142 = vand.u32 %v126, 63
  %v143 = vand.u32 %v127, 63
  %v144 = vand.u32 %v128, 63
  %v145 = vand.u32 %v129, 63
  %v146 = vand.u32 %v130, 63
  %v147 = vand.u32 %v131, 63
  %v148 = vand.u32 %v132, 63
  %v149 = vand.u32 %v133, 63
  %v150 = vand.u32 %v134, 63
  %v151 = vand.u32 %v135, 63
  %v152 = vand.u32 %v120, 7
  %v153 = vand.u32 %v121, 7
  %v154 = vand.u32 %v122, 7
  %v155 = vand.u32 %v123, 7
  %v156 = vand.u32 %v124, 7
  %v157 = vand.u32 %v125, 7
  %v158 = vand.u32 %v126, 7
  %v159 = vand.u32 %v127, 7
  %v160 = vand.u32 %v128, 7
  %v161 = vand.u32 %v129, 7
  %v162 = vand.u32 %v130, 7
  %v163 = vand.u32 %v131, 7
  %v164 = vand.u32 %v132, 7
  %v165 = vand.u32 %v133, 7
  %v166 = vand.u32 %v134, 7
  %v167 = vand.u32 %v135, 7
  %vm168 = vcmp.lt.s32.totalorder %v136, 8
  %vm169 = vcmp.lt.s32.totalorder %v137, 8
  %vm170 = vcmp.lt.s32.totalorder %v138, 8
  %vm171 = vcmp.lt.s32.totalorder %v139, 8
  %vm172 = vcmp.lt.s32.totalorder %v140, 8
  %vm173 = vcmp.lt.s32.totalorder %v141, 8
  %vm174 = vcmp.lt.s32.totalorder %v142, 8
  %vm175 = vcmp.lt.s32.totalorder %v143, 8
  %vm176 = vcmp.lt.s32.totalorder %v144, 8
  %vm177 = vcmp.lt.s32.totalorder %v145, 8
  %vm178 = vcmp.lt.s32.totalorder %v146, 8
  %vm179 = vcmp.lt.s32.totalorder %v147, 8
  %vm180 = vcmp.lt.s32.totalorder %v148, 8
  %vm181 = vcmp.lt.s32.totalorder %v149, 8
  %vm182 = vcmp.lt.s32.totalorder %v150, 8
  %vm183 = vcmp.lt.s32.totalorder %v151, 8
  %vm184 = vcmp.ge.s32.totalorder %v136, 56
  %vm185 = vcmp.ge.s32.totalorder %v137, 56
  %vm186 = vcmp.ge.s32.totalorder %v138, 56
  %vm187 = vcmp.ge.s32.totalorder %v139, 56
  %vm188 = vcmp.ge.s32.totalorder %v140, 56
  %vm189 = vcmp.ge.s32.totalorder %v141, 56
  %vm190 = vcmp.ge.s32.totalorder %v142, 56
  %vm191 = vcmp.ge.s32.totalorder %v143, 56
  %vm192 = vcmp.ge.s32.totalorder %v144, 56
  %vm193 = vcmp.ge.s32.totalorder %v145, 56
  %vm194 = vcmp.ge.s32.totalorder %v146, 56
  %vm195 = vcmp.ge.s32.totalorder %v147, 56
  %vm196 = vcmp.ge.s32.totalorder %v148, 56
  %vm197 = vcmp.ge.s32.totalorder %v149, 56
  %vm198 = vcmp.ge.s32.totalorder %v150, 56
  %vm199 = vcmp.ge.s32.totalorder %v151, 56
  %vm200 = vcmp.eq.s32.totalorder %v152, 0
  %vm201 = vcmp.eq.s32.totalorder %v153, 0
  %vm202 = vcmp.eq.s32.totalorder %v154, 0
  %vm203 = vcmp.eq.s32.totalorder %v155, 0
  %vm204 = vcmp.eq.s32.totalorder %v156, 0
  %vm205 = vcmp.eq.s32.totalorder %v157, 0
  %vm206 = vcmp.eq.s32.totalorder %v158, 0
  %vm207 = vcmp.eq.s32.totalorder %v159, 0
  %vm208 = vcmp.eq.s32.totalorder %v160, 0
  %vm209 = vcmp.eq.s32.totalorder %v161, 0
  %vm210 = vcmp.eq.s32.totalorder %v162, 0
  %vm211 = vcmp.eq.s32.totalorder %v163, 0
  %vm212 = vcmp.eq.s32.totalorder %v164, 0
  %vm213 = vcmp.eq.s32.totalorder %v165, 0
  %vm214 = vcmp.eq.s32.totalorder %v166, 0
  %vm215 = vcmp.eq.s32.totalorder %v167, 0
  %vm216 = vcmp.eq.s32.totalorder %v152, 7
  %vm217 = vcmp.eq.s32.totalorder %v153, 7
  %vm218 = vcmp.eq.s32.totalorder %v154, 7
  %vm219 = vcmp.eq.s32.totalorder %v155, 7
  %vm220 = vcmp.eq.s32.totalorder %v156, 7
  %vm221 = vcmp.eq.s32.totalorder %v157, 7
  %vm222 = vcmp.eq.s32.totalorder %v158, 7
  %vm223 = vcmp.eq.s32.totalorder %v159, 7
  %vm224 = vcmp.eq.s32.totalorder %v160, 7
  %vm225 = vcmp.eq.s32.totalorder %v161, 7
  %vm226 = vcmp.eq.s32.totalorder %v162, 7
  %vm227 = vcmp.eq.s32.totalorder %v163, 7
  %vm228 = vcmp.eq.s32.totalorder %v164, 7
  %vm229 = vcmp.eq.s32.totalorder %v165, 7
  %vm230 = vcmp.eq.s32.totalorder %v166, 7
  %vm231 = vcmp.eq.s32.totalorder %v167, 7
  %vm232 = vsmask.f32 4352
  %v234 = vshrl.u32 %v111, 16
  %v236 = vrot.slane %v234, 3
  %v237 = vshll.u32 %v111, 16
  %v239 = vrot.slane %v237, 4
  %v240 = vor.u32 %v236, %v239
  %v242 = vshrl.u32 %v112, 16
  %v244 = vrot.slane %v242, 3
  %v245 = vshll.u32 %v112, 16
  %v247 = vrot.slane %v245, 4
  %v248 = vor.u32 %v244, %v247
  %v249 = vsel %vm232, %v240, %v248
  %v251 = vshrl.u32 %v113, 16
  %v253 = vrot.slane %v251, 3
  %v254 = vshll.u32 %v113, 16
  %v256 = vrot.slane %v254, 4
  %v257 = vor.u32 %v253, %v256
  %v258 = vsel %vm232, %v248, %v257
  %v260 = vshrl.u32 %v114, 16
  %v262 = vrot.slane %v260, 3
  %v263 = vshll.u32 %v114, 16
  %v265 = vrot.slane %v263, 4
  %v266 = vor.u32 %v262, %v265
  %v267 = vsel %vm232, %v257, %v266
  %v269 = vshrl.u32 %v115, 16
  %v271 = vrot.slane %v269, 3
  %v272 = vshll.u32 %v115, 16
  %v274 = vrot.slane %v272, 4
  %v275 = vor.u32 %v271, %v274
  %v276 = vsel %vm232, %v266, %v275
  %v278 = vshrl.u32 %v116, 16
  %v280 = vrot.slane %v278, 3
  %v281 = vshll.u32 %v116, 16
  %v283 = vrot.slane %v281, 4
  %v284 = vor.u32 %v280, %v283
  %v285 = vsel %vm232, %v275, %v284
  %v287 = vshrl.u32 %v117, 16
  %v289 = vrot.slane %v287, 3
  %v290 = vshll.u32 %v117, 16
  %v292 = vrot.slane %v290, 4
  %v293 = vor.u32 %v289, %v292
  %v294 = vsel %vm232, %v284, %v293
  %v296 = vshrl.u32 %v118, 16
  %v298 = vrot.slane %v296, 3
  %v299 = vshll.u32 %v118, 16
  %v301 = vrot.slane %v299, 4
  %v302 = vor.u32 %v298, %v301
  %v303 = vsel %vm232, %v293, %v302
  %vm313 = vcmask 1044480
  %vm314 = vmand %vm313, %vm232
  %v315 = vsel %vm314, 0, %v240
  %v316 = vsel %vm314, %v302, 0
  %vm317 = vmor %vm168, %vm200
  %vm318 = vmor %vm169, %vm201
  %vm319 = vmor %vm170, %vm202
  %vm320 = vmor %vm171, %vm203
  %vm321 = vmor %vm172, %vm204
  %vm322 = vmor %vm173, %vm205
  %vm323 = vmor %vm174, %vm206
  %vm324 = vmor %vm175, %vm207
  %vm325 = vmor %vm176, %vm208
  %vm326 = vmor %vm177, %vm209
  %vm327 = vmor %vm178, %vm210
  %vm328 = vmor %vm179, %vm211
  %vm329 = vmor %vm180, %vm212
  %vm330 = vmor %vm181, %vm213
  %vm331 = vmor %vm182, %vm214
  %vm332 = vmor %vm183, %vm215
  %v333 = vsel %vm317, 1, 0
  %v334 = vsel %vm318, 1, 0
  %v335 = vsel %vm319, 1, 0
  %v336 = vsel %vm320, 1, 0
  %v337 = vsel %vm321, 1, 0
  %v338 = vsel %vm322, 1, 0
  %v339 = vsel %vm323, 1, 0
  %v340 = vsel %vm324, 1, 0
  %v341 = vsel %vm325, 1, 0
  %v342 = vsel %vm326, 1, 0
  %v343 = vsel %vm327, 1, 0
  %v344 = vsel %vm328, 1, 0
  %v345 = vsel %vm329, 1, 0
  %v346 = vsel %vm330, 1, 0
  %v347 = vsel %vm331, 1, 0
  %v348 = vsel %vm332, 1, 0
  %vm349 = vcmp.eq.s32.totalorder %v333, 1
  %vm350 = vcmp.eq.s32.totalorder %v334, 1
  %vm351 = vcmp.eq.s32.totalorder %v335, 1
  %vm352 = vcmp.eq.s32.totalorder %v336, 1
  %vm353 = vcmp.eq.s32.totalorder %v337, 1
  %vm354 = vcmp.eq.s32.totalorder %v338, 1
  %vm355 = vcmp.eq.s32.totalorder %v339, 1
  %vm356 = vcmp.eq.s32.totalorder %v340, 1
  %vm357 = vcmp.eq.s32.totalorder %v341, 1
  %vm358 = vcmp.eq.s32.totalorder %v342, 1
  %vm359 = vcmp.eq.s32.totalorder %v343, 1
  %vm360 = vcmp.eq.s32.totalorder %v344, 1
  %vm361 = vcmp.eq.s32.totalorder %v345, 1
  %vm362 = vcmp.eq.s32.totalorder %v346, 1
  %vm363 = vcmp.eq.s32.totalorder %v347, 1
  %vm364 = vcmp.eq.s32.totalorder %v348, 1
  %vm365 = vmpackc.low %vm349, %vm349
  %vm366 = vmpackc.low %vm350, %vm350
  %vm367 = vmpackc.low %vm351, %vm351
  %vm368 = vmpackc.low %vm352, %vm352
  %vm369 = vmpackc.low %vm353, %vm353
  %vm370 = vmpackc.low %vm354, %vm354
  %vm371 = vmpackc.low %vm355, %vm355
  %vm372 = vmpackc.low %vm356, %vm356
  %vm373 = vmpackc.low %vm357, %vm357
  %vm374 = vmpackc.low %vm358, %vm358
  %vm375 = vmpackc.low %vm359, %vm359
  %vm376 = vmpackc.low %vm360, %vm360
  %vm377 = vmpackc.low %vm361, %vm361
  %vm378 = vmpackc.low %vm362, %vm362
  %vm379 = vmpackc.low %vm363, %vm363
  %vm380 = vmpackc.low %vm364, %vm364
  %v381 = vsel %vm365, 65537, 0
  %v382 = vsel %vm366, 65537, 0
  %v383 = vsel %vm367, 65537, 0
  %v384 = vsel %vm368, 65537, 0
  %v385 = vsel %vm369, 65537, 0
  %v386 = vsel %vm370, 65537, 0
  %v387 = vsel %vm371, 65537, 0
  %v388 = vsel %vm372, 65537, 0
  %v389 = vsel %vm373, 65537, 0
  %v390 = vsel %vm374, 65537, 0
  %v391 = vsel %vm375, 65537, 0
  %v392 = vsel %vm376, 65537, 0
  %v393 = vsel %vm377, 65537, 0
  %v394 = vsel %vm378, 65537, 0
  %v395 = vsel %vm379, 65537, 0
  %v396 = vsel %vm380, 65537, 0
  %v397 = vunpack.c.l.b16 %v381
  %v398 = vunpack.c.l.b16 %v382
  %v399 = vunpack.c.l.b16 %v383
  %v400 = vunpack.c.l.b16 %v384
  %v401 = vunpack.c.l.b16 %v385
  %v402 = vunpack.c.l.b16 %v386
  %v403 = vunpack.c.l.b16 %v387
  %v404 = vunpack.c.l.b16 %v388
  %v405 = vunpack.c.l.b16 %v389
  %v406 = vunpack.c.l.b16 %v390
  %v407 = vunpack.c.l.b16 %v391
  %v408 = vunpack.c.l.b16 %v392
  %v409 = vunpack.c.l.b16 %v393
  %v410 = vunpack.c.l.b16 %v394
  %v411 = vunpack.c.l.b16 %v395
  %v412 = vunpack.c.l.b16 %v396
  %v413 = vpack.c.b16 %v398, %v397
  %v414 = vpack.c.b16 %v400, %v399
  %v415 = vpack.c.b16 %v402, %v401
  %v416 = vpack.c.b16 %v404, %v403
  %v417 = vpack.c.b16 %v406, %v405
  %v418 = vpack.c.b16 %v408, %v407
  %v419 = vpack.c.b16 %v410, %v409
  %v420 = vpack.c.b16 %v412, %v411
  %vm421 = vcmp.ne.s16.totalorder %v413, 0
  %vm422 = vcmp.ne.s16.totalorder %v414, 0
  %vm423 = vcmp.ne.s16.totalorder %v415, 0
  %vm424 = vcmp.ne.s16.totalorder %v416, 0
  %vm425 = vcmp.ne.s16.totalorder %v417, 0
  %vm426 = vcmp.ne.s16.totalorder %v418, 0
  %vm427 = vcmp.ne.s16.totalorder %v419, 0
  %vm428 = vcmp.ne.s16.totalorder %v420, 0
  %v429 = vsel %vm421, 0, %v315
  %v430 = vsel %vm422, 0, %v249
  %v431 = vsel %vm423, 0, %v258
  %v432 = vsel %vm424, 0, %v267
  %v433 = vsel %vm425, 0, %v276
  %v434 = vsel %vm426, 0, %v285
  %v435 = vsel %vm427, 0, %v294
  %v436 = vsel %vm428, 0, %v303
  %v437 = vsel %vm168, 1, 0
  %v438 = vsel %vm169, 1, 0
  %v439 = vsel %vm170, 1, 0
  %v440 = vsel %vm171, 1, 0
  %v441 = vsel %vm172, 1, 0
  %v442 = vsel %vm173, 1, 0
  %v443 = vsel %vm174, 1, 0
  %v444 = vsel %vm175, 1, 0
  %v445 = vsel %vm176, 1, 0
  %v446 = vsel %vm177, 1, 0
  %v447 = vsel %vm178, 1, 0
  %v448 = vsel %vm179, 1, 0
  %v449 = vsel %vm180, 1, 0
  %v450 = vsel %vm181, 1, 0
  %v451 = vsel %vm182, 1, 0
  %v452 = vsel %vm183, 1, 0
  %vm453 = vcmp.eq.s32.totalorder %v437, 1
  %vm454 = vcmp.eq.s32.totalorder %v438, 1
  %vm455 = vcmp.eq.s32.totalorder %v439, 1
  %vm456 = vcmp.eq.s32.totalorder %v440, 1
  %vm457 = vcmp.eq.s32.totalorder %v441, 1
  %vm458 = vcmp.eq.s32.totalorder %v442, 1
  %vm459 = vcmp.eq.s32.totalorder %v443, 1
  %vm460 = vcmp.eq.s32.totalorder %v444, 1
  %vm461 = vcmp.eq.s32.totalorder %v445, 1
  %vm462 = vcmp.eq.s32.totalorder %v446, 1
  %vm463 = vcmp.eq.s32.totalorder %v447, 1
  %vm464 = vcmp.eq.s32.totalorder %v448, 1
  %vm465 = vcmp.eq.s32.totalorder %v449, 1
  %vm466 = vcmp.eq.s32.totalorder %v450, 1
  %vm467 = vcmp.eq.s32.totalorder %v451, 1
  %vm468 = vcmp.eq.s32.totalorder %v452, 1
  %vm469 = vmpackc.low %vm453, %vm453
  %vm470 = vmpackc.low %vm454, %vm454
  %vm471 = vmpackc.low %vm455, %vm455
  %vm472 = vmpackc.low %vm456, %vm456
  %vm473 = vmpackc.low %vm457, %vm457
  %vm474 = vmpackc.low %vm458, %vm458
  %vm475 = vmpackc.low %vm459, %vm459
  %vm476 = vmpackc.low %vm460, %vm460
  %vm477 = vmpackc.low %vm461, %vm461
  %vm478 = vmpackc.low %vm462, %vm462
  %vm479 = vmpackc.low %vm463, %vm463
  %vm480 = vmpackc.low %vm464, %vm464
  %vm481 = vmpackc.low %vm465, %vm465
  %vm482 = vmpackc.low %vm466, %vm466
  %vm483 = vmpackc.low %vm467, %vm467
  %vm484 = vmpackc.low %vm468, %vm468
  %v485 = vsel %vm469, 65537, 0
  %v486 = vsel %vm470, 65537, 0
  %v487 = vsel %vm471, 65537, 0
  %v488 = vsel %vm472, 65537, 0
  %v489 = vsel %vm473, 65537, 0
  %v490 = vsel %vm474, 65537, 0
  %v491 = vsel %vm475, 65537, 0
  %v492 = vsel %vm476, 65537, 0
  %v493 = vsel %vm477, 65537, 0
  %v494 = vsel %vm478, 65537, 0
  %v495 = vsel %vm479, 65537, 0
  %v496 = vsel %vm480, 65537, 0
  %v497 = vsel %vm481, 65537, 0
  %v498 = vsel %vm482, 65537, 0
  %v499 = vsel %vm483, 65537, 0
  %v500 = vsel %vm484, 65537, 0
  %v501 = vunpack.c.l.b16 %v485
  %v502 = vunpack.c.l.b16 %v486
  %v503 = vunpack.c.l.b16 %v487
  %v504 = vunpack.c.l.b16 %v488
  %v505 = vunpack.c.l.b16 %v489
  %v506 = vunpack.c.l.b16 %v490
  %v507 = vunpack.c.l.b16 %v491
  %v508 = vunpack.c.l.b16 %v492
  %v509 = vunpack.c.l.b16 %v493
  %v510 = vunpack.c.l.b16 %v494
  %v511 = vunpack.c.l.b16 %v495
  %v512 = vunpack.c.l.b16 %v496
  %v513 = vunpack.c.l.b16 %v497
  %v514 = vunpack.c.l.b16 %v498
  %v515 = vunpack.c.l.b16 %v499
  %v516 = vunpack.c.l.b16 %v500
  %v517 = vpack.c.b16 %v502, %v501
  %v518 = vpack.c.b16 %v504, %v503
  %v519 = vpack.c.b16 %v506, %v505
  %v520 = vpack.c.b16 %v508, %v507
  %v521 = vpack.c.b16 %v510, %v509
  %v522 = vpack.c.b16 %v512, %v511
  %v523 = vpack.c.b16 %v514, %v513
  %v524 = vpack.c.b16 %v516, %v515
  %vm525 = vsmask.f32 256
  %v527 = vshrl.u32 %v517, 16
  %v529 = vrot.slane %v527, 7
  %v530 = vshll.u32 %v517, 16
  %v532 = vor.u32 %v529, %v530
  %v534 = vshrl.u32 %v518, 16
  %v536 = vrot.slane %v534, 7
  %v537 = vshll.u32 %v518, 16
  %v539 = vor.u32 %v536, %v537
  %v540 = vsel %vm525, %v529, %v539
  %v542 = vshrl.u32 %v519, 16
  %v544 = vrot.slane %v542, 7
  %v545 = vshll.u32 %v519, 16
  %v547 = vor.u32 %v544, %v545
  %v548 = vsel %vm525, %v536, %v547
  %v550 = vshrl.u32 %v520, 16
  %v552 = vrot.slane %v550, 7
  %v553 = vshll.u32 %v520, 16
  %v555 = vor.u32 %v552, %v553
  %v556 = vsel %vm525, %v544, %v555
  %v558 = vshrl.u32 %v521, 16
  %v560 = vrot.slane %v558, 7
  %v561 = vshll.u32 %v521, 16
  %v563 = vor.u32 %v560, %v561
  %v564 = vsel %vm525, %v552, %v563
  %v566 = vshrl.u32 %v522, 16
  %v568 = vrot.slane %v566, 7
  %v569 = vshll.u32 %v522, 16
  %v571 = vor.u32 %v568, %v569
  %v572 = vsel %vm525, %v560, %v571
  %v574 = vshrl.u32 %v523, 16
  %v576 = vrot.slane %v574, 7
  %v577 = vshll.u32 %v523, 16
  %v579 = vor.u32 %v576, %v577
  %v580 = vsel %vm525, %v568, %v579
  %v582 = vshrl.u32 %v524, 16
  %v584 = vrot.slane %v582, 7
  %v585 = vshll.u32 %v524, 16
  %v587 = vor.u32 %v584, %v585
  %v588 = vsel %vm525, %v576, %v587
  %vm589 = vcmp.ne.s16.totalorder %v532, 0
  %vm590 = vcmp.ne.s16.totalorder %v540, 0
  %vm591 = vcmp.ne.s16.totalorder %v548, 0
  %vm592 = vcmp.ne.s16.totalorder %v556, 0
  %vm593 = vcmp.ne.s16.totalorder %v564, 0
  %vm594 = vcmp.ne.s16.totalorder %v572, 0
  %vm595 = vcmp.ne.s16.totalorder %v580, 0
  %vm596 = vcmp.ne.s16.totalorder %v588, 0
  %vm597 = vcmp.ne.s16.totalorder %v584, 0
  %v598 = vsel %vm589, 0, %v315
  %v599 = vsel %vm590, 0, %v249
  %v600 = vsel %vm591, 0, %v258
  %v601 = vsel %vm592, 0, %v267
  %v602 = vsel %vm593, 0, %v276
  %v603 = vsel %vm594, 0, %v285
  %v604 = vsel %vm595, 0, %v294
  %v605 = vsel %vm596, 0, %v303
  %v606 = vsel %vm597, 0, %v316
  %vm607 = vmor %vm168, %vm216
  %vm608 = vmor %vm169, %vm217
  %vm609 = vmor %vm170, %vm218
  %vm610 = vmor %vm171, %vm219
  %vm611 = vmor %vm172, %vm220
  %vm612 = vmor %vm173, %vm221
  %vm613 = vmor %vm174, %vm222
  %vm614 = vmor %vm175, %vm223
  %vm615 = vmor %vm176, %vm224
  %vm616 = vmor %vm177, %vm225
  %vm617 = vmor %vm178, %vm226
  %vm618 = vmor %vm179, %vm227
  %vm619 = vmor %vm180, %vm228
  %vm620 = vmor %vm181, %vm229
  %vm621 = vmor %vm182, %vm230
  %vm622 = vmor %vm183, %vm231
  %v623 = vsel %vm607, 1, 0
  %v624 = vsel %vm608, 1, 0
  %v625 = vsel %vm609, 1, 0
  %v626 = vsel %vm610, 1, 0
  %v627 = vsel %vm611, 1, 0
  %v628 = vsel %vm612, 1, 0
  %v629 = vsel %vm613, 1, 0
  %v630 = vsel %vm614, 1, 0
  %v631 = vsel %vm615, 1, 0
  %v632 = vsel %vm616, 1, 0
  %v633 = vsel %vm617, 1, 0
  %v634 = vsel %vm618, 1, 0
  %v635 = vsel %vm619, 1, 0
  %v636 = vsel %vm620, 1, 0
  %v637 = vsel %vm621, 1, 0
  %v638 = vsel %vm622, 1, 0
  %vm639 = vcmp.eq.s32.totalorder %v623, 1
  %vm640 = vcmp.eq.s32.totalorder %v624, 1
  %vm641 = vcmp.eq.s32.totalorder %v625, 1
  %vm642 = vcmp.eq.s32.totalorder %v626, 1
  %vm643 = vcmp.eq.s32.totalorder %v627, 1
  %vm644 = vcmp.eq.s32.totalorder %v628, 1
  %vm645 = vcmp.eq.s32.totalorder %v629, 1
  %vm646 = vcmp.eq.s32.totalorder %v630, 1
  %vm647 = vcmp.eq.s32.totalorder %v631, 1
  %vm648 = vcmp.eq.s32.totalorder %v632, 1
  %vm649 = vcmp.eq.s32.totalorder %v633, 1
  %vm650 = vcmp.eq.s32.totalorder %v634, 1
  %vm651 = vcmp.eq.s32.totalorder %v635, 1
  %vm652 = vcmp.eq.s32.totalorder %v636, 1
  %vm653 = vcmp.eq.s32.totalorder %v637, 1
  %vm654 = vcmp.eq.s32.totalorder %v638, 1
  %vm655 = vmpackc.low %vm639, %vm639
  %vm656 = vmpackc.low %vm640, %vm640
  %vm657 = vmpackc.low %vm641, %vm641
  %vm658 = vmpackc.low %vm642, %vm642
  %vm659 = vmpackc.low %vm643, %vm643
  %vm660 = vmpackc.low %vm644, %vm644
  %vm661 = vmpackc.low %vm645, %vm645
  %vm662 = vmpackc.low %vm646, %vm646
  %vm663 = vmpackc.low %vm647, %vm647
  %vm664 = vmpackc.low %vm648, %vm648
  %vm665 = vmpackc.low %vm649, %vm649
  %vm666 = vmpackc.low %vm650, %vm650
  %vm667 = vmpackc.low %vm651, %vm651
  %vm668 = vmpackc.low %vm652, %vm652
  %vm669 = vmpackc.low %vm653, %vm653
  %vm670 = vmpackc.low %vm654, %vm654
  %v671 = vsel %vm655, 65537, 0
  %v672 = vsel %vm656, 65537, 0
  %v673 = vsel %vm657, 65537, 0
  %v674 = vsel %vm658, 65537, 0
  %v675 = vsel %vm659, 65537, 0
  %v676 = vsel %vm660, 65537, 0
  %v677 = vsel %vm661, 65537, 0
  %v678 = vsel %vm662, 65537, 0
  %v679 = vsel %vm663, 65537, 0
  %v680 = vsel %vm664, 65537, 0
  %v681 = vsel %vm665, 65537, 0
  %v682 = vsel %vm666, 65537, 0
  %v683 = vsel %vm667, 65537, 0
  %v684 = vsel %vm668, 65537, 0
  %v685 = vsel %vm669, 65537, 0
  %v686 = vsel %vm670, 65537, 0
  %v687 = vunpack.c.l.b16 %v671
  %v688 = vunpack.c.l.b16 %v672
  %v689 = vunpack.c.l.b16 %v673
  %v690 = vunpack.c.l.b16 %v674
  %v691 = vunpack.c.l.b16 %v675
  %v692 = vunpack.c.l.b16 %v676
  %v693 = vunpack.c.l.b16 %v677
  %v694 = vunpack.c.l.b16 %v678
  %v695 = vunpack.c.l.b16 %v679
  %v696 = vunpack.c.l.b16 %v680
  %v697 = vunpack.c.l.b16 %v681
  %v698 = vunpack.c.l.b16 %v682
  %v699 = vunpack.c.l.b16 %v683
  %v700 = vunpack.c.l.b16 %v684
  %v701 = vunpack.c.l.b16 %v685
  %v702 = vunpack.c.l.b16 %v686
  %v703 = vpack.c.b16 %v688, %v687
  %v704 = vpack.c.b16 %v690, %v689
  %v705 = vpack.c.b16 %v692, %v691
  %v706 = vpack.c.b16 %v694, %v693
  %v707 = vpack.c.b16 %v696, %v695
  %v708 = vpack.c.b16 %v698, %v697
  %v709 = vpack.c.b16 %v700, %v699
  %v710 = vpack.c.b16 %v702, %v701
  %vm711 = vcmask 1040384
  %v712 = vrot.slane %v703, 7
  %v713 = vrot.slane %v704, 7
  %v714 = vsel %vm711, %v712, %v713
  %v715 = vrot.slane %v705, 7
  %v716 = vsel %vm711, %v713, %v715
  %v717 = vrot.slane %v706, 7
  %v718 = vsel %vm711, %v715, %v717
  %v719 = vrot.slane %v707, 7
  %v720 = vsel %vm711, %v717, %v719
  %v721 = vrot.slane %v708, 7
  %v722 = vsel %vm711, %v719, %v721
  %v723 = vrot.slane %v709, 7
  %v724 = vsel %vm711, %v721, %v723
  %v725 = vrot.slane %v710, 7
  %v726 = vsel %vm711, %v723, %v725
  %vm727 = vcmp.ne.s16.totalorder %v712, 0
  %vm728 = vcmp.ne.s16.totalorder %v714, 0
  %vm729 = vcmp.ne.s16.totalorder %v716, 0
  %vm730 = vcmp.ne.s16.totalorder %v718, 0
  %vm731 = vcmp.ne.s16.totalorder %v720, 0
  %vm732 = vcmp.ne.s16.totalorder %v722, 0
  %vm733 = vcmp.ne.s16.totalorder %v724, 0
  %vm734 = vcmp.ne.s16.totalorder %v726, 0
  %vm735 = vcmp.ne.s16.totalorder %v725, 0
  %v736 = vsel %vm727, 0, %v315
  %v737 = vsel %vm728, 0, %v249
  %v738 = vsel %vm729, 0, %v258
  %v739 = vsel %vm730, 0, %v267
  %v740 = vsel %vm731, 0, %v276
  %v741 = vsel %vm732, 0, %v285
  %v742 = vsel %vm733, 0, %v294
  %v743 = vsel %vm734, 0, %v303
  %v744 = vsel %vm735, 0, %v316
  %v745 = vsel %vm200, 1, 0
  %v746 = vsel %vm201, 1, 0
  %v747 = vsel %vm202, 1, 0
  %v748 = vsel %vm203, 1, 0
  %v749 = vsel %vm204, 1, 0
  %v750 = vsel %vm205, 1, 0
  %v751 = vsel %vm206, 1, 0
  %v752 = vsel %vm207, 1, 0
  %v753 = vsel %vm208, 1, 0
  %v754 = vsel %vm209, 1, 0
  %v755 = vsel %vm210, 1, 0
  %v756 = vsel %vm211, 1, 0
  %v757 = vsel %vm212, 1, 0
  %v758 = vsel %vm213, 1, 0
  %v759 = vsel %vm214, 1, 0
  %v760 = vsel %vm215, 1, 0
  %vm761 = vcmp.eq.s32.totalorder %v745, 1
  %vm762 = vcmp.eq.s32.totalorder %v746, 1
  %vm763 = vcmp.eq.s32.totalorder %v747, 1
  %vm764 = vcmp.eq.s32.totalorder %v748, 1
  %vm765 = vcmp.eq.s32.totalorder %v749, 1
  %vm766 = vcmp.eq.s32.totalorder %v750, 1
  %vm767 = vcmp.eq.s32.totalorder %v751, 1
  %vm768 = vcmp.eq.s32.totalorder %v752, 1
  %vm769 = vcmp.eq.s32.totalorder %v753, 1
  %vm770 = vcmp.eq.s32.totalorder %v754, 1
  %vm771 = vcmp.eq.s32.totalorder %v755, 1
  %vm772 = vcmp.eq.s32.totalorder %v756, 1
  %vm773 = vcmp.eq.s32.totalorder %v757, 1
  %vm774 = vcmp.eq.s32.totalorder %v758, 1
  %vm775 = vcmp.eq.s32.totalorder %v759, 1
  %vm776 = vcmp.eq.s32.totalorder %v760, 1
  %vm777 = vmpackc.low %vm761, %vm761
  %vm778 = vmpackc.low %vm762, %vm762
  %vm779 = vmpackc.low %vm763, %vm763
  %vm780 = vmpackc.low %vm764, %vm764
  %vm781 = vmpackc.low %vm765, %vm765
  %vm782 = vmpackc.low %vm766, %vm766
  %vm783 = vmpackc.low %vm767, %vm767
  %vm784 = vmpackc.low %vm768, %vm768
  %vm785 = vmpackc.low %vm769, %vm769
  %vm786 = vmpackc.low %vm770, %vm770
  %vm787 = vmpackc.low %vm771, %vm771
  %vm788 = vmpackc.low %vm772, %vm772
  %vm789 = vmpackc.low %vm773, %vm773
  %vm790 = vmpackc.low %vm774, %vm774
  %vm791 = vmpackc.low %vm775, %vm775
  %vm792 = vmpackc.low %vm776, %vm776
  %v793 = vsel %vm777, 65537, 0
  %v794 = vsel %vm778, 65537, 0
  %v795 = vsel %vm779, 65537, 0
  %v796 = vsel %vm780, 65537, 0
  %v797 = vsel %vm781, 65537, 0
  %v798 = vsel %vm782, 65537, 0
  %v799 = vsel %vm783, 65537, 0
  %v800 = vsel %vm784, 65537, 0
  %v801 = vsel %vm785, 65537, 0
  %v802 = vsel %vm786, 65537, 0
  %v803 = vsel %vm787, 65537, 0
  %v804 = vsel %vm788, 65537, 0
  %v805 = vsel %vm789, 65537, 0
  %v806 = vsel %vm790, 65537, 0
  %v807 = vsel %vm791, 65537, 0
  %v808 = vsel %vm792, 65537, 0
  %v809 = vunpack.c.l.b16 %v793
  %v810 = vunpack.c.l.b16 %v794
  %v811 = vunpack.c.l.b16 %v795
  %v812 = vunpack.c.l.b16 %v796
  %v813 = vunpack.c.l.b16 %v797
  %v814 = vunpack.c.l.b16 %v798
  %v815 = vunpack.c.l.b16 %v799
  %v816 = vunpack.c.l.b16 %v800
  %v817 = vunpack.c.l.b16 %v801
  %v818 = vunpack.c.l.b16 %v802
  %v819 = vunpack.c.l.b16 %v803
  %v820 = vunpack.c.l.b16 %v804
  %v821 = vunpack.c.l.b16 %v805
  %v822 = vunpack.c.l.b16 %v806
  %v823 = vunpack.c.l.b16 %v807
  %v824 = vunpack.c.l.b16 %v808
  %v825 = vpack.c.b16 %v809, %v809
  %v826 = vpack.c.b16 %v811, %v810
  %v827 = vpack.c.b16 %v813, %v812
  %v828 = vpack.c.b16 %v815, %v814
  %v829 = vpack.c.b16 %v817, %v816
  %v830 = vpack.c.b16 %v819, %v818
  %v831 = vpack.c.b16 %v821, %v820
  %v832 = vpack.c.b16 %v823, %v822
  %v833 = vpack.c.b16 %v824, %v824
  %vm834 = vcmp.ne.s16.totalorder %v825, 0
  %vm835 = vcmp.ne.s16.totalorder %v826, 0
  %vm836 = vcmp.ne.s16.totalorder %v827, 0
  %vm837 = vcmp.ne.s16.totalorder %v828, 0
  %vm838 = vcmp.ne.s16.totalorder %v829, 0
  %vm839 = vcmp.ne.s16.totalorder %v830, 0
  %vm840 = vcmp.ne.s16.totalorder %v831, 0
  %vm841 = vcmp.ne.s16.totalorder %v832, 0
  %vm842 = vcmp.ne.s16.totalorder %v833, 0
  %v843 = vsel %vm834, 0, %v315
  %v844 = vsel %vm835, 0, %v249
  %v845 = vsel %vm836, 0, %v258
  %v846 = vsel %vm837, 0, %v267
  %v847 = vsel %vm838, 0, %v276
  %v848 = vsel %vm839, 0, %v285
  %v849 = vsel %vm840, 0, %v294
  %v850 = vsel %vm841, 0, %v303
  %v851 = vsel %vm842, 0, %v316
  %v852 = vsel %vm216, 1, 0
  %v853 = vsel %vm217, 1, 0
  %v854 = vsel %vm218, 1, 0
  %v855 = vsel %vm219, 1, 0
  %v856 = vsel %vm220, 1, 0
  %v857 = vsel %vm221, 1, 0
  %v858 = vsel %vm222, 1, 0
  %v859 = vsel %vm223, 1, 0
  %v860 = vsel %vm224, 1, 0
  %v861 = vsel %vm225, 1, 0
  %v862 = vsel %vm226, 1, 0
  %v863 = vsel %vm227, 1, 0
  %v864 = vsel %vm228, 1, 0
  %v865 = vsel %vm229, 1, 0
  %v866 = vsel %vm230, 1, 0
  %v867 = vsel %vm231, 1, 0
  %vm868 = vcmp.eq.s32.totalorder %v852, 1
  %vm869 = vcmp.eq.s32.totalorder %v853, 1
  %vm870 = vcmp.eq.s32.totalorder %v854, 1
  %vm871 = vcmp.eq.s32.totalorder %v855, 1
  %vm872 = vcmp.eq.s32.totalorder %v856, 1
  %vm873 = vcmp.eq.s32.totalorder %v857, 1
  %vm874 = vcmp.eq.s32.totalorder %v858, 1
  %vm875 = vcmp.eq.s32.totalorder %v859, 1
  %vm876 = vcmp.eq.s32.totalorder %v860, 1
  %vm877 = vcmp.eq.s32.totalorder %v861, 1
  %vm878 = vcmp.eq.s32.totalorder %v862, 1
  %vm879 = vcmp.eq.s32.totalorder %v863, 1
  %vm880 = vcmp.eq.s32.totalorder %v864, 1
  %vm881 = vcmp.eq.s32.totalorder %v865, 1
  %vm882 = vcmp.eq.s32.totalorder %v866, 1
  %vm883 = vcmp.eq.s32.totalorder %v867, 1
  %vm884 = vmpackc.low %vm868, %vm868
  %vm885 = vmpackc.low %vm869, %vm869
  %vm886 = vmpackc.low %vm870, %vm870
  %vm887 = vmpackc.low %vm871, %vm871
  %vm888 = vmpackc.low %vm872, %vm872
  %vm889 = vmpackc.low %vm873, %vm873
  %vm890 = vmpackc.low %vm874, %vm874
  %vm891 = vmpackc.low %vm875, %vm875
  %vm892 = vmpackc.low %vm876, %vm876
  %vm893 = vmpackc.low %vm877, %vm877
  %vm894 = vmpackc.low %vm878, %vm878
  %vm895 = vmpackc.low %vm879, %vm879
  %vm896 = vmpackc.low %vm880, %vm880
  %vm897 = vmpackc.low %vm881, %vm881
  %vm898 = vmpackc.low %vm882, %vm882
  %vm899 = vmpackc.low %vm883, %vm883
  %v900 = vsel %vm884, 65537, 0
  %v901 = vsel %vm885, 65537, 0
  %v902 = vsel %vm886, 65537, 0
  %v903 = vsel %vm887, 65537, 0
  %v904 = vsel %vm888, 65537, 0
  %v905 = vsel %vm889, 65537, 0
  %v906 = vsel %vm890, 65537, 0
  %v907 = vsel %vm891, 65537, 0
  %v908 = vsel %vm892, 65537, 0
  %v909 = vsel %vm893, 65537, 0
  %v910 = vsel %vm894, 65537, 0
  %v911 = vsel %vm895, 65537, 0
  %v912 = vsel %vm896, 65537, 0
  %v913 = vsel %vm897, 65537, 0
  %v914 = vsel %vm898, 65537, 0
  %v915 = vsel %vm899, 65537, 0
  %v916 = vunpack.c.l.b16 %v900
  %v917 = vunpack.c.l.b16 %v901
  %v918 = vunpack.c.l.b16 %v902
  %v919 = vunpack.c.l.b16 %v903
  %v920 = vunpack.c.l.b16 %v904
  %v921 = vunpack.c.l.b16 %v905
  %v922 = vunpack.c.l.b16 %v906
  %v923 = vunpack.c.l.b16 %v907
  %v924 = vunpack.c.l.b16 %v908
  %v925 = vunpack.c.l.b16 %v909
  %v926 = vunpack.c.l.b16 %v910
  %v927 = vunpack.c.l.b16 %v911
  %v928 = vunpack.c.l.b16 %v912
  %v929 = vunpack.c.l.b16 %v913
  %v930 = vunpack.c.l.b16 %v914
  %v931 = vunpack.c.l.b16 %v915
  %v932 = vpack.c.b16 %v917, %v916
  %v933 = vpack.c.b16 %v919, %v918
  %v934 = vpack.c.b16 %v921, %v920
  %v935 = vpack.c.b16 %v923, %v922
  %v936 = vpack.c.b16 %v925, %v924
  %v937 = vpack.c.b16 %v927, %v926
  %v938 = vpack.c.b16 %v929, %v928
  %v939 = vpack.c.b16 %v931, %v930
  %v940 = vrot.slane %v932, 3
  %v941 = vrot.slane %v933, 3
  %v942 = vsel %vm313, %v940, %v941
  %v943 = vrot.slane %v934, 3
  %v944 = vsel %vm313, %v941, %v943
  %v945 = vrot.slane %v935, 3
  %v946 = vsel %vm313, %v943, %v945
  %v947 = vrot.slane %v936, 3
  %v948 = vsel %vm313, %v945, %v947
  %v949 = vrot.slane %v937, 3
  %v950 = vsel %vm313, %v947, %v949
  %v951 = vrot.slane %v938, 3
  %v952 = vsel %vm313, %v949, %v951
  %v953 = vrot.slane %v939, 3
  %v954 = vsel %vm313, %v951, %v953
  %vm955 = vcmp.ne.s16.totalorder %v940, 0
  %vm956 = vcmp.ne.s16.totalorder %v942, 0
  %vm957 = vcmp.ne.s16.totalorder %v944, 0
  %vm958 = vcmp.ne.s16.totalorder %v946, 0
  %vm959 = vcmp.ne.s16.totalorder %v948, 0
  %vm960 = vcmp.ne.s16.totalorder %v950, 0
  %vm961 = vcmp.ne.s16.totalorder %v952, 0
  %vm962 = vcmp.ne.s16.totalorder %v954, 0
  %vm963 = vcmp.ne.s16.totalorder %v953, 0
  %v964 = vsel %vm955, 0, %v315
  %v965 = vsel %vm956, 0, %v249
  %v966 = vsel %vm957, 0, %v258
  %v967 = vsel %vm958, 0, %v267
  %v968 = vsel %vm959, 0, %v276
  %v969 = vsel %vm960, 0, %v285
  %v970 = vsel %vm961, 0, %v294
  %v971 = vsel %vm962, 0, %v303
  %v972 = vsel %vm963, 0, %v316
  %vm973 = vmor %vm184, %vm200
  %vm974 = vmor %vm185, %vm201
  %vm975 = vmor %vm186, %vm202
  %vm976 = vmor %vm187, %vm203
  %vm977 = vmor %vm188, %vm204
  %vm978 = vmor %vm189, %vm205
  %vm979 = vmor %vm190, %vm206
  %vm980 = vmor %vm191, %vm207
  %vm981 = vmor %vm192, %vm208
  %vm982 = vmor %vm193, %vm209
  %vm983 = vmor %vm194, %vm210
  %vm984 = vmor %vm195, %vm211
  %vm985 = vmor %vm196, %vm212
  %vm986 = vmor %vm197, %vm213
  %vm987 = vmor %vm198, %vm214
  %vm988 = vmor %vm199, %vm215
  %v989 = vsel %vm973, 1, 0
  %v990 = vsel %vm974, 1, 0
  %v991 = vsel %vm975, 1, 0
  %v992 = vsel %vm976, 1, 0
  %v993 = vsel %vm977, 1, 0
  %v994 = vsel %vm978, 1, 0
  %v995 = vsel %vm979, 1, 0
  %v996 = vsel %vm980, 1, 0
  %v997 = vsel %vm981, 1, 0
  %v998 = vsel %vm982, 1, 0
  %v999 = vsel %vm983, 1, 0
  %v1000 = vsel %vm984, 1, 0
  %v1001 = vsel %vm985, 1, 0
  %v1002 = vsel %vm986, 1, 0
  %v1003 = vsel %vm987, 1, 0
  %v1004 = vsel %vm988, 1, 0
  %vm1005 = vcmp.eq.s32.totalorder %v989, 1
  %vm1006 = vcmp.eq.s32.totalorder %v990, 1
  %vm1007 = vcmp.eq.s32.totalorder %v991, 1
  %vm1008 = vcmp.eq.s32.totalorder %v992, 1
  %vm1009 = vcmp.eq.s32.totalorder %v993, 1
  %vm1010 = vcmp.eq.s32.totalorder %v994, 1
  %vm1011 = vcmp.eq.s32.totalorder %v995, 1
  %vm1012 = vcmp.eq.s32.totalorder %v996, 1
  %vm1013 = vcmp.eq.s32.totalorder %v997, 1
  %vm1014 = vcmp.eq.s32.totalorder %v998, 1
  %vm1015 = vcmp.eq.s32.totalorder %v999, 1
  %vm1016 = vcmp.eq.s32.totalorder %v1000, 1
  %vm1017 = vcmp.eq.s32.totalorder %v1001, 1
  %vm1018 = vcmp.eq.s32.totalorder %v1002, 1
  %vm1019 = vcmp.eq.s32.totalorder %v1003, 1
  %vm1020 = vcmp.eq.s32.totalorder %v1004, 1
  %vm1021 = vmpackc.low %vm1005, %vm1005
  %vm1022 = vmpackc.low %vm1006, %vm1006
  %vm1023 = vmpackc.low %vm1007, %vm1007
  %vm1024 = vmpackc.low %vm1008, %vm1008
  %vm1025 = vmpackc.low %vm1009, %vm1009
  %vm1026 = vmpackc.low %vm1010, %vm1010
  %vm1027 = vmpackc.low %vm1011, %vm1011
  %vm1028 = vmpackc.low %vm1012, %vm1012
  %vm1029 = vmpackc.low %vm1013, %vm1013
  %vm1030 = vmpackc.low %vm1014, %vm1014
  %vm1031 = vmpackc.low %vm1015, %vm1015
  %vm1032 = vmpackc.low %vm1016, %vm1016
  %vm1033 = vmpackc.low %vm1017, %vm1017
  %vm1034 = vmpackc.low %vm1018, %vm1018
  %vm1035 = vmpackc.low %vm1019, %vm1019
  %vm1036 = vmpackc.low %vm1020, %vm1020
  %v1037 = vsel %vm1021, 65537, 0
  %v1038 = vsel %vm1022, 65537, 0
  %v1039 = vsel %vm1023, 65537, 0
  %v1040 = vsel %vm1024, 65537, 0
  %v1041 = vsel %vm1025, 65537, 0
  %v1042 = vsel %vm1026, 65537, 0
  %v1043 = vsel %vm1027, 65537, 0
  %v1044 = vsel %vm1028, 65537, 0
  %v1045 = vsel %vm1029, 65537, 0
  %v1046 = vsel %vm1030, 65537, 0
  %v1047 = vsel %vm1031, 65537, 0
  %v1048 = vsel %vm1032, 65537, 0
  %v1049 = vsel %vm1033, 65537, 0
  %v1050 = vsel %vm1034, 65537, 0
  %v1051 = vsel %vm1035, 65537, 0
  %v1052 = vsel %vm1036, 65537, 0
  %v1053 = vunpack.c.l.b16 %v1037
  %v1054 = vunpack.c.l.b16 %v1038
  %v1055 = vunpack.c.l.b16 %v1039
  %v1056 = vunpack.c.l.b16 %v1040
  %v1057 = vunpack.c.l.b16 %v1041
  %v1058 = vunpack.c.l.b16 %v1042
  %v1059 = vunpack.c.l.b16 %v1043
  %v1060 = vunpack.c.l.b16 %v1044
  %v1061 = vunpack.c.l.b16 %v1045
  %v1062 = vunpack.c.l.b16 %v1046
  %v1063 = vunpack.c.l.b16 %v1047
  %v1064 = vunpack.c.l.b16 %v1048
  %v1065 = vunpack.c.l.b16 %v1049
  %v1066 = vunpack.c.l.b16 %v1050
  %v1067 = vunpack.c.l.b16 %v1051
  %v1068 = vunpack.c.l.b16 %v1052
  %v1069 = vpack.c.b16 %v1054, %v1053
  %v1070 = vpack.c.b16 %v1056, %v1055
  %v1071 = vpack.c.b16 %v1058, %v1057
  %v1072 = vpack.c.b16 %v1060, %v1059
  %v1073 = vpack.c.b16 %v1062, %v1061
  %v1074 = vpack.c.b16 %v1064, %v1063
  %v1075 = vpack.c.b16 %v1066, %v1065
  %v1076 = vpack.c.b16 %v1068, %v1067
  %vm1077 = vcmp.ne.s16.totalorder %v1069, 0
  %vm1078 = vcmp.ne.s16.totalorder %v1070, 0
  %vm1079 = vcmp.ne.s16.totalorder %v1071, 0
  %vm1080 = vcmp.ne.s16.totalorder %v1072, 0
  %vm1081 = vcmp.ne.s16.totalorder %v1073, 0
  %vm1082 = vcmp.ne.s16.totalorder %v1074, 0
  %vm1083 = vcmp.ne.s16.totalorder %v1075, 0
  %vm1084 = vcmp.ne.s16.totalorder %v1076, 0
  %v1085 = vsel %vm1077, 0, %v249
  %v1086 = vsel %vm1078, 0, %v258
  %v1087 = vsel %vm1079, 0, %v267
  %v1088 = vsel %vm1080, 0, %v276
  %v1089 = vsel %vm1081, 0, %v285
  %v1090 = vsel %vm1082, 0, %v294
  %v1091 = vsel %vm1083, 0, %v303
  %v1092 = vsel %vm1084, 0, %v316
  %v1093 = vsel %vm184, 1, 0
  %v1094 = vsel %vm185, 1, 0
  %v1095 = vsel %vm186, 1, 0
  %v1096 = vsel %vm187, 1, 0
  %v1097 = vsel %vm188, 1, 0
  %v1098 = vsel %vm189, 1, 0
  %v1099 = vsel %vm190, 1, 0
  %v1100 = vsel %vm191, 1, 0
  %v1101 = vsel %vm192, 1, 0
  %v1102 = vsel %vm193, 1, 0
  %v1103 = vsel %vm194, 1, 0
  %v1104 = vsel %vm195, 1, 0
  %v1105 = vsel %vm196, 1, 0
  %v1106 = vsel %vm197, 1, 0
  %v1107 = vsel %vm198, 1, 0
  %v1108 = vsel %vm199, 1, 0
  %vm1109 = vcmp.eq.s32.totalorder %v1093, 1
  %vm1110 = vcmp.eq.s32.totalorder %v1094, 1
  %vm1111 = vcmp.eq.s32.totalorder %v1095, 1
  %vm1112 = vcmp.eq.s32.totalorder %v1096, 1
  %vm1113 = vcmp.eq.s32.totalorder %v1097, 1
  %vm1114 = vcmp.eq.s32.totalorder %v1098, 1
  %vm1115 = vcmp.eq.s32.totalorder %v1099, 1
  %vm1116 = vcmp.eq.s32.totalorder %v1100, 1
  %vm1117 = vcmp.eq.s32.totalorder %v1101, 1
  %vm1118 = vcmp.eq.s32.totalorder %v1102, 1
  %vm1119 = vcmp.eq.s32.totalorder %v1103, 1
  %vm1120 = vcmp.eq.s32.totalorder %v1104, 1
  %vm1121 = vcmp.eq.s32.totalorder %v1105, 1
  %vm1122 = vcmp.eq.s32.totalorder %v1106, 1
  %vm1123 = vcmp.eq.s32.totalorder %v1107, 1
  %vm1124 = vcmp.eq.s32.totalorder %v1108, 1
  %vm1125 = vmpackc.low %vm1109, %vm1109
  %vm1126 = vmpackc.low %vm1110, %vm1110
  %vm1127 = vmpackc.low %vm1111, %vm1111
  %vm1128 = vmpackc.low %vm1112, %vm1112
  %vm1129 = vmpackc.low %vm1113, %vm1113
  %vm1130 = vmpackc.low %vm1114, %vm1114
  %vm1131 = vmpackc.low %vm1115, %vm1115
  %vm1132 = vmpackc.low %vm1116, %vm1116
  %vm1133 = vmpackc.low %vm1117, %vm1117
  %vm1134 = vmpackc.low %vm1118, %vm1118
  %vm1135 = vmpackc.low %vm1119, %vm1119
  %vm1136 = vmpackc.low %vm1120, %vm1120
  %vm1137 = vmpackc.low %vm1121, %vm1121
  %vm1138 = vmpackc.low %vm1122, %vm1122
  %vm1139 = vmpackc.low %vm1123, %vm1123
  %vm1140 = vmpackc.low %vm1124, %vm1124
  %v1141 = vsel %vm1125, 65537, 0
  %v1142 = vsel %vm1126, 65537, 0
  %v1143 = vsel %vm1127, 65537, 0
  %v1144 = vsel %vm1128, 65537, 0
  %v1145 = vsel %vm1129, 65537, 0
  %v1146 = vsel %vm1130, 65537, 0
  %v1147 = vsel %vm1131, 65537, 0
  %v1148 = vsel %vm1132, 65537, 0
  %v1149 = vsel %vm1133, 65537, 0
  %v1150 = vsel %vm1134, 65537, 0
  %v1151 = vsel %vm1135, 65537, 0
  %v1152 = vsel %vm1136, 65537, 0
  %v1153 = vsel %vm1137, 65537, 0
  %v1154 = vsel %vm1138, 65537, 0
  %v1155 = vsel %vm1139, 65537, 0
  %v1156 = vsel %vm1140, 65537, 0
  %v1157 = vunpack.c.l.b16 %v1141
  %v1158 = vunpack.c.l.b16 %v1142
  %v1159 = vunpack.c.l.b16 %v1143
  %v1160 = vunpack.c.l.b16 %v1144
  %v1161 = vunpack.c.l.b16 %v1145
  %v1162 = vunpack.c.l.b16 %v1146
  %v1163 = vunpack.c.l.b16 %v1147
  %v1164 = vunpack.c.l.b16 %v1148
  %v1165 = vunpack.c.l.b16 %v1149
  %v1166 = vunpack.c.l.b16 %v1150
  %v1167 = vunpack.c.l.b16 %v1151
  %v1168 = vunpack.c.l.b16 %v1152
  %v1169 = vunpack.c.l.b16 %v1153
  %v1170 = vunpack.c.l.b16 %v1154
  %v1171 = vunpack.c.l.b16 %v1155
  %v1172 = vunpack.c.l.b16 %v1156
  %v1173 = vpack.c.b16 %v1158, %v1157
  %v1174 = vpack.c.b16 %v1160, %v1159
  %v1175 = vpack.c.b16 %v1162, %v1161
  %v1176 = vpack.c.b16 %v1164, %v1163
  %v1177 = vpack.c.b16 %v1166, %v1165
  %v1178 = vpack.c.b16 %v1168, %v1167
  %v1179 = vpack.c.b16 %v1170, %v1169
  %v1180 = vpack.c.b16 %v1172, %v1171
  %v1182 = vshrl.u32 %v1173, 16
  %v1184 = vrot.slane %v1182, 7
  %v1185 = vshll.u32 %v1173, 16
  %v1187 = vor.u32 %v1184, %v1185
  %v1189 = vshrl.u32 %v1174, 16
  %v1191 = vrot.slane %v1189, 7
  %v1192 = vshll.u32 %v1174, 16
  %v1194 = vor.u32 %v1191, %v1192
  %v1195 = vsel %vm525, %v1184, %v1194
  %v1197 = vshrl.u32 %v1175, 16
  %v1199 = vrot.slane %v1197, 7
  %v1200 = vshll.u32 %v1175, 16
  %v1202 = vor.u32 %v1199, %v1200
  %v1203 = vsel %vm525, %v1191, %v1202
  %v1205 = vshrl.u32 %v1176, 16
  %v1207 = vrot.slane %v1205, 7
  %v1208 = vshll.u32 %v1176, 16
  %v1210 = vor.u32 %v1207, %v1208
  %v1211 = vsel %vm525, %v1199, %v1210
  %v1213 = vshrl.u32 %v1177, 16
  %v1215 = vrot.slane %v1213, 7
  %v1216 = vshll.u32 %v1177, 16
  %v1218 = vor.u32 %v1215, %v1216
  %v1219 = vsel %vm525, %v1207, %v1218
  %v1221 = vshrl.u32 %v1178, 16
  %v1223 = vrot.slane %v1221, 7
  %v1224 = vshll.u32 %v1178, 16
  %v1226 = vor.u32 %v1223, %v1224
  %v1227 = vsel %vm525, %v1215, %v1226
  %v1229 = vshrl.u32 %v1179, 16
  %v1231 = vrot.slane %v1229, 7
  %v1232 = vshll.u32 %v1179, 16
  %v1234 = vor.u32 %v1231, %v1232
  %v1235 = vsel %vm525, %v1223, %v1234
  %v1237 = vshrl.u32 %v1180, 16
  %v1239 = vrot.slane %v1237, 7
  %v1240 = vshll.u32 %v1180, 16
  %v1242 = vor.u32 %v1239, %v1240
  %v1243 = vsel %vm525, %v1231, %v1242
  %vm1244 = vcmp.ne.s16.totalorder %v1187, 0
  %vm1245 = vcmp.ne.s16.totalorder %v1195, 0
  %vm1246 = vcmp.ne.s16.totalorder %v1203, 0
  %vm1247 = vcmp.ne.s16.totalorder %v1211, 0
  %vm1248 = vcmp.ne.s16.totalorder %v1219, 0
  %vm1249 = vcmp.ne.s16.totalorder %v1227, 0
  %vm1250 = vcmp.ne.s16.totalorder %v1235, 0
  %vm1251 = vcmp.ne.s16.totalorder %v1243, 0
  %v1252 = vsel %vm1244, 0, %v249
  %v1253 = vsel %vm1245, 0, %v258
  %v1254 = vsel %vm1246, 0, %v267
  %v1255 = vsel %vm1247, 0, %v276
  %v1256 = vsel %vm1248, 0, %v285
  %v1257 = vsel %vm1249, 0, %v294
  %v1258 = vsel %vm1250, 0, %v303
  %v1259 = vsel %vm1251, 0, %v316
  %vm1260 = vmor %vm184, %vm216
  %vm1261 = vmor %vm185, %vm217
  %vm1262 = vmor %vm186, %vm218
  %vm1263 = vmor %vm187, %vm219
  %vm1264 = vmor %vm188, %vm220
  %vm1265 = vmor %vm189, %vm221
  %vm1266 = vmor %vm190, %vm222
  %vm1267 = vmor %vm191, %vm223
  %vm1268 = vmor %vm192, %vm224
  %vm1269 = vmor %vm193, %vm225
  %vm1270 = vmor %vm194, %vm226
  %vm1271 = vmor %vm195, %vm227
  %vm1272 = vmor %vm196, %vm228
  %vm1273 = vmor %vm197, %vm229
  %vm1274 = vmor %vm198, %vm230
  %vm1275 = vmor %vm199, %vm231
  %v1276 = vsel %vm1260, 1, 0
  %v1277 = vsel %vm1261, 1, 0
  %v1278 = vsel %vm1262, 1, 0
  %v1279 = vsel %vm1263, 1, 0
  %v1280 = vsel %vm1264, 1, 0
  %v1281 = vsel %vm1265, 1, 0
  %v1282 = vsel %vm1266, 1, 0
  %v1283 = vsel %vm1267, 1, 0
  %v1284 = vsel %vm1268, 1, 0
  %v1285 = vsel %vm1269, 1, 0
  %v1286 = vsel %vm1270, 1, 0
  %v1287 = vsel %vm1271, 1, 0
  %v1288 = vsel %vm1272, 1, 0
  %v1289 = vsel %vm1273, 1, 0
  %v1290 = vsel %vm1274, 1, 0
  %v1291 = vsel %vm1275, 1, 0
  %vm1292 = vcmp.eq.s32.totalorder %v1276, 1
  %vm1293 = vcmp.eq.s32.totalorder %v1277, 1
  %vm1294 = vcmp.eq.s32.totalorder %v1278, 1
  %vm1295 = vcmp.eq.s32.totalorder %v1279, 1
  %vm1296 = vcmp.eq.s32.totalorder %v1280, 1
  %vm1297 = vcmp.eq.s32.totalorder %v1281, 1
  %vm1298 = vcmp.eq.s32.totalorder %v1282, 1
  %vm1299 = vcmp.eq.s32.totalorder %v1283, 1
  %vm1300 = vcmp.eq.s32.totalorder %v1284, 1
  %vm1301 = vcmp.eq.s32.totalorder %v1285, 1
  %vm1302 = vcmp.eq.s32.totalorder %v1286, 1
  %vm1303 = vcmp.eq.s32.totalorder %v1287, 1
  %vm1304 = vcmp.eq.s32.totalorder %v1288, 1
  %vm1305 = vcmp.eq.s32.totalorder %v1289, 1
  %vm1306 = vcmp.eq.s32.totalorder %v1290, 1
  %vm1307 = vcmp.eq.s32.totalorder %v1291, 1
  %vm1308 = vmpackc.low %vm1292, %vm1292
  %vm1309 = vmpackc.low %vm1293, %vm1293
  %vm1310 = vmpackc.low %vm1294, %vm1294
  %vm1311 = vmpackc.low %vm1295, %vm1295
  %vm1312 = vmpackc.low %vm1296, %vm1296
  %vm1313 = vmpackc.low %vm1297, %vm1297
  %vm1314 = vmpackc.low %vm1298, %vm1298
  %vm1315 = vmpackc.low %vm1299, %vm1299
  %vm1316 = vmpackc.low %vm1300, %vm1300
  %vm1317 = vmpackc.low %vm1301, %vm1301
  %vm1318 = vmpackc.low %vm1302, %vm1302
  %vm1319 = vmpackc.low %vm1303, %vm1303
  %vm1320 = vmpackc.low %vm1304, %vm1304
  %vm1321 = vmpackc.low %vm1305, %vm1305
  %vm1322 = vmpackc.low %vm1306, %vm1306
  %vm1323 = vmpackc.low %vm1307, %vm1307
  %v1324 = vsel %vm1308, 65537, 0
  %v1325 = vsel %vm1309, 65537, 0
  %v1326 = vsel %vm1310, 65537, 0
  %v1327 = vsel %vm1311, 65537, 0
  %v1328 = vsel %vm1312, 65537, 0
  %v1329 = vsel %vm1313, 65537, 0
  %v1330 = vsel %vm1314, 65537, 0
  %v1331 = vsel %vm1315, 65537, 0
  %v1332 = vsel %vm1316, 65537, 0
  %v1333 = vsel %vm1317, 65537, 0
  %v1334 = vsel %vm1318, 65537, 0
  %v1335 = vsel %vm1319, 65537, 0
  %v1336 = vsel %vm1320, 65537, 0
  %v1337 = vsel %vm1321, 65537, 0
  %v1338 = vsel %vm1322, 65537, 0
  %v1339 = vsel %vm1323, 65537, 0
  %v1340 = vunpack.c.l.b16 %v1324
  %v1341 = vunpack.c.l.b16 %v1325
  %v1342 = vunpack.c.l.b16 %v1326
  %v1343 = vunpack.c.l.b16 %v1327
  %v1344 = vunpack.c.l.b16 %v1328
  %v1345 = vunpack.c.l.b16 %v1329
  %v1346 = vunpack.c.l.b16 %v1330
  %v1347 = vunpack.c.l.b16 %v1331
  %v1348 = vunpack.c.l.b16 %v1332
  %v1349 = vunpack.c.l.b16 %v1333
  %v1350 = vunpack.c.l.b16 %v1334
  %v1351 = vunpack.c.l.b16 %v1335
  %v1352 = vunpack.c.l.b16 %v1336
  %v1353 = vunpack.c.l.b16 %v1337
  %v1354 = vunpack.c.l.b16 %v1338
  %v1355 = vunpack.c.l.b16 %v1339
  %v1356 = vpack.c.b16 %v1341, %v1340
  %v1357 = vpack.c.b16 %v1343, %v1342
  %v1358 = vpack.c.b16 %v1345, %v1344
  %v1359 = vpack.c.b16 %v1347, %v1346
  %v1360 = vpack.c.b16 %v1349, %v1348
  %v1361 = vpack.c.b16 %v1351, %v1350
  %v1362 = vpack.c.b16 %v1353, %v1352
  %v1363 = vpack.c.b16 %v1355, %v1354
  %v1364 = vrot.slane %v1356, 7
  %v1365 = vrot.slane %v1357, 7
  %v1366 = vsel %vm711, %v1364, %v1365
  %v1367 = vrot.slane %v1358, 7
  %v1368 = vsel %vm711, %v1365, %v1367
  %v1369 = vrot.slane %v1359, 7
  %v1370 = vsel %vm711, %v1367, %v1369
  %v1371 = vrot.slane %v1360, 7
  %v1372 = vsel %vm711, %v1369, %v1371
  %v1373 = vrot.slane %v1361, 7
  %v1374 = vsel %vm711, %v1371, %v1373
  %v1375 = vrot.slane %v1362, 7
  %v1376 = vsel %vm711, %v1373, %v1375
  %v1377 = vrot.slane %v1363, 7
  %v1378 = vsel %vm711, %v1375, %v1377
  %vm1379 = vcmp.ne.s16.totalorder %v1364, 0
  %vm1380 = vcmp.ne.s16.totalorder %v1366, 0
  %vm1381 = vcmp.ne.s16.totalorder %v1368, 0
  %vm1382 = vcmp.ne.s16.totalorder %v1370, 0
  %vm1383 = vcmp.ne.s16.totalorder %v1372, 0
  %vm1384 = vcmp.ne.s16.totalorder %v1374, 0
  %vm1385 = vcmp.ne.s16.totalorder %v1376, 0
  %vm1386 = vcmp.ne.s16.totalorder %v1378, 0
  %v1387 = vsel %vm1379, 0, %v249
  %v1388 = vsel %vm1380, 0, %v258
  %v1389 = vsel %vm1381, 0, %v267
  %v1390 = vsel %vm1382, 0, %v276
  %v1391 = vsel %vm1383, 0, %v285
  %v1392 = vsel %vm1384, 0, %v294
  %v1393 = vsel %vm1385, 0, %v303
  %v1394 = vsel %vm1386, 0, %v316
  %vm1395 = vsmask.f32 7424
  %v1397 = vshrl.u32 %v598, 16
  %v1399 = vshll.u32 %v598, 16
  %v1401 = vrot.slane %v1399, 1
  %v1402 = vor.u32 %v1397, %v1401
  %v1404 = vshll.u32 %v599, 16
  %v1406 = vrot.slane %v1404, 1
  %v1407 = vsel %vm1395, %v1402, %v1406
  %v1408 = vshrl.u32 %v599, 16
  %v1410 = vor.u32 %v1408, %v1406
  %v1412 = vshll.u32 %v600, 16
  %v1414 = vrot.slane %v1412, 1
  %v1415 = vsel %vm1395, %v1410, %v1414
  %v1416 = vshrl.u32 %v600, 16
  %v1418 = vor.u32 %v1416, %v1414
  %v1420 = vshll.u32 %v601, 16
  %v1422 = vrot.slane %v1420, 1
  %v1423 = vsel %vm1395, %v1418, %v1422
  %v1424 = vshrl.u32 %v601, 16
  %v1426 = vor.u32 %v1424, %v1422
  %v1428 = vshll.u32 %v602, 16
  %v1430 = vrot.slane %v1428, 1
  %v1431 = vsel %vm1395, %v1426, %v1430
  %v1432 = vshrl.u32 %v602, 16
  %v1434 = vor.u32 %v1432, %v1430
  %v1436 = vshll.u32 %v603, 16
  %v1438 = vrot.slane %v1436, 1
  %v1439 = vsel %vm1395, %v1434, %v1438
  %v1440 = vshrl.u32 %v603, 16
  %v1442 = vor.u32 %v1440, %v1438
  %v1444 = vshll.u32 %v604, 16
  %v1446 = vrot.slane %v1444, 1
  %v1447 = vsel %vm1395, %v1442, %v1446
  %v1448 = vshrl.u32 %v604, 16
  %v1450 = vor.u32 %v1448, %v1446
  %v1452 = vshll.u32 %v605, 16
  %v1454 = vrot.slane %v1452, 1
  %v1455 = vsel %vm1395, %v1450, %v1454
  %v1456 = vshrl.u32 %v605, 16
  %v1458 = vor.u32 %v1456, %v1454
  %v1460 = vshll.u32 %v606, 16
  %v1462 = vrot.slane %v1460, 1
  %v1463 = vsel %vm1395, %v1458, %v1462
  %1464 = vrot.lane.b32.xlu0 %v1407, 8
  %v1465 = vpop.permute.xlu0 %1464
  %1466 = vrot.lane.b32.xlu0 %v1415, 8
  %v1467 = vpop.permute.xlu0 %1466
  %1468 = vrot.lane.b32.xlu0 %v1423, 8
  %v1469 = vpop.permute.xlu0 %1468
  %1470 = vrot.lane.b32.xlu0 %v1431, 8
  %v1471 = vpop.permute.xlu0 %1470
  %1472 = vrot.lane.b32.xlu0 %v1439, 8
  %v1473 = vpop.permute.xlu0 %1472
  %1474 = vrot.lane.b32.xlu0 %v1447, 8
  %v1475 = vpop.permute.xlu0 %1474
  %1476 = vrot.lane.b32.xlu0 %v1455, 8
  %v1477 = vpop.permute.xlu0 %1476
  %1478 = vrot.lane.b32.xlu0 %v1463, 8
  %v1479 = vpop.permute.xlu0 %1478
  %vm1489 = vcmask 1046528
  %v1490 = vrot.slane %v736, 1
  %v1491 = vrot.slane %v737, 1
  %v1492 = vsel %vm1489, %v1490, %v1491
  %v1493 = vrot.slane %v738, 1
  %v1494 = vsel %vm1489, %v1491, %v1493
  %v1495 = vrot.slane %v739, 1
  %v1496 = vsel %vm1489, %v1493, %v1495
  %v1497 = vrot.slane %v740, 1
  %v1498 = vsel %vm1489, %v1495, %v1497
  %v1499 = vrot.slane %v741, 1
  %v1500 = vsel %vm1489, %v1497, %v1499
  %v1501 = vrot.slane %v742, 1
  %v1502 = vsel %vm1489, %v1499, %v1501
  %v1503 = vrot.slane %v743, 1
  %v1504 = vsel %vm1489, %v1501, %v1503
  %v1505 = vrot.slane %v744, 1
  %v1506 = vsel %vm1489, %v1503, %v1505
  %1507 = vrot.lane.b32.xlu0 %v1492, 16
  %v1508 = vpop.permute.xlu0 %1507
  %1509 = vrot.lane.b32.xlu0 %v1494, 16
  %v1510 = vpop.permute.xlu0 %1509
  %1511 = vrot.lane.b32.xlu0 %v1496, 16
  %v1512 = vpop.permute.xlu0 %1511
  %1513 = vrot.lane.b32.xlu0 %v1498, 16
  %v1514 = vpop.permute.xlu0 %1513
  %1515 = vrot.lane.b32.xlu0 %v1500, 16
  %v1516 = vpop.permute.xlu0 %1515
  %1517 = vrot.lane.b32.xlu0 %v1502, 16
  %v1518 = vpop.permute.xlu0 %1517
  %1519 = vrot.lane.b32.xlu0 %v1504, 16
  %v1520 = vpop.permute.xlu0 %1519
  %1521 = vrot.lane.b32.xlu0 %v1506, 16
  %v1522 = vpop.permute.xlu0 %1521
  %vm1532 = vcmask 1043456
  %v1533 = vrot.slane %v843, 4
  %v1534 = vrot.slane %v844, 4
  %v1535 = vsel %vm1532, %v1533, %v1534
  %v1536 = vrot.slane %v845, 4
  %v1537 = vsel %vm1532, %v1534, %v1536
  %v1538 = vrot.slane %v846, 4
  %v1539 = vsel %vm1532, %v1536, %v1538
  %v1540 = vrot.slane %v847, 4
  %v1541 = vsel %vm1532, %v1538, %v1540
  %v1542 = vrot.slane %v848, 4
  %v1543 = vsel %vm1532, %v1540, %v1542
  %v1544 = vrot.slane %v849, 4
  %v1545 = vsel %vm1532, %v1542, %v1544
  %v1546 = vrot.slane %v850, 4
  %v1547 = vsel %vm1532, %v1544, %v1546
  %v1548 = vrot.slane %v851, 4
  %v1549 = vsel %vm1532, %v1546, %v1548
  %1550 = vrot.lane.b32.xlu0 %v1535, 24
  %v1551 = vpop.permute.xlu0 %1550
  %1552 = vrot.lane.b32.xlu0 %v1537, 24
  %v1553 = vpop.permute.xlu0 %1552
  %1554 = vrot.lane.b32.xlu0 %v1539, 24
  %v1555 = vpop.permute.xlu0 %1554
  %1556 = vrot.lane.b32.xlu0 %v1541, 24
  %v1557 = vpop.permute.xlu0 %1556
  %1558 = vrot.lane.b32.xlu0 %v1543, 24
  %v1559 = vpop.permute.xlu0 %1558
  %1560 = vrot.lane.b32.xlu0 %v1545, 24
  %v1561 = vpop.permute.xlu0 %1560
  %1562 = vrot.lane.b32.xlu0 %v1547, 24
  %v1563 = vpop.permute.xlu0 %1562
  %1564 = vrot.lane.b32.xlu0 %v1549, 24
  %v1565 = vpop.permute.xlu0 %1564
  %vm1566 = vsmask.f32 3328
  %v1568 = vshrl.u32 %v315, 16
  %v1570 = vrot.slane %v1568, 4
  %v1571 = vshll.u32 %v315, 16
  %v1573 = vrot.slane %v1571, 5
  %v1574 = vor.u32 %v1570, %v1573
  %v1576 = vshrl.u32 %v249, 16
  %v1578 = vrot.slane %v1576, 4
  %v1579 = vshll.u32 %v249, 16
  %v1581 = vrot.slane %v1579, 5
  %v1582 = vor.u32 %v1578, %v1581
  %v1583 = vsel %vm1566, %v1574, %v1582
  %v1585 = vshrl.u32 %v258, 16
  %v1587 = vrot.slane %v1585, 4
  %v1588 = vshll.u32 %v258, 16
  %v1590 = vrot.slane %v1588, 5
  %v1591 = vor.u32 %v1587, %v1590
  %v1592 = vsel %vm1566, %v1582, %v1591
  %v1594 = vshrl.u32 %v267, 16
  %v1596 = vrot.slane %v1594, 4
  %v1597 = vshll.u32 %v267, 16
  %v1599 = vrot.slane %v1597, 5
  %v1600 = vor.u32 %v1596, %v1599
  %v1601 = vsel %vm1566, %v1591, %v1600
  %v1603 = vshrl.u32 %v276, 16
  %v1605 = vrot.slane %v1603, 4
  %v1606 = vshll.u32 %v276, 16
  %v1608 = vrot.slane %v1606, 5
  %v1609 = vor.u32 %v1605, %v1608
  %v1610 = vsel %vm1566, %v1600, %v1609
  %v1612 = vshrl.u32 %v285, 16
  %v1614 = vrot.slane %v1612, 4
  %v1615 = vshll.u32 %v285, 16
  %v1617 = vrot.slane %v1615, 5
  %v1618 = vor.u32 %v1614, %v1617
  %v1619 = vsel %vm1566, %v1609, %v1618
  %v1621 = vshrl.u32 %v294, 16
  %v1623 = vrot.slane %v1621, 4
  %v1624 = vshll.u32 %v294, 16
  %v1626 = vrot.slane %v1624, 5
  %v1627 = vor.u32 %v1623, %v1626
  %v1628 = vsel %vm1566, %v1618, %v1627
  %v1630 = vshrl.u32 %v303, 16
  %v1632 = vrot.slane %v1630, 4
  %v1633 = vshll.u32 %v303, 16
  %v1635 = vrot.slane %v1633, 5
  %v1636 = vor.u32 %v1632, %v1635
  %v1637 = vsel %vm1566, %v1627, %v1636
  %v1639 = vshrl.u32 %v316, 16
  %v1641 = vrot.slane %v1639, 4
  %v1642 = vshll.u32 %v316, 16
  %v1644 = vrot.slane %v1642, 5
  %v1645 = vor.u32 %v1641, %v1644
  %v1646 = vsel %vm1566, %v1636, %v1645
  %1647 = vrot.lane.b32.xlu0 %v1583, 32
  %v1648 = vpop.permute.xlu0 %1647
  %1649 = vrot.lane.b32.xlu0 %v1592, 32
  %v1650 = vpop.permute.xlu0 %1649
  %1651 = vrot.lane.b32.xlu0 %v1601, 32
  %v1652 = vpop.permute.xlu0 %1651
  %1653 = vrot.lane.b32.xlu0 %v1610, 32
  %v1654 = vpop.permute.xlu0 %1653
  %1655 = vrot.lane.b32.xlu0 %v1619, 32
  %v1656 = vpop.permute.xlu0 %1655
  %1657 = vrot.lane.b32.xlu0 %v1628, 32
  %v1658 = vpop.permute.xlu0 %1657
  %1659 = vrot.lane.b32.xlu0 %v1637, 32
  %v1660 = vpop.permute.xlu0 %1659
  %1661 = vrot.lane.b32.xlu0 %v1646, 32
  %v1662 = vpop.permute.xlu0 %1661
  %vm1672 = vcmask 1042432
  %v1673 = vrot.slane %v964, 5
  %v1674 = vrot.slane %v965, 5
  %v1675 = vsel %vm1672, %v1673, %v1674
  %v1676 = vrot.slane %v966, 5
  %v1677 = vsel %vm1672, %v1674, %v1676
  %v1678 = vrot.slane %v967, 5
  %v1679 = vsel %vm1672, %v1676, %v1678
  %v1680 = vrot.slane %v968, 5
  %v1681 = vsel %vm1672, %v1678, %v1680
  %v1682 = vrot.slane %v969, 5
  %v1683 = vsel %vm1672, %v1680, %v1682
  %v1684 = vrot.slane %v970, 5
  %v1685 = vsel %vm1672, %v1682, %v1684
  %v1686 = vrot.slane %v971, 5
  %v1687 = vsel %vm1672, %v1684, %v1686
  %v1688 = vrot.slane %v972, 5
  %v1689 = vsel %vm1672, %v1686, %v1688
  %1690 = vrot.lane.b32.xlu0 %v1675, 40
  %v1691 = vpop.permute.xlu0 %1690
  %1692 = vrot.lane.b32.xlu0 %v1677, 40
  %v1693 = vpop.permute.xlu0 %1692
  %1694 = vrot.lane.b32.xlu0 %v1679, 40
  %v1695 = vpop.permute.xlu0 %1694
  %1696 = vrot.lane.b32.xlu0 %v1681, 40
  %v1697 = vpop.permute.xlu0 %1696
  %1698 = vrot.lane.b32.xlu0 %v1683, 40
  %v1699 = vpop.permute.xlu0 %1698
  %1700 = vrot.lane.b32.xlu0 %v1685, 40
  %v1701 = vpop.permute.xlu0 %1700
  %1702 = vrot.lane.b32.xlu0 %v1687, 40
  %v1703 = vpop.permute.xlu0 %1702
  %1704 = vrot.lane.b32.xlu0 %v1689, 40
  %v1705 = vpop.permute.xlu0 %1704
  %1714 = vrot.lane.b32.xlu0 %v1085, 48
  %v1715 = vpop.permute.xlu0 %1714
  %1716 = vrot.lane.b32.xlu0 %v1086, 48
  %v1717 = vpop.permute.xlu0 %1716
  %1718 = vrot.lane.b32.xlu0 %v1087, 48
  %v1719 = vpop.permute.xlu0 %1718
  %1720 = vrot.lane.b32.xlu0 %v1088, 48
  %v1721 = vpop.permute.xlu0 %1720
  %1722 = vrot.lane.b32.xlu0 %v1089, 48
  %v1723 = vpop.permute.xlu0 %1722
  %1724 = vrot.lane.b32.xlu0 %v1090, 48
  %v1725 = vpop.permute.xlu0 %1724
  %1726 = vrot.lane.b32.xlu0 %v1091, 48
  %v1727 = vpop.permute.xlu0 %1726
  %1728 = vrot.lane.b32.xlu0 %v1092, 48
  %v1729 = vpop.permute.xlu0 %1728
  %v1731 = vshrl.u32 %v1252, 16
  %v1733 = vshll.u32 %v1252, 16
  %v1735 = vrot.slane %v1733, 1
  %v1736 = vor.u32 %v1731, %v1735
  %v1738 = vshll.u32 %v1253, 16
  %v1740 = vrot.slane %v1738, 1
  %v1741 = vsel %vm1395, %v1736, %v1740
  %v1742 = vshrl.u32 %v1253, 16
  %v1744 = vor.u32 %v1742, %v1740
  %v1746 = vshll.u32 %v1254, 16
  %v1748 = vrot.slane %v1746, 1
  %v1749 = vsel %vm1395, %v1744, %v1748
  %v1750 = vshrl.u32 %v1254, 16
  %v1752 = vor.u32 %v1750, %v1748
  %v1754 = vshll.u32 %v1255, 16
  %v1756 = vrot.slane %v1754, 1
  %v1757 = vsel %vm1395, %v1752, %v1756
  %v1758 = vshrl.u32 %v1255, 16
  %v1760 = vor.u32 %v1758, %v1756
  %v1762 = vshll.u32 %v1256, 16
  %v1764 = vrot.slane %v1762, 1
  %v1765 = vsel %vm1395, %v1760, %v1764
  %v1766 = vshrl.u32 %v1256, 16
  %v1768 = vor.u32 %v1766, %v1764
  %v1770 = vshll.u32 %v1257, 16
  %v1772 = vrot.slane %v1770, 1
  %v1773 = vsel %vm1395, %v1768, %v1772
  %v1774 = vshrl.u32 %v1257, 16
  %v1776 = vor.u32 %v1774, %v1772
  %v1778 = vshll.u32 %v1258, 16
  %v1780 = vrot.slane %v1778, 1
  %v1781 = vsel %vm1395, %v1776, %v1780
  %v1782 = vshrl.u32 %v1258, 16
  %v1784 = vor.u32 %v1782, %v1780
  %v1786 = vshll.u32 %v1259, 16
  %v1788 = vrot.slane %v1786, 1
  %v1789 = vsel %vm1395, %v1784, %v1788
  %v1790 = vshrl.u32 %v1259, 16
  %v1792 = vor.u32 %v1790, %v1788
  %v1794 = vshll.u32 0, 16
  %v1796 = vrot.slane %v1794, 1
  %v1797 = vsel %vm1395, %v1792, %v1796
  %1798 = vrot.lane.b32.xlu0 %v1741, 56
  %v1799 = vpop.permute.xlu0 %1798
  %1800 = vrot.lane.b32.xlu0 %v1749, 56
  %v1801 = vpop.permute.xlu0 %1800
  %1802 = vrot.lane.b32.xlu0 %v1757, 56
  %v1803 = vpop.permute.xlu0 %1802
  %1804 = vrot.lane.b32.xlu0 %v1765, 56
  %v1805 = vpop.permute.xlu0 %1804
  %1806 = vrot.lane.b32.xlu0 %v1773, 56
  %v1807 = vpop.permute.xlu0 %1806
  %1808 = vrot.lane.b32.xlu0 %v1781, 56
  %v1809 = vpop.permute.xlu0 %1808
  %1810 = vrot.lane.b32.xlu0 %v1789, 56
  %v1811 = vpop.permute.xlu0 %1810
  %1812 = vrot.lane.b32.xlu0 %v1797, 56
  %v1813 = vpop.permute.xlu0 %1812
  %v1823 = vrot.slane %v1387, 1
  %v1824 = vrot.slane %v1388, 1
  %v1825 = vsel %vm1489, %v1823, %v1824
  %v1826 = vrot.slane %v1389, 1
  %v1827 = vsel %vm1489, %v1824, %v1826
  %v1828 = vrot.slane %v1390, 1
  %v1829 = vsel %vm1489, %v1826, %v1828
  %v1830 = vrot.slane %v1391, 1
  %v1831 = vsel %vm1489, %v1828, %v1830
  %v1832 = vrot.slane %v1392, 1
  %v1833 = vsel %vm1489, %v1830, %v1832
  %v1834 = vrot.slane %v1393, 1
  %v1835 = vsel %vm1489, %v1832, %v1834
  %v1836 = vrot.slane %v1394, 1
  %v1837 = vsel %vm1489, %v1834, %v1836
  %v1838 = vrot.slane 0, 1
  %v1839 = vsel %vm1489, %v1836, %v1838
  %1840 = vrot.lane.b32.xlu0 %v1825, 64
  %v1841 = vpop.permute.xlu0 %1840
  %1842 = vrot.lane.b32.xlu0 %v1827, 64
  %v1843 = vpop.permute.xlu0 %1842
  %1844 = vrot.lane.b32.xlu0 %v1829, 64
  %v1845 = vpop.permute.xlu0 %1844
  %1846 = vrot.lane.b32.xlu0 %v1831, 64
  %v1847 = vpop.permute.xlu0 %1846
  %1848 = vrot.lane.b32.xlu0 %v1833, 64
  %v1849 = vpop.permute.xlu0 %1848
  %1850 = vrot.lane.b32.xlu0 %v1835, 64
  %v1851 = vpop.permute.xlu0 %1850
  %1852 = vrot.lane.b32.xlu0 %v1837, 64
  %v1853 = vpop.permute.xlu0 %1852
  %1854 = vrot.lane.b32.xlu0 %v1839, 64
  %v1855 = vpop.permute.xlu0 %1854
  %vm1856 = vcmask 64512
  %v1859 = vsel %vm1856, %v429, %v1465
  %v1862 = vsel %vm1856, %v430, %v1467
  %v1865 = vsel %vm1856, %v431, %v1469
  %v1868 = vsel %vm1856, %v432, %v1471
  %v1871 = vsel %vm1856, %v433, %v1473
  %v1874 = vsel %vm1856, %v434, %v1475
  %v1877 = vsel %vm1856, %v435, %v1477
  %v1880 = vsel %vm1856, %v436, %v1479
  %vm1881 = vcmask 130048
  %v1883 = vsel %vm1881, %v1859, %v1508
  %v1885 = vsel %vm1881, %v1862, %v1510
  %v1887 = vsel %vm1881, %v1865, %v1512
  %v1889 = vsel %vm1881, %v1868, %v1514
  %v1891 = vsel %vm1881, %v1871, %v1516
  %v1893 = vsel %vm1881, %v1874, %v1518
  %v1895 = vsel %vm1881, %v1877, %v1520
  %v1897 = vsel %vm1881, %v1880, %v1522
  %vm1898 = vcmask 195584
  %v1900 = vsel %vm1898, %v1883, %v1551
  %v1902 = vsel %vm1898, %v1885, %v1553
  %v1904 = vsel %vm1898, %v1887, %v1555
  %v1906 = vsel %vm1898, %v1889, %v1557
  %v1908 = vsel %vm1898, %v1891, %v1559
  %v1910 = vsel %vm1898, %v1893, %v1561
  %v1912 = vsel %vm1898, %v1895, %v1563
  %v1914 = vsel %vm1898, %v1897, %v1565
  %vm1915 = vcmask 261120
  %v1917 = vsel %vm1915, %v1900, %v1648
  %v1919 = vsel %vm1915, %v1902, %v1650
  %v1921 = vsel %vm1915, %v1904, %v1652
  %v1923 = vsel %vm1915, %v1906, %v1654
  %v1925 = vsel %vm1915, %v1908, %v1656
  %v1927 = vsel %vm1915, %v1910, %v1658
  %v1929 = vsel %vm1915, %v1912, %v1660
  %v1931 = vsel %vm1915, %v1914, %v1662
  %vm1932 = vcmask 326656
  %v1934 = vsel %vm1932, %v1917, %v1691
  %v1936 = vsel %vm1932, %v1919, %v1693
  %v1938 = vsel %vm1932, %v1921, %v1695
  %v1940 = vsel %vm1932, %v1923, %v1697
  %v1942 = vsel %vm1932, %v1925, %v1699
  %v1944 = vsel %vm1932, %v1927, %v1701
  %v1946 = vsel %vm1932, %v1929, %v1703
  %v1948 = vsel %vm1932, %v1931, %v1705
  %vm1949 = vcmask 392192
  %v1951 = vsel %vm1949, %v1934, %v1715
  %v1953 = vsel %vm1949, %v1936, %v1717
  %v1955 = vsel %vm1949, %v1938, %v1719
  %v1957 = vsel %vm1949, %v1940, %v1721
  %v1959 = vsel %vm1949, %v1942, %v1723
  %v1961 = vsel %vm1949, %v1944, %v1725
  %v1963 = vsel %vm1949, %v1946, %v1727
  %v1965 = vsel %vm1949, %v1948, %v1729
  %vm1966 = vcmask 457728
  %v1968 = vsel %vm1966, %v1951, %v1799
  %v1970 = vsel %vm1966, %v1953, %v1801
  %v1972 = vsel %vm1966, %v1955, %v1803
  %v1974 = vsel %vm1966, %v1957, %v1805
  %v1976 = vsel %vm1966, %v1959, %v1807
  %v1978 = vsel %vm1966, %v1961, %v1809
  %v1980 = vsel %vm1966, %v1963, %v1811
  %v1982 = vsel %vm1966, %v1965, %v1813
  %vm1983 = vcmask 523264
  %v1985 = vsel %vm1983, %v1968, %v1841
  %v1987 = vsel %vm1983, %v1970, %v1843
  %v1989 = vsel %vm1983, %v1972, %v1845
  %v1991 = vsel %vm1983, %v1974, %v1847
  %v1993 = vsel %vm1983, %v1976, %v1849
  %v1995 = vsel %vm1983, %v1978, %v1851
  %v1997 = vsel %vm1983, %v1980, %v1853
  %v1999 = vsel %vm1983, %v1982, %v1855
  %v2000 = vld [vmem:[%s3] sm:$0xf]
  %v2001 = vld [vmem:[%s3 + $0x4] sm:$0xf]
  %v2002 = vld [vmem:[%s3 + $0x8] sm:$0xf]
  %v2003 = vld [vmem:[%s3 + $0xc] sm:$0xf]
  %v2004 = vld [vmem:[%s3 + $0x10] sm:$0xf]
  %v2005 = vld [vmem:[%s3 + $0x14] sm:$0xf]
  %v2006 = vld [vmem:[%s3 + $0x18] sm:$0xf]
  %v2007 = vld [vmem:[%s3 + $0x1c] sm:$0xf]
  %v2008 = vld [vmem:[%s3 + $0x20] sm:$0xf]
  %v2009 = vld [vmem:[%s4] sm:$0x1]
  %v2011 = vlaneseq
  %v2012 = vshrl.u32 %v2011, 7
  %v2013 = vsub.s32 0, %v2012
  %v2014 = vrot.slane %v2009, %v2013
  %v2025 = vunpack.c.l.b16 %v2000
  %v2026 = vunpack.c.l.b16 %v2001
  %v2027 = vunpack.c.l.b16 %v2002
  %v2028 = vunpack.c.l.b16 %v2003
  %v2029 = vunpack.c.l.b16 %v2004
  %v2030 = vunpack.c.l.b16 %v2005
  %v2031 = vunpack.c.l.b16 %v2006
  %v2032 = vunpack.c.l.b16 %v2007
  %v2033 = vunpack.c.l.b16 %v2008
  %v2034 = vpack.c.b16 %v2026, %v2025
  %v2035 = vpack.c.b16 %v2028, %v2027
  %v2036 = vpack.c.b16 %v2030, %v2029
  %v2037 = vpack.c.b16 %v2032, %v2031
  %v2038 = vpack.c.b16 %v2033, %v2033
  %vm2043 = vcmask 588800
  %v2044 = vsel %vm2043, %v1985, 0
  %v2046 = vsel %vm2043, %v1987, 0
  %v2048 = vsel %vm2043, %v1989, 0
  %v2050 = vsel %vm2043, %v1991, 0
  %v2052 = vsel %vm2043, %v1993, 0
  %v2054 = vsel %vm2043, %v1995, 0
  %v2056 = vsel %vm2043, %v1997, 0
  %v2058 = vsel %vm2043, %v1999, 0
  %vm2060 = vcmask 1043456
  %v2062 = vsel %vm2060, %v2038, 0
  %2064 = vmatprep.subr.bf16.mxu0 0
  %2065 = vmatpush1.bf16.msra.mxu0 0
  %2066 = vmatprep.subr.bf16.mxu0 0
  %2067 = vmatpush1.bf16.msra.mxu0 0
  %2068 = vmatprep.subr.bf16.mxu0 0
  %2069 = vmatpush1.bf16.msra.mxu0 0
  %2070 = vmatprep.subr.bf16.mxu0 0
  %2071 = vmatpush1.bf16.msra.mxu0 %v2062
  %2072 = vmatprep.subr.bf16.mxu0 0
  %2073 = vmatpush1.bf16.msra.mxu0 %v2037
  %2074 = vmatprep.subr.bf16.mxu0 0
  %2075 = vmatpush1.bf16.msra.mxu0 %v2036
  %2076 = vmatprep.subr.bf16.mxu0 0
  %2077 = vmatpush1.bf16.msra.mxu0 %v2035
  %2078 = vmatprep.subr.bf16.mxu0 0
  %2079 = vmatpush1.bf16.msra.mxu0 %v2034
  %2080 = vmatprep.subr.bf16.mxu0 0
  %2081 = vmatpush2.bf16.msra.mxu0 0
  %2082 = vmatprep.subr.bf16.mxu0 0
  %2083 = vmatpush2.bf16.msra.mxu0 0
  %2084 = vmatprep.subr.bf16.mxu0 0
  %2085 = vmatpush2.bf16.msra.mxu0 0
  %2086 = vmatprep.subr.bf16.mxu0 0
  %2087 = vmatpush2.bf16.msra.mxu0 0
  %2088 = vmatprep.subr.bf16.mxu0 0
  %2089 = vmatpush2.bf16.msra.mxu0 0
  %2090 = vmatprep.subr.bf16.mxu0 0
  %2091 = vmatpush2.bf16.msra.mxu0 0
  %2092 = vmatprep.subr.bf16.mxu0 0
  %2093 = vmatpush2.bf16.msra.mxu0 0
  %2094 = vmatprep.subr.bf16.mxu0 0
  %2095 = vmatpush2.bf16.msra.mxu0 0
  %2096 = vmatprep.mubr.bf16.mxu0 0
  %2097 = vmatmul.mubr.bf16.gmra.mxu0 %v2044
  %v2098 = vpop.f32.mrf.mxu0
  %v2099 = vadd.f32 %v2014, %v2098
  %v2100 = vpop.f32.mrf.mxu0
  %v2101 = vpop.f32.mrf.mxu0
  %v2102 = vadd.f32 %v2014, %v2101
  %v2103 = vpop.f32.mrf.mxu0
  %2104 = vmatprep.mubr.bf16.mxu0 0
  %2105 = vmatmul.mubr.bf16.gmra.mxu0 %v2046
  %v2106 = vpop.f32.mrf.mxu0
  %v2107 = vadd.f32 %v2014, %v2106
  %v2108 = vpop.f32.mrf.mxu0
  %v2109 = vpop.f32.mrf.mxu0
  %v2110 = vadd.f32 %v2014, %v2109
  %v2111 = vpop.f32.mrf.mxu0
  %2112 = vmatprep.mubr.bf16.mxu0 0
  %2113 = vmatmul.mubr.bf16.gmra.mxu0 %v2048
  %v2114 = vpop.f32.mrf.mxu0
  %v2115 = vadd.f32 %v2014, %v2114
  %v2116 = vpop.f32.mrf.mxu0
  %v2117 = vpop.f32.mrf.mxu0
  %v2118 = vadd.f32 %v2014, %v2117
  %v2119 = vpop.f32.mrf.mxu0
  %2120 = vmatprep.mubr.bf16.mxu0 0
  %2121 = vmatmul.mubr.bf16.gmra.mxu0 %v2050
  %v2122 = vpop.f32.mrf.mxu0
  %v2123 = vadd.f32 %v2014, %v2122
  %v2124 = vpop.f32.mrf.mxu0
  %v2125 = vpop.f32.mrf.mxu0
  %v2126 = vadd.f32 %v2014, %v2125
  %v2127 = vpop.f32.mrf.mxu0
  %2128 = vmatprep.mubr.bf16.mxu0 0
  %2129 = vmatmul.mubr.bf16.gmra.mxu0 %v2052
  %v2130 = vpop.f32.mrf.mxu0
  %v2131 = vadd.f32 %v2014, %v2130
  %v2132 = vpop.f32.mrf.mxu0
  %v2133 = vpop.f32.mrf.mxu0
  %v2134 = vadd.f32 %v2014, %v2133
  %v2135 = vpop.f32.mrf.mxu0
  %2136 = vmatprep.mubr.bf16.mxu0 0
  %2137 = vmatmul.mubr.bf16.gmra.mxu0 %v2054
  %v2138 = vpop.f32.mrf.mxu0
  %v2139 = vadd.f32 %v2014, %v2138
  %v2140 = vpop.f32.mrf.mxu0
  %v2141 = vpop.f32.mrf.mxu0
  %v2142 = vadd.f32 %v2014, %v2141
  %v2143 = vpop.f32.mrf.mxu0
  %2144 = vmatprep.mubr.bf16.mxu0 0
  %2145 = vmatmul.mubr.bf16.gmra.mxu0 %v2056
  %v2146 = vpop.f32.mrf.mxu0
  %v2147 = vadd.f32 %v2014, %v2146
  %v2148 = vpop.f32.mrf.mxu0
  %v2149 = vpop.f32.mrf.mxu0
  %v2150 = vadd.f32 %v2014, %v2149
  %v2151 = vpop.f32.mrf.mxu0
  %2152 = vmatprep.mubr.bf16.mxu0 0
  %2153 = vmatmul.mubr.bf16.gmra.mxu0 %v2058
  %v2154 = vpop.f32.mrf.mxu0
  %v2155 = vadd.f32 %v2014, %v2154
  %v2156 = vpop.f32.mrf.mxu0
  %v2157 = vpop.f32.mrf.mxu0
  %v2158 = vadd.f32 %v2014, %v2157
  %v2159 = vpop.f32.mrf.mxu0
  %2160 = vdwg.mxu0
  %v2161 = vsel %vm1856, %v2099, 0.0
  %v2162 = vsel %vm1856, %v2102, 0.0
  %v2163 = vadd.f32 %v2161, %v2162
  %v2164 = vsel %vm1856, %v2107, 0.0
  %v2165 = vadd.f32 %v2163, %v2164
  %v2166 = vsel %vm1856, %v2110, 0.0
  %v2167 = vadd.f32 %v2165, %v2166
  %v2168 = vsel %vm1856, %v2115, 0.0
  %v2169 = vadd.f32 %v2167, %v2168
  %v2170 = vsel %vm1856, %v2118, 0.0
  %v2171 = vadd.f32 %v2169, %v2170
  %v2172 = vsel %vm1856, %v2123, 0.0
  %v2173 = vadd.f32 %v2171, %v2172
  %v2174 = vsel %vm1856, %v2126, 0.0
  %v2175 = vadd.f32 %v2173, %v2174
  %v2176 = vsel %vm1856, %v2131, 0.0
  %v2177 = vadd.f32 %v2175, %v2176
  %v2178 = vsel %vm1856, %v2134, 0.0
  %v2179 = vadd.f32 %v2177, %v2178
  %v2180 = vsel %vm1856, %v2139, 0.0
  %v2181 = vadd.f32 %v2179, %v2180
  %v2182 = vsel %vm1856, %v2142, 0.0
  %v2183 = vadd.f32 %v2181, %v2182
  %v2184 = vsel %vm1856, %v2147, 0.0
  %v2185 = vadd.f32 %v2183, %v2184
  %v2186 = vsel %vm1856, %v2150, 0.0
  %v2187 = vadd.f32 %v2185, %v2186
  %v2188 = vsel %vm1856, %v2155, 0.0
  %v2189 = vadd.f32 %v2187, %v2188
  %v2190 = vsel %vm1856, %v2158, 0.0
  %v2191 = vadd.f32 %v2189, %v2190
  %v2192 = vrot.slane %v2191, 4
  %v2193 = vadd.f32 %v2191, %v2192
  %v2194 = vrot.slane %v2193, 2
  %v2195 = vadd.f32 %v2193, %v2194
  %v2196 = vrot.slane %v2195, 1
  %v2197 = vadd.f32 %v2195, %v2196
  %v2198 = vmul.f32 %v2099, %v2099
  %v2199 = vmul.f32 %v2102, %v2102
  %v2200 = vmul.f32 %v2107, %v2107
  %v2201 = vmul.f32 %v2110, %v2110
  %v2202 = vmul.f32 %v2115, %v2115
  %v2203 = vmul.f32 %v2118, %v2118
  %v2204 = vmul.f32 %v2123, %v2123
  %v2205 = vmul.f32 %v2126, %v2126
  %v2206 = vmul.f32 %v2131, %v2131
  %v2207 = vmul.f32 %v2134, %v2134
  %v2208 = vmul.f32 %v2139, %v2139
  %v2209 = vmul.f32 %v2142, %v2142
  %v2210 = vmul.f32 %v2147, %v2147
  %v2211 = vmul.f32 %v2150, %v2150
  %v2212 = vmul.f32 %v2155, %v2155
  %v2213 = vmul.f32 %v2158, %v2158
  %v2214 = vsel %vm1856, %v2198, 0.0
  %v2215 = vsel %vm1856, %v2199, 0.0
  %v2216 = vadd.f32 %v2214, %v2215
  %v2217 = vsel %vm1856, %v2200, 0.0
  %v2218 = vadd.f32 %v2216, %v2217
  %v2219 = vsel %vm1856, %v2201, 0.0
  %v2220 = vadd.f32 %v2218, %v2219
  %v2221 = vsel %vm1856, %v2202, 0.0
  %v2222 = vadd.f32 %v2220, %v2221
  %v2223 = vsel %vm1856, %v2203, 0.0
  %v2224 = vadd.f32 %v2222, %v2223
  %v2225 = vsel %vm1856, %v2204, 0.0
  %v2226 = vadd.f32 %v2224, %v2225
  %v2227 = vsel %vm1856, %v2205, 0.0
  %v2228 = vadd.f32 %v2226, %v2227
  %v2229 = vsel %vm1856, %v2206, 0.0
  %v2230 = vadd.f32 %v2228, %v2229
  %v2231 = vsel %vm1856, %v2207, 0.0
  %v2232 = vadd.f32 %v2230, %v2231
  %v2233 = vsel %vm1856, %v2208, 0.0
  %v2234 = vadd.f32 %v2232, %v2233
  %v2235 = vsel %vm1856, %v2209, 0.0
  %v2236 = vadd.f32 %v2234, %v2235
  %v2237 = vsel %vm1856, %v2210, 0.0
  %v2238 = vadd.f32 %v2236, %v2237
  %v2239 = vsel %vm1856, %v2211, 0.0
  %v2240 = vadd.f32 %v2238, %v2239
  %v2241 = vsel %vm1856, %v2212, 0.0
  %v2242 = vadd.f32 %v2240, %v2241
  %v2243 = vsel %vm1856, %v2213, 0.0
  %v2244 = vadd.f32 %v2242, %v2243
  %v2245 = vrot.slane %v2244, 4
  %v2246 = vadd.f32 %v2244, %v2245
  %v2247 = vrot.slane %v2246, 2
  %v2248 = vadd.f32 %v2246, %v2247
  %v2249 = vrot.slane %v2248, 1
  %v2250 = vadd.f32 %v2248, %v2249
  %vm2251 = vcmask 1040384
  %v2252 = vsel %vm2251, %v2197, %v2250
  %vm2253 = vcmask 58368
  %2254 = vst.msk [vmem:[%s6] sm:$0x3] %vm2253, %v2252
  %2255 = vxpose.xlu0.b32.start [1/16] %v2099, 128
  %2256 = vxpose.xlu0.b32.cont [2/16] %v2102, 128
  %2257 = vxpose.xlu0.b32.cont [3/16] %v2107, 128
  %2258 = vxpose.xlu0.b32.cont [4/16] %v2110, 128
  %2259 = vxpose.xlu0.b32.cont [5/16] %v2115, 128
  %2260 = vxpose.xlu0.b32.cont [6/16] %v2118, 128
  %2261 = vxpose.xlu0.b32.cont [7/16] %v2123, 128
  %2262 = vxpose.xlu0.b32.cont [8/16] %v2126, 128
  %2263 = vxpose.xlu0.b32.cont [9/16] 0.0, 128
  %2264 = vxpose.xlu0.b32.cont [10/16] 0.0, 128
  %2265 = vxpose.xlu0.b32.cont [11/16] 0.0, 128
  %2266 = vxpose.xlu0.b32.cont [12/16] 0.0, 128
  %2267 = vxpose.xlu0.b32.cont [13/16] 0.0, 128
  %2268 = vxpose.xlu0.b32.cont [14/16] 0.0, 128
  %2269 = vxpose.xlu0.b32.cont [15/16] 0.0, 128
  %2270 = vxpose.xlu0.b32.end [16/16] 0.0, 128
  %v2271 = vpop.trf.xlu0
  %v2272 = vpop.trf.xlu0
  %v2273 = vpop.trf.xlu0
  %v2274 = vpop.trf.xlu0
  %v2275 = vpop.trf.xlu0
  %v2276 = vpop.trf.xlu0
  %v2277 = vpop.trf.xlu0
  %v2278 = vpop.trf.xlu0
  %v2279 = vpop.trf.xlu0
  %v2280 = vpop.trf.xlu0
  %v2281 = vpop.trf.xlu0
  %v2282 = vpop.trf.xlu0
  %v2283 = vpop.trf.xlu0
  %v2284 = vpop.trf.xlu0
  %v2285 = vpop.trf.xlu0
  %v2286 = vpop.trf.xlu0
  %2287 = vxpose.xlu0.b32.start [1/16] %v2131, 128
  %2288 = vxpose.xlu0.b32.cont [2/16] %v2134, 128
  %2289 = vxpose.xlu0.b32.cont [3/16] %v2139, 128
  %2290 = vxpose.xlu0.b32.cont [4/16] %v2142, 128
  %2291 = vxpose.xlu0.b32.cont [5/16] %v2147, 128
  %2292 = vxpose.xlu0.b32.cont [6/16] %v2150, 128
  %2293 = vxpose.xlu0.b32.cont [7/16] %v2155, 128
  %2294 = vxpose.xlu0.b32.cont [8/16] %v2158, 128
  %2295 = vxpose.xlu0.b32.cont [9/16] 0.0, 128
  %2296 = vxpose.xlu0.b32.cont [10/16] 0.0, 128
  %2297 = vxpose.xlu0.b32.cont [11/16] 0.0, 128
  %2298 = vxpose.xlu0.b32.cont [12/16] 0.0, 128
  %2299 = vxpose.xlu0.b32.cont [13/16] 0.0, 128
  %2300 = vxpose.xlu0.b32.cont [14/16] 0.0, 128
  %2301 = vxpose.xlu0.b32.cont [15/16] 0.0, 128
  %2302 = vxpose.xlu0.b32.end [16/16] 0.0, 128
  %v2303 = vpop.trf.xlu0
  %v2304 = vpop.trf.xlu0
  %v2305 = vpop.trf.xlu0
  %v2306 = vpop.trf.xlu0
  %v2307 = vpop.trf.xlu0
  %v2308 = vpop.trf.xlu0
  %v2309 = vpop.trf.xlu0
  %v2310 = vpop.trf.xlu0
  %v2311 = vpop.trf.xlu0
  %v2312 = vpop.trf.xlu0
  %v2313 = vpop.trf.xlu0
  %v2314 = vpop.trf.xlu0
  %v2315 = vpop.trf.xlu0
  %v2316 = vpop.trf.xlu0
  %v2317 = vpop.trf.xlu0
  %v2318 = vpop.trf.xlu0
  %v2319 = vpack.c.bf16 %v2271, %v2271
  %v2320 = vpack.c.bf16 %v2303, %v2303
  %vm2321 = vcmask 519168
  %2322 = vst.msk [vmem:[%s5] sm:$0xf] %vm2321, %v2319
  %2323 = vst.msk [vmem:[%s5 + $0x4] sm:$0xf] %vm2321, %v2320
  // Predicated region
  $region22: #{encoder_block.4} parent=0 // pred_check
    _
  $region23: #{encoder_block.4} parent=0 // pred_check_branch
    %2325 = sbr.rel (0) target = $region25
  $region24: #{encoder_block.4} parent=0 // pred_region
    _
  $region25: #{encoder_block.4} parent=0 // pred_fallthru
    _
  // Predicated region
  $region26: #{encoder_block.4} parent=0 // pred_check
    _
  $region27: #{encoder_block.4} parent=0 // pred_check_branch
    %2327 = sbr.rel (0) target = $region29
  $region28: #{encoder_block.4} parent=0 // pred_region
    _
  $region29: #{encoder_block.4} parent=0 // pred_fallthru
    _
  // Predicated region
  $region30: #{encoder_block.4} parent=0 // pred_check
    _
  $region31: #{encoder_block.4} parent=0 // pred_check_branch
    %2329 = sbr.rel (0) target = $region33
  $region32: #{encoder_block.4} parent=0 // pred_region
    _
  $region33: #{encoder_block.4} parent=0 // pred_fallthru
    _
  // Predicated region
  $region34: #{encoder_block.4} parent=0 // pred_check
    _
  $region35: #{encoder_block.4} parent=0 // pred_check_branch
    %2331 = sbr.rel (0) target = $region37
  $region36: #{encoder_block.4} parent=0 // pred_region
    _
  $region37: #{encoder_block.4} parent=0 // pred_fallthru
    _

</llo_original>
